<compile_context>
chip_gen: v7x
topology: tpu7x:2x2x1
jax: 0.10.0
libtpu: 0.0.40
codegen_flags: <defaults>
</compile_context>

<pallas_src>
import functools

import jax
import jax.numpy as jnp
from jax.experimental import pallas as pl
from jax.experimental.pallas import tpu as pltpu


# ----------------------------------------------------------------------------
# Static (shape-only) helper matrices: built on the host / in the XLA wrapper.
# ----------------------------------------------------------------------------
def _tap_scatter(in_size, k, stride, padding):
    """Per-tap ConvTranspose2d scatter matrices along one spatial axis.

    Returns S of shape (k, out_size, in_size) with
        S[t, o, i] = 1  iff  o == i * stride - padding + t
    (out-of-range contributions drop out automatically).
    """
    out_size = (in_size - 1) * stride - 2 * padding + k
    o = jnp.arange(out_size, dtype=jnp.int32)[:, None]
    src = jnp.arange(in_size, dtype=jnp.int32)[None, :] * stride - padding
    mats = [(o == (src + t)).astype(jnp.float32) for t in range(k)]
    return jnp.stack(mats), out_size


def _interp_matrix(in_size, out_size):
    """Bilinear interpolation matrix; F.interpolate(mode='bilinear',
    align_corners=False) semantics (including the negative-src clamp)."""
    scale = in_size / out_size
    dst = jnp.arange(out_size, dtype=jnp.float32)
    src = jnp.maximum((dst + 0.5) * scale - 0.5, 0.0)
    x0 = jnp.minimum(jnp.floor(src).astype(jnp.int32), in_size - 1)
    x1 = jnp.minimum(x0 + 1, in_size - 1)
    lam = src - x0.astype(jnp.float32)
    m = jnp.zeros((out_size, in_size), jnp.float32)
    rows = jnp.arange(out_size)
    m = m.at[rows, x0].add(1.0 - lam)
    m = m.at[rows, x1].add(lam)
    return m


# ----------------------------------------------------------------------------
# Kernel: whole decoder for the whole batch in one invocation.
#   Activations live as (rows=(channel, height), lanes=(batch, width)) tiles.
# ----------------------------------------------------------------------------
def _decoder_kernel(x_ref,
                    b1_ref, t1_ref, c1_ref,
                    b2_ref, t2_ref, c2_ref,
                    b3_ref, t3_ref, c3_ref,
                    wh_ref, ww_ref,
                    o_ref, *, ktaps):
    f32 = jnp.float32
    opd = x_ref.dtype          # MXU operand dtype (bf16 by default, f32 exact path)

    def deconv(xv, b_ref, t_ref, c_ref, relu):
        # xv: (Rin, Lin) in operand dtype.
        acc = None
        for j in range(ktaps):
            # Height-scatter + channel mix (weights pre-folded host-side).
            p = jnp.dot(b_ref[j], xv, preferred_element_type=f32)        # (Rout, Lin)
            # Width scatter for tap j (block-diagonal over batch).
            s = jnp.dot(p.astype(opd), t_ref[j], preferred_element_type=f32)  # (Rout, Lout)
            acc = s if acc is None else acc + s
        acc = acc + c_ref[...]                # (Rout, 1) bias, broadcast over lanes
        return jnp.maximum(acc, 0.0) if relu else acc

    y = deconv(x_ref[...], b1_ref, t1_ref, c1_ref, relu=True)
    y = deconv(y.astype(opd), b2_ref, t2_ref, c2_ref, relu=True)
    y = deconv(y.astype(opd), b3_ref, t3_ref, c3_ref, relu=False)

    # Fused bilinear resize (f32): width pass (block-diag over batch) then
    # height pass (block-diag over output channels).
    t = jnp.dot(y, ww_ref[...], preferred_element_type=f32)              # (Cout*H3, N*Wout)
    o_ref[...] = jnp.dot(wh_ref[...], t, preferred_element_type=f32).astype(o_ref.dtype)


# ----------------------------------------------------------------------------
# Wrapper: weight preprocessing (layout only) + one fused pallas_call.
# ----------------------------------------------------------------------------
def image_decoder_forward(x, params, *, stride, kernel_size, padding, out_features,
                          use_bf16_mxu=True):
    """x: (N, Cin, H, W) NCHW; params: PyTorch-layout ConvTranspose2d weights."""
    n, cin, h, w = x.shape
    k = kernel_size
    w1, b1 = params["w1"], params["b1"]
    w2, b2 = params["w2"], params["b2"]
    w3, b3 = params["w3"], params["b3"]
    cout = w3.shape[1]
    h_out, w_out = out_features[1], out_features[2]

    f32 = jnp.float32
    opd = jnp.bfloat16 if use_bf16_mxu else f32

    # Static per-tap scatter matrices (absorb stride, padding, tap shift).
    sh1, h1 = _tap_scatter(h, k, stride, padding)
    sw1, w1o = _tap_scatter(w, k, stride, padding)
    sh2, h2 = _tap_scatter(h1, k, stride, padding)
    sw2, w2o = _tap_scatter(w1o, k, stride, padding)
    sh3, h3 = _tap_scatter(h2, k, stride, padding)
    sw3, w3o = _tap_scatter(w2o, k, stride, padding)

    eye_n = jnp.eye(n, dtype=f32)

    def weight_mats(sh, sw, wt, bias):
        """Fold weights with the height scatter; block-diag width scatter over batch."""
        kk, ho, hi = sh.shape
        cin_, cout_, _, _ = wt.shape
        # B[j, co*Ho+oh, ci*H+h] = sum_i sh[i,oh,h] * w[ci,co,i,j]
        bmat = jnp.einsum("ioh,cdij->jdoch", sh, wt.astype(f32))
        bmat = bmat.reshape(kk, cout_ * ho, cin_ * hi)
        # TWbd[j] = kron(I_N, sw[j]^T):  (N*Win, N*Wout)
        tw = jnp.transpose(sw, (0, 2, 1))
        twbd = jnp.einsum("ab,jwo->jawbo", eye_n, tw)
        twbd = twbd.reshape(kk, n * tw.shape[1], n * tw.shape[2])
        # Per-row bias column (Rout, 1).
        c = jnp.repeat(bias.astype(f32), ho).reshape(cout_ * ho, 1)
        return bmat.astype(opd), twbd.astype(opd), c

    B1, T1, C1 = weight_mats(sh1, sw1, w1, b1)
    B2, T2, C2 = weight_mats(sh2, sw2, w2, b2)
    B3, T3, C3 = weight_mats(sh3, sw3, w3, b3)

    # Bilinear resize matrices (align_corners=False), fused across channels/batch.
    wh = _interp_matrix(h3, h_out)                       # (Hout, H3)
    ww = _interp_matrix(w3o, w_out)                      # (Wout, W3)
    wh_big = jnp.kron(jnp.eye(cout, dtype=f32), wh)      # (Cout*Hout, Cout*H3)
    ww_bd = jnp.kron(eye_n, ww.T)                        # (N*W3, N*Wout)

    # Input: (N, Cin, H, W) -> rows (ci, h), lanes (n, w): one contiguous slab.
    x_l = jnp.transpose(x.astype(f32), (1, 2, 0, 3)).reshape(cin * h, n * w).astype(opd)

    kernel = functools.partial(_decoder_kernel, ktaps=k)
    vspec = pl.BlockSpec(memory_space=pltpu.MemorySpace.VMEM)
    args = (x_l, B1, T1, C1, B2, T2, C2, B3, T3, C3, wh_big, ww_bd)

    out = pl.pallas_call(
        kernel,
        out_shape=jax.ShapeDtypeStruct((cout * h_out, n * w_out), f32),
        in_specs=[vspec] * len(args),
        out_specs=vspec,
    )(*args)

    # rows (co, ho), lanes (n, wo) -> (N, Cout, Hout, Wout)
    return out.reshape(cout, h_out, n, w_out).transpose(2, 0, 1, 3)


# ----------------------------------------------------------------------------
# Pure-JAX reference (XLA conv) for an in-script correctness check.
# ----------------------------------------------------------------------------
def _reference_forward(x, params, *, stride, kernel_size, padding, out_features):
    del kernel_size
    hp = jax.lax.Precision.HIGHEST

    def convt(y, w_t, b):
        _, _, kh, kw = w_t.shape
        w_conv = jnp.flip(w_t, (2, 3)).transpose(1, 0, 2, 3)    # (Cout, Cin, kh, kw)
        y = jax.lax.conv_general_dilated(
            y, w_conv, window_strides=(1, 1),
            padding=[(kh - 1 - padding, kh - 1 - padding),
                     (kw - 1 - padding, kw - 1 - padding)],
            lhs_dilation=(stride, stride),
            dimension_numbers=("NCHW", "OIHW", "NCHW"),
            precision=hp)
        return y + b[None, :, None, None]

    y = jax.nn.relu(convt(x, params["w1"], params["b1"]))
    y = jax.nn.relu(convt(y, params["w2"], params["b2"]))
    y = convt(y, params["w3"], params["b3"])
    wh = _interp_matrix(y.shape[2], out_features[1])
    ww = _interp_matrix(y.shape[3], out_features[2])
    return jnp.einsum("oh,nchw,pw->ncop", wh, y, ww, precision=hp)


def init_params(key, hidden_channels, out_channels, kernel_size):
    ks = jax.random.split(key, 6)
    k = kernel_size
    scale = 0.1
    return {
        "w1": scale * jax.random.normal(ks[0], (1, hidden_channels, k, k), jnp.float32),
        "b1": scale * jax.random.normal(ks[1], (hidden_channels,), jnp.float32),
        "w2": scale * jax.random.normal(ks[2], (hidden_channels, hidden_channels, k, k), jnp.float32),
        "b2": scale * jax.random.normal(ks[3], (hidden_channels,), jnp.float32),
        "w3": scale * jax.random.normal(ks[4], (hidden_channels, out_channels, k, k), jnp.float32),
        "b3": scale * jax.random.normal(ks[5], (out_channels,), jnp.float32),
    }


if __name__ == "__main__":
    # Small, module-consistent config: latent image 8x8, in_channels=1.
    in_features = 8 * 8
    hidden_channels = 4
    kernel_size = 3
    stride = 2
    padding = 1
    out_features = (3, 20, 20)          # (C_out, H_out, W_out)

    key = jax.random.PRNGKey(0)
    pkey, xkey = jax.random.split(key)
    params = init_params(pkey, hidden_channels, out_features[0], kernel_size)
    x = jax.random.normal(xkey, (2, 1, 8, 8), jnp.float32)   # NCHW

    ref = _reference_forward(x, params, stride=stride, kernel_size=kernel_size,
                             padding=padding, out_features=out_features)

    # Default (bf16 MXU operands, f32 accumulation) path.
    fwd = jax.jit(functools.partial(
        image_decoder_forward, stride=stride, kernel_size=kernel_size,
        padding=padding, out_features=out_features))
    out = jax.block_until_ready(fwd(x, params))

    assert out.shape == (2, out_features[0], out_features[1], out_features[2]), out.shape
    assert bool(jnp.all(jnp.isfinite(out)))
    err_bf16 = float(jnp.max(jnp.abs(out - ref)))
    # bf16 MXU operands (f32 accumulate) cost ~3 decimal digits on activations.
    assert err_bf16 < 2e-2, f"bf16-operand path mismatch vs reference: {err_bf16}"

    # Exact f32-operand path (same kernel, f32 operands) for a tight check.
    fwd32 = jax.jit(functools.partial(
        image_decoder_forward, stride=stride, kernel_size=kernel_size,
        padding=padding, out_features=out_features, use_bf16_mxu=False))
    out32 = jax.block_until_ready(fwd32(x, params))
    err_f32 = float(jnp.max(jnp.abs(out32 - ref)))
    assert err_f32 < 1e-3, f"f32 path mismatch vs reference: {err_f32}"

    print("KERNEL_OK")
</pallas_src>

<mosaic_0001>
module attributes {stable_mosaic.version = 11 : i64} {
  func.func @_decoder_kernel(%arg0: memref<8x16xbf16, #tpu.memory_space<vmem>>, %arg1: memref<3x60x8xbf16, #tpu.memory_space<vmem>>, %arg2: memref<3x16x30xbf16, #tpu.memory_space<vmem>>, %arg3: memref<60x1xf32, #tpu.memory_space<vmem>>, %arg4: memref<3x116x60xbf16, #tpu.memory_space<vmem>>, %arg5: memref<3x30x58xbf16, #tpu.memory_space<vmem>>, %arg6: memref<116x1xf32, #tpu.memory_space<vmem>>, %arg7: memref<3x171x116xbf16, #tpu.memory_space<vmem>>, %arg8: memref<3x58x114xbf16, #tpu.memory_space<vmem>>, %arg9: memref<171x1xf32, #tpu.memory_space<vmem>>, %arg10: memref<60x171xf32, #tpu.memory_space<vmem>>, %arg11: memref<114x40xf32, #tpu.memory_space<vmem>>, %arg12: memref<60x40xf32, #tpu.memory_space<vmem>>) attributes {dimension_semantics = [], scalar_prefetch = 0 : i64, scratch_operands = 0 : i64, tpu.core_type = #tpu.core_type<tc>} {
    %c0 = arith.constant 0 : index
    %c0_0 = arith.constant 0 : index
    %0 = vector.load %arg0[%c0, %c0_0] : memref<8x16xbf16, #tpu.memory_space<vmem>>, vector<8x16xbf16>
    %c0_1 = arith.constant 0 : index
    %c0_2 = arith.constant 0 : index
    %c0_3 = arith.constant 0 : index
    %1 = vector.load %arg1[%c0_1, %c0_2, %c0_3] : memref<3x60x8xbf16, #tpu.memory_space<vmem>>, vector<1x60x8xbf16>
    %2 = vector.shape_cast %1 : vector<1x60x8xbf16> to vector<60x8xbf16>
    %cst = arith.constant dense<0.000000e+00> : vector<60x16xf32>
    %3 = tpu.matmul %2, %0, %cst {dimension_numbers = #tpu.dot_dimension_numbers<[1], [0], [0], [1], [0, 0, 1, 1], [], []>} : vector<60x8xbf16>, vector<8x16xbf16>, vector<60x16xf32> -> vector<60x16xf32>
    %4 = arith.truncf %3 : vector<60x16xf32> to vector<60x16xbf16>
    %c0_4 = arith.constant 0 : index
    %c0_5 = arith.constant 0 : index
    %c0_6 = arith.constant 0 : index
    %5 = vector.load %arg2[%c0_4, %c0_5, %c0_6] : memref<3x16x30xbf16, #tpu.memory_space<vmem>>, vector<1x16x30xbf16>
    %6 = vector.shape_cast %5 : vector<1x16x30xbf16> to vector<16x30xbf16>
    %cst_7 = arith.constant dense<0.000000e+00> : vector<60x30xf32>
    %7 = tpu.matmul %4, %6, %cst_7 {dimension_numbers = #tpu.dot_dimension_numbers<[1], [0], [0], [1], [0, 0, 1, 1], [], []>} : vector<60x16xbf16>, vector<16x30xbf16>, vector<60x30xf32> -> vector<60x30xf32>
    %c1 = arith.constant 1 : index
    %c0_8 = arith.constant 0 : index
    %c0_9 = arith.constant 0 : index
    %8 = vector.load %arg1[%c1, %c0_8, %c0_9] : memref<3x60x8xbf16, #tpu.memory_space<vmem>>, vector<1x60x8xbf16>
    %9 = vector.shape_cast %8 : vector<1x60x8xbf16> to vector<60x8xbf16>
    %cst_10 = arith.constant dense<0.000000e+00> : vector<60x16xf32>
    %10 = tpu.matmul %9, %0, %cst_10 {dimension_numbers = #tpu.dot_dimension_numbers<[1], [0], [0], [1], [0, 0, 1, 1], [], []>} : vector<60x8xbf16>, vector<8x16xbf16>, vector<60x16xf32> -> vector<60x16xf32>
    %11 = arith.truncf %10 : vector<60x16xf32> to vector<60x16xbf16>
    %c1_11 = arith.constant 1 : index
    %c0_12 = arith.constant 0 : index
    %c0_13 = arith.constant 0 : index
    %12 = vector.load %arg2[%c1_11, %c0_12, %c0_13] : memref<3x16x30xbf16, #tpu.memory_space<vmem>>, vector<1x16x30xbf16>
    %13 = vector.shape_cast %12 : vector<1x16x30xbf16> to vector<16x30xbf16>
    %cst_14 = arith.constant dense<0.000000e+00> : vector<60x30xf32>
    %14 = tpu.matmul %11, %13, %cst_14 {dimension_numbers = #tpu.dot_dimension_numbers<[1], [0], [0], [1], [0, 0, 1, 1], [], []>} : vector<60x16xbf16>, vector<16x30xbf16>, vector<60x30xf32> -> vector<60x30xf32>
    %15 = arith.addf %7, %14 : vector<60x30xf32>
    %c2 = arith.constant 2 : index
    %c0_15 = arith.constant 0 : index
    %c0_16 = arith.constant 0 : index
    %16 = vector.load %arg1[%c2, %c0_15, %c0_16] : memref<3x60x8xbf16, #tpu.memory_space<vmem>>, vector<1x60x8xbf16>
    %17 = vector.shape_cast %16 : vector<1x60x8xbf16> to vector<60x8xbf16>
    %cst_17 = arith.constant dense<0.000000e+00> : vector<60x16xf32>
    %18 = tpu.matmul %17, %0, %cst_17 {dimension_numbers = #tpu.dot_dimension_numbers<[1], [0], [0], [1], [0, 0, 1, 1], [], []>} : vector<60x8xbf16>, vector<8x16xbf16>, vector<60x16xf32> -> vector<60x16xf32>
    %19 = arith.truncf %18 : vector<60x16xf32> to vector<60x16xbf16>
    %c2_18 = arith.constant 2 : index
    %c0_19 = arith.constant 0 : index
    %c0_20 = arith.constant 0 : index
    %20 = vector.load %arg2[%c2_18, %c0_19, %c0_20] : memref<3x16x30xbf16, #tpu.memory_space<vmem>>, vector<1x16x30xbf16>
    %21 = vector.shape_cast %20 : vector<1x16x30xbf16> to vector<16x30xbf16>
    %cst_21 = arith.constant dense<0.000000e+00> : vector<60x30xf32>
    %22 = tpu.matmul %19, %21, %cst_21 {dimension_numbers = #tpu.dot_dimension_numbers<[1], [0], [0], [1], [0, 0, 1, 1], [], []>} : vector<60x16xbf16>, vector<16x30xbf16>, vector<60x30xf32> -> vector<60x30xf32>
    %23 = arith.addf %15, %22 : vector<60x30xf32>
    %c0_22 = arith.constant 0 : index
    %c0_23 = arith.constant 0 : index
    %24 = vector.load %arg3[%c0_22, %c0_23] : memref<60x1xf32, #tpu.memory_space<vmem>>, vector<60x1xf32>
    %25 = vector.broadcast %24 : vector<60x1xf32> to vector<60x30xf32>
    %26 = arith.addf %23, %25 : vector<60x30xf32>
    %cst_24 = arith.constant 0.000000e+00 : f32
    %27 = vector.broadcast %cst_24 : f32 to vector<60x30xf32>
    %28 = arith.maximumf %26, %27 : vector<60x30xf32>
    %29 = arith.truncf %28 : vector<60x30xf32> to vector<60x30xbf16>
    %c0_25 = arith.constant 0 : index
    %c0_26 = arith.constant 0 : index
    %c0_27 = arith.constant 0 : index
    %30 = vector.load %arg4[%c0_25, %c0_26, %c0_27] : memref<3x116x60xbf16, #tpu.memory_space<vmem>>, vector<1x116x60xbf16>
    %31 = vector.shape_cast %30 : vector<1x116x60xbf16> to vector<116x60xbf16>
    %cst_28 = arith.constant dense<0.000000e+00> : vector<116x30xf32>
    %32 = tpu.matmul %31, %29, %cst_28 {dimension_numbers = #tpu.dot_dimension_numbers<[1], [0], [0], [1], [0, 0, 1, 1], [], []>} : vector<116x60xbf16>, vector<60x30xbf16>, vector<116x30xf32> -> vector<116x30xf32>
    %33 = arith.truncf %32 : vector<116x30xf32> to vector<116x30xbf16>
    %c0_29 = arith.constant 0 : index
    %c0_30 = arith.constant 0 : index
    %c0_31 = arith.constant 0 : index
    %34 = vector.load %arg5[%c0_29, %c0_30, %c0_31] : memref<3x30x58xbf16, #tpu.memory_space<vmem>>, vector<1x30x58xbf16>
    %35 = vector.shape_cast %34 : vector<1x30x58xbf16> to vector<30x58xbf16>
    %cst_32 = arith.constant dense<0.000000e+00> : vector<116x58xf32>
    %36 = tpu.matmul %33, %35, %cst_32 {dimension_numbers = #tpu.dot_dimension_numbers<[1], [0], [0], [1], [0, 0, 1, 1], [], []>} : vector<116x30xbf16>, vector<30x58xbf16>, vector<116x58xf32> -> vector<116x58xf32>
    %c1_33 = arith.constant 1 : index
    %c0_34 = arith.constant 0 : index
    %c0_35 = arith.constant 0 : index
    %37 = vector.load %arg4[%c1_33, %c0_34, %c0_35] : memref<3x116x60xbf16, #tpu.memory_space<vmem>>, vector<1x116x60xbf16>
    %38 = vector.shape_cast %37 : vector<1x116x60xbf16> to vector<116x60xbf16>
    %cst_36 = arith.constant dense<0.000000e+00> : vector<116x30xf32>
    %39 = tpu.matmul %38, %29, %cst_36 {dimension_numbers = #tpu.dot_dimension_numbers<[1], [0], [0], [1], [0, 0, 1, 1], [], []>} : vector<116x60xbf16>, vector<60x30xbf16>, vector<116x30xf32> -> vector<116x30xf32>
    %40 = arith.truncf %39 : vector<116x30xf32> to vector<116x30xbf16>
    %c1_37 = arith.constant 1 : index
    %c0_38 = arith.constant 0 : index
    %c0_39 = arith.constant 0 : index
    %41 = vector.load %arg5[%c1_37, %c0_38, %c0_39] : memref<3x30x58xbf16, #tpu.memory_space<vmem>>, vector<1x30x58xbf16>
    %42 = vector.shape_cast %41 : vector<1x30x58xbf16> to vector<30x58xbf16>
    %cst_40 = arith.constant dense<0.000000e+00> : vector<116x58xf32>
    %43 = tpu.matmul %40, %42, %cst_40 {dimension_numbers = #tpu.dot_dimension_numbers<[1], [0], [0], [1], [0, 0, 1, 1], [], []>} : vector<116x30xbf16>, vector<30x58xbf16>, vector<116x58xf32> -> vector<116x58xf32>
    %44 = arith.addf %36, %43 : vector<116x58xf32>
    %c2_41 = arith.constant 2 : index
    %c0_42 = arith.constant 0 : index
    %c0_43 = arith.constant 0 : index
    %45 = vector.load %arg4[%c2_41, %c0_42, %c0_43] : memref<3x116x60xbf16, #tpu.memory_space<vmem>>, vector<1x116x60xbf16>
    %46 = vector.shape_cast %45 : vector<1x116x60xbf16> to vector<116x60xbf16>
    %cst_44 = arith.constant dense<0.000000e+00> : vector<116x30xf32>
    %47 = tpu.matmul %46, %29, %cst_44 {dimension_numbers = #tpu.dot_dimension_numbers<[1], [0], [0], [1], [0, 0, 1, 1], [], []>} : vector<116x60xbf16>, vector<60x30xbf16>, vector<116x30xf32> -> vector<116x30xf32>
    %48 = arith.truncf %47 : vector<116x30xf32> to vector<116x30xbf16>
    %c2_45 = arith.constant 2 : index
    %c0_46 = arith.constant 0 : index
    %c0_47 = arith.constant 0 : index
    %49 = vector.load %arg5[%c2_45, %c0_46, %c0_47] : memref<3x30x58xbf16, #tpu.memory_space<vmem>>, vector<1x30x58xbf16>
    %50 = vector.shape_cast %49 : vector<1x30x58xbf16> to vector<30x58xbf16>
    %cst_48 = arith.constant dense<0.000000e+00> : vector<116x58xf32>
    %51 = tpu.matmul %48, %50, %cst_48 {dimension_numbers = #tpu.dot_dimension_numbers<[1], [0], [0], [1], [0, 0, 1, 1], [], []>} : vector<116x30xbf16>, vector<30x58xbf16>, vector<116x58xf32> -> vector<116x58xf32>
    %52 = arith.addf %44, %51 : vector<116x58xf32>
    %c0_49 = arith.constant 0 : index
    %c0_50 = arith.constant 0 : index
    %53 = vector.load %arg6[%c0_49, %c0_50] : memref<116x1xf32, #tpu.memory_space<vmem>>, vector<116x1xf32>
    %54 = vector.broadcast %53 : vector<116x1xf32> to vector<116x58xf32>
    %55 = arith.addf %52, %54 : vector<116x58xf32>
    %cst_51 = arith.constant 0.000000e+00 : f32
    %56 = vector.broadcast %cst_51 : f32 to vector<116x58xf32>
    %57 = arith.maximumf %55, %56 : vector<116x58xf32>
    %58 = arith.truncf %57 : vector<116x58xf32> to vector<116x58xbf16>
    %c0_52 = arith.constant 0 : index
    %c0_53 = arith.constant 0 : index
    %c0_54 = arith.constant 0 : index
    %59 = vector.load %arg7[%c0_52, %c0_53, %c0_54] : memref<3x171x116xbf16, #tpu.memory_space<vmem>>, vector<1x171x116xbf16>
    %60 = vector.shape_cast %59 : vector<1x171x116xbf16> to vector<171x116xbf16>
    %cst_55 = arith.constant dense<0.000000e+00> : vector<171x58xf32>
    %61 = tpu.matmul %60, %58, %cst_55 {dimension_numbers = #tpu.dot_dimension_numbers<[1], [0], [0], [1], [0, 0, 1, 1], [], []>} : vector<171x116xbf16>, vector<116x58xbf16>, vector<171x58xf32> -> vector<171x58xf32>
    %62 = arith.truncf %61 : vector<171x58xf32> to vector<171x58xbf16>
    %c0_56 = arith.constant 0 : index
    %c0_57 = arith.constant 0 : index
    %c0_58 = arith.constant 0 : index
    %63 = vector.load %arg8[%c0_56, %c0_57, %c0_58] : memref<3x58x114xbf16, #tpu.memory_space<vmem>>, vector<1x58x114xbf16>
    %64 = vector.shape_cast %63 : vector<1x58x114xbf16> to vector<58x114xbf16>
    %cst_59 = arith.constant dense<0.000000e+00> : vector<171x114xf32>
    %65 = tpu.matmul %62, %64, %cst_59 {dimension_numbers = #tpu.dot_dimension_numbers<[1], [0], [0], [1], [0, 0, 1, 1], [], []>} : vector<171x58xbf16>, vector<58x114xbf16>, vector<171x114xf32> -> vector<171x114xf32>
    %c1_60 = arith.constant 1 : index
    %c0_61 = arith.constant 0 : index
    %c0_62 = arith.constant 0 : index
    %66 = vector.load %arg7[%c1_60, %c0_61, %c0_62] : memref<3x171x116xbf16, #tpu.memory_space<vmem>>, vector<1x171x116xbf16>
    %67 = vector.shape_cast %66 : vector<1x171x116xbf16> to vector<171x116xbf16>
    %cst_63 = arith.constant dense<0.000000e+00> : vector<171x58xf32>
    %68 = tpu.matmul %67, %58, %cst_63 {dimension_numbers = #tpu.dot_dimension_numbers<[1], [0], [0], [1], [0, 0, 1, 1], [], []>} : vector<171x116xbf16>, vector<116x58xbf16>, vector<171x58xf32> -> vector<171x58xf32>
    %69 = arith.truncf %68 : vector<171x58xf32> to vector<171x58xbf16>
    %c1_64 = arith.constant 1 : index
    %c0_65 = arith.constant 0 : index
    %c0_66 = arith.constant 0 : index
    %70 = vector.load %arg8[%c1_64, %c0_65, %c0_66] : memref<3x58x114xbf16, #tpu.memory_space<vmem>>, vector<1x58x114xbf16>
    %71 = vector.shape_cast %70 : vector<1x58x114xbf16> to vector<58x114xbf16>
    %cst_67 = arith.constant dense<0.000000e+00> : vector<171x114xf32>
    %72 = tpu.matmul %69, %71, %cst_67 {dimension_numbers = #tpu.dot_dimension_numbers<[1], [0], [0], [1], [0, 0, 1, 1], [], []>} : vector<171x58xbf16>, vector<58x114xbf16>, vector<171x114xf32> -> vector<171x114xf32>
    %73 = arith.addf %65, %72 : vector<171x114xf32>
    %c2_68 = arith.constant 2 : index
    %c0_69 = arith.constant 0 : index
    %c0_70 = arith.constant 0 : index
    %74 = vector.load %arg7[%c2_68, %c0_69, %c0_70] : memref<3x171x116xbf16, #tpu.memory_space<vmem>>, vector<1x171x116xbf16>
    %75 = vector.shape_cast %74 : vector<1x171x116xbf16> to vector<171x116xbf16>
    %cst_71 = arith.constant dense<0.000000e+00> : vector<171x58xf32>
    %76 = tpu.matmul %75, %58, %cst_71 {dimension_numbers = #tpu.dot_dimension_numbers<[1], [0], [0], [1], [0, 0, 1, 1], [], []>} : vector<171x116xbf16>, vector<116x58xbf16>, vector<171x58xf32> -> vector<171x58xf32>
    %77 = arith.truncf %76 : vector<171x58xf32> to vector<171x58xbf16>
    %c2_72 = arith.constant 2 : index
    %c0_73 = arith.constant 0 : index
    %c0_74 = arith.constant 0 : index
    %78 = vector.load %arg8[%c2_72, %c0_73, %c0_74] : memref<3x58x114xbf16, #tpu.memory_space<vmem>>, vector<1x58x114xbf16>
    %79 = vector.shape_cast %78 : vector<1x58x114xbf16> to vector<58x114xbf16>
    %cst_75 = arith.constant dense<0.000000e+00> : vector<171x114xf32>
    %80 = tpu.matmul %77, %79, %cst_75 {dimension_numbers = #tpu.dot_dimension_numbers<[1], [0], [0], [1], [0, 0, 1, 1], [], []>} : vector<171x58xbf16>, vector<58x114xbf16>, vector<171x114xf32> -> vector<171x114xf32>
    %81 = arith.addf %73, %80 : vector<171x114xf32>
    %c0_76 = arith.constant 0 : index
    %c0_77 = arith.constant 0 : index
    %82 = vector.load %arg9[%c0_76, %c0_77] : memref<171x1xf32, #tpu.memory_space<vmem>>, vector<171x1xf32>
    %83 = vector.broadcast %82 : vector<171x1xf32> to vector<171x114xf32>
    %84 = arith.addf %81, %83 : vector<171x114xf32>
    %c0_78 = arith.constant 0 : index
    %c0_79 = arith.constant 0 : index
    %85 = vector.load %arg11[%c0_78, %c0_79] : memref<114x40xf32, #tpu.memory_space<vmem>>, vector<114x40xf32>
    %cst_80 = arith.constant dense<0.000000e+00> : vector<171x40xf32>
    %86 = tpu.matmul %84, %85, %cst_80 {dimension_numbers = #tpu.dot_dimension_numbers<[1], [0], [0], [1], [0, 0, 1, 1], [], []>} : vector<171x114xf32>, vector<114x40xf32>, vector<171x40xf32> -> vector<171x40xf32>
    %c0_81 = arith.constant 0 : index
    %c0_82 = arith.constant 0 : index
    %87 = vector.load %arg10[%c0_81, %c0_82] : memref<60x171xf32, #tpu.memory_space<vmem>>, vector<60x171xf32>
    %cst_83 = arith.constant dense<0.000000e+00> : vector<60x40xf32>
    %88 = tpu.matmul %87, %86, %cst_83 {dimension_numbers = #tpu.dot_dimension_numbers<[1], [0], [0], [1], [0, 0, 1, 1], [], []>} : vector<60x171xf32>, vector<171x40xf32>, vector<60x40xf32> -> vector<60x40xf32>
    %c0_84 = arith.constant 0 : index
    %c0_85 = arith.constant 0 : index
    %89 = vector.load %arg12[%c0_84, %c0_85] : memref<60x40xf32, #tpu.memory_space<vmem>>, vector<60x40xf32>
    tpu.vector_store %arg12[%c0_84, %c0_85], %88 {strides = array<i32>} : memref<60x40xf32, #tpu.memory_space<vmem>>, vector<60x40xf32>,
    return
  }
}

</mosaic_0001>

<llo_original>
// kernel: image_decoder_forward.1
$region0: #{image_decoder_forward.1}
  #allocation0 [shape = 'u32[]', space=smem, size = 0x4, offset = 0x4, fixed_abs, tag = 'smem constant byte address 0x4 - core index']
  #allocation1 [shape = 'u32[144,128]{1,0:T(1,128)}', space=vmem, size = 0x12000, scoped, tag = 'internal scratch']
  %s0 = inlined_call_operand.vmem [shape: bf16[8,16], index: 0, kind: input, shape index: {}]
  %s1 = inlined_call_operand.vmem [shape: bf16[3,60,8], index: 1, kind: input, shape index: {}]
  %s2 = inlined_call_operand.vmem [shape: bf16[3,16,30], index: 2, kind: input, shape index: {}]
  %s3 = inlined_call_operand.vmem [shape: f32[60,1], index: 3, kind: input, shape index: {}]
  %s4 = inlined_call_operand.vmem [shape: bf16[3,116,60], index: 4, kind: input, shape index: {}]
  %s5 = inlined_call_operand.vmem [shape: bf16[3,30,58], index: 5, kind: input, shape index: {}]
  %s6 = inlined_call_operand.vmem [shape: f32[116,1], index: 6, kind: input, shape index: {}]
  %s7 = inlined_call_operand.vmem [shape: bf16[3,171,116], index: 7, kind: input, shape index: {}]
  %s8 = inlined_call_operand.vmem [shape: bf16[3,58,114], index: 8, kind: input, shape index: {}]
  %s9 = inlined_call_operand.vmem [shape: f32[171,1], index: 9, kind: input, shape index: {}]
  %s10 = inlined_call_operand.vmem [shape: f32[60,171], index: 10, kind: input, shape index: {}]
  %s11 = inlined_call_operand.vmem [shape: f32[114,40], index: 11, kind: input, shape index: {}]
  %s12 = inlined_call_operand.vmem [shape: f32[60,40], index: 12, kind: output, shape index: {}]
  %s13 = sld [smem:[#allocation0]]
  $region58: #{image_decoder_forward.1} parent=0
    _
  %s15 = ssub.s32 1, %s13
  %s16 = scalar_select 0, %s15, %s13
  // Predicated region
  $region2: #{image_decoder_forward.1} parent=0 // pred_check
    _
  $region3: #{image_decoder_forward.1} parent=0 // pred_check_branch
    %18 = sbr.rel (0) target = $region5
  $region4: #{image_decoder_forward.1} parent=0 // pred_region
    _
  $region5: #{image_decoder_forward.1} parent=0 // pred_fallthru
    _
  // Predicated region
  $region6: #{image_decoder_forward.1} parent=0 // pred_check
    _
  $region7: #{image_decoder_forward.1} parent=0 // pred_check_branch
    %20 = sbr.rel (0) target = $region9
  $region8: #{image_decoder_forward.1} parent=0 // pred_region
    _
  $region9: #{image_decoder_forward.1} parent=0 // pred_fallthru
    _
  // Predicated region
  $region10: #{image_decoder_forward.1} parent=0 // pred_check
    _
  $region11: #{image_decoder_forward.1} parent=0 // pred_check_branch
    %22 = sbr.rel (0) target = $region13
  $region12: #{image_decoder_forward.1} parent=0 // pred_region
    _
  $region13: #{image_decoder_forward.1} parent=0 // pred_fallthru
    _
  // Predicated region
  $region14: #{image_decoder_forward.1} parent=0 // pred_check
    _
  $region15: #{image_decoder_forward.1} parent=0 // pred_check_branch
    %24 = sbr.rel (0) target = $region17
  $region16: #{image_decoder_forward.1} parent=0 // pred_region
    _
  $region17: #{image_decoder_forward.1} parent=0 // pred_fallthru
    _
  // Predicated region
  $region18: #{image_decoder_forward.1} parent=0 // pred_check
    _
  $region19: #{image_decoder_forward.1} parent=0 // pred_check_branch
    %26 = sbr.rel (0) target = $region21
  $region20: #{image_decoder_forward.1} parent=0 // pred_region
    _
  $region21: #{image_decoder_forward.1} parent=0 // pred_fallthru
    _
  // Predicated region
  $region22: #{image_decoder_forward.1} parent=0 // pred_check
    _
  $region23: #{image_decoder_forward.1} parent=0 // pred_check_branch
    %28 = sbr.rel (0) target = $region25
  $region24: #{image_decoder_forward.1} parent=0 // pred_region
    _
  $region25: #{image_decoder_forward.1} parent=0 // pred_fallthru
    _
  // Predicated region
  $region26: #{image_decoder_forward.1} parent=0 // pred_check
    _
  $region27: #{image_decoder_forward.1} parent=0 // pred_check_branch
    %30 = sbr.rel (0) target = $region29
  $region28: #{image_decoder_forward.1} parent=0 // pred_region
    _
  $region29: #{image_decoder_forward.1} parent=0 // pred_fallthru
    _
  // Predicated region
  $region30: #{image_decoder_forward.1} parent=0 // pred_check
    _
  $region31: #{image_decoder_forward.1} parent=0 // pred_check_branch
    %32 = sbr.rel (0) target = $region33
  $region32: #{image_decoder_forward.1} parent=0 // pred_region
    _
  $region33: #{image_decoder_forward.1} parent=0 // pred_fallthru
    _
  // Predicated region
  $region34: #{image_decoder_forward.1} parent=0 // pred_check
    _
  $region35: #{image_decoder_forward.1} parent=0 // pred_check_branch
    %34 = sbr.rel (0) target = $region37
  $region36: #{image_decoder_forward.1} parent=0 // pred_region
    _
  $region37: #{image_decoder_forward.1} parent=0 // pred_fallthru
    _
  // Predicated region
  $region38: #{image_decoder_forward.1} parent=0 // pred_check
    _
  $region39: #{image_decoder_forward.1} parent=0 // pred_check_branch
    %36 = sbr.rel (0) target = $region41
  $region40: #{image_decoder_forward.1} parent=0 // pred_region
    _
  $region41: #{image_decoder_forward.1} parent=0 // pred_fallthru
    _
  // Predicated region
  $region42: #{image_decoder_forward.1} parent=0 // pred_check
    _
  $region43: #{image_decoder_forward.1} parent=0 // pred_check_branch
    %38 = sbr.rel (0) target = $region45
  $region44: #{image_decoder_forward.1} parent=0 // pred_region
    _
  $region45: #{image_decoder_forward.1} parent=0 // pred_fallthru
    _
  // Predicated region
  $region46: #{image_decoder_forward.1} parent=0 // pred_check
    _
  $region47: #{image_decoder_forward.1} parent=0 // pred_check_branch
    %40 = sbr.rel (0) target = $region49
  $region48: #{image_decoder_forward.1} parent=0 // pred_region
    _
  $region49: #{image_decoder_forward.1} parent=0 // pred_fallthru
    _
  %v42 = vld [vmem:[%s0] sm:$0xf]
  %v43 = vld [vmem:[%s1] sm:$0xf]
  %v44 = vld [vmem:[%s1 + $0x4] sm:$0xf]
  %v45 = vld [vmem:[%s1 + $0x8] sm:$0xf]
  %v46 = vld [vmem:[%s1 + $0xc] sm:$0xf]
  %v47 = vld [vmem:[%s1 + $0x10] sm:$0xf]
  %v48 = vld [vmem:[%s1 + $0x14] sm:$0xf]
  %v49 = vld [vmem:[%s1 + $0x18] sm:$0xf]
  %v50 = vld [vmem:[%s1 + $0x1c] sm:$0x3]
  %v59 = vunpack.c.l.b16 %v43
  %v60 = vunpack.c.l.b16 %v44
  %v61 = vunpack.c.l.b16 %v45
  %v62 = vunpack.c.l.b16 %v46
  %v63 = vunpack.c.l.b16 %v47
  %v64 = vunpack.c.l.b16 %v48
  %v65 = vunpack.c.l.b16 %v49
  %v66 = vunpack.c.l.b16 %v50
  %v67 = vpack.c.b16 %v60, %v59
  %v68 = vpack.c.b16 %v62, %v61
  %v69 = vpack.c.b16 %v64, %v63
  %v70 = vpack.c.b16 %v66, %v65
  %vm71 = vcmask 64512
  %v73 = vsel %vm71, %v67, 0
  %v76 = vsel %vm71, %v68, 0
  %v79 = vsel %vm71, %v69, 0
  %v82 = vsel %vm71, %v70, 0
  %vm84 = vcmask 1043456
  %v86 = vsel %vm84, %v42, 0
  %88 = vmatprep.subr.bf16.mxu0 0
  %89 = vmatpush1.bf16.msra.mxu0 %v86
  %90 = vmatprep.subr.bf16.mxu0 0
  %91 = vmatpush1.bf16.msra.mxu0 0
  %92 = vmatprep.subr.bf16.mxu0 0
  %93 = vmatpush1.bf16.msra.mxu0 0
  %94 = vmatprep.subr.bf16.mxu0 0
  %95 = vmatpush1.bf16.msra.mxu0 0
  %96 = vmatprep.subr.bf16.mxu0 0
  %97 = vmatpush1.bf16.msra.mxu0 0
  %98 = vmatprep.subr.bf16.mxu0 0
  %99 = vmatpush1.bf16.msra.mxu0 0
  %100 = vmatprep.subr.bf16.mxu0 0
  %101 = vmatpush1.bf16.msra.mxu0 0
  %102 = vmatprep.subr.bf16.mxu0 0
  %103 = vmatpush1.bf16.msra.mxu0 0
  %104 = vmatprep.subr.bf16.mxu0 0
  %105 = vmatpush1.bf16.msra.mxu0 0
  %106 = vmatprep.subr.bf16.mxu0 0
  %107 = vmatpush1.bf16.msra.mxu0 0
  %108 = vmatprep.subr.bf16.mxu0 0
  %109 = vmatpush1.bf16.msra.mxu0 0
  %110 = vmatprep.subr.bf16.mxu0 0
  %111 = vmatpush1.bf16.msra.mxu0 0
  %112 = vmatprep.subr.bf16.mxu0 0
  %113 = vmatpush1.bf16.msra.mxu0 0
  %114 = vmatprep.subr.bf16.mxu0 0
  %115 = vmatpush1.bf16.msra.mxu0 0
  %116 = vmatprep.subr.bf16.mxu0 0
  %117 = vmatpush1.bf16.msra.mxu0 0
  %118 = vmatprep.subr.bf16.mxu0 0
  %119 = vmatpush1.bf16.msra.mxu0 0
  %120 = vmatprep.mubr.bf16.mxu0 0
  %121 = vmatmul.mubr.bf16.gmra.mrb[0].mxu0 %v73
  %v122 = vpop.f32.mrb[0].mxu0
  %v123 = vadd.f32 0.0, %v122
  %v124 = vpop.f32.mrb[0].mxu0
  %v125 = vpop.f32.mrb[0].mxu0
  %v126 = vadd.f32 0.0, %v125
  %v127 = vpop.f32.mrb[0].mxu0
  %128 = vmatprep.mubr.bf16.mxu0 0
  %129 = vmatmul.mubr.bf16.gmra.mrb[0].mxu0 %v76
  %v130 = vpop.f32.mrb[0].mxu0
  %v131 = vadd.f32 0.0, %v130
  %v132 = vpop.f32.mrb[0].mxu0
  %v133 = vpop.f32.mrb[0].mxu0
  %v134 = vadd.f32 0.0, %v133
  %v135 = vpop.f32.mrb[0].mxu0
  %136 = vmatprep.mubr.bf16.mxu0 0
  %137 = vmatmul.mubr.bf16.gmra.mrb[0].mxu0 %v79
  %v138 = vpop.f32.mrb[0].mxu0
  %v139 = vadd.f32 0.0, %v138
  %v140 = vpop.f32.mrb[0].mxu0
  %v141 = vpop.f32.mrb[0].mxu0
  %v142 = vadd.f32 0.0, %v141
  %v143 = vpop.f32.mrb[0].mxu0
  %144 = vmatprep.mubr.bf16.mxu0 0
  %145 = vmatmul.mubr.bf16.gmra.mrb[0].mxu0 %v82
  %v146 = vpop.f32.mrb[0].mxu0
  %v147 = vadd.f32 0.0, %v146
  %v148 = vpop.f32.mrb[0].mxu0
  %v149 = vpop.f32.mrb[0].mxu0
  %v150 = vadd.f32 0.0, %v149
  %v151 = vpop.f32.mrb[0].mxu0
  %152 = vdwg.mxu0
  %v153 = vpack.c.bf16 %v126, %v123
  %v154 = vpack.c.bf16 %v134, %v131
  %v155 = vpack.c.bf16 %v142, %v139
  %v156 = vpack.c.bf16 %v150, %v147
  %v157 = vld [vmem:[%s2] sm:$0xf]
  %v158 = vld [vmem:[%s2 + $0x4] sm:$0xf]
  %s159 = scalar_lea.vmem %s1, 32
  %v160 = vld [vmem:[%s159] sm:$0xf]
  %v161 = vld [vmem:[%s159 + $0x4] sm:$0xf]
  %v162 = vld [vmem:[%s159 + $0x8] sm:$0xf]
  %v163 = vld [vmem:[%s159 + $0xc] sm:$0xf]
  %v164 = vld [vmem:[%s159 + $0x10] sm:$0xf]
  %v165 = vld [vmem:[%s159 + $0x14] sm:$0xf]
  %v166 = vld [vmem:[%s159 + $0x18] sm:$0xf]
  %v167 = vld [vmem:[%s159 + $0x1c] sm:$0x3]
  %v176 = vunpack.c.l.b16 %v160
  %v177 = vunpack.c.l.b16 %v161
  %v178 = vunpack.c.l.b16 %v162
  %v179 = vunpack.c.l.b16 %v163
  %v180 = vunpack.c.l.b16 %v164
  %v181 = vunpack.c.l.b16 %v165
  %v182 = vunpack.c.l.b16 %v166
  %v183 = vunpack.c.l.b16 %v167
  %v184 = vpack.c.b16 %v177, %v176
  %v185 = vpack.c.b16 %v179, %v178
  %v186 = vpack.c.b16 %v181, %v180
  %v187 = vpack.c.b16 %v183, %v182
  %v189 = vsel %vm71, %v184, 0
  %v192 = vsel %vm71, %v185, 0
  %v195 = vsel %vm71, %v186, 0
  %v198 = vsel %vm71, %v187, 0
  %200 = vmatprep.subr.bf16.mxu0 0
  %201 = vmatpush1.bf16.msra.mxu0 %v86
  %202 = vmatprep.subr.bf16.mxu0 0
  %203 = vmatpush1.bf16.msra.mxu0 0
  %204 = vmatprep.subr.bf16.mxu0 0
  %205 = vmatpush1.bf16.msra.mxu0 0
  %206 = vmatprep.subr.bf16.mxu0 0
  %207 = vmatpush1.bf16.msra.mxu0 0
  %208 = vmatprep.subr.bf16.mxu0 0
  %209 = vmatpush1.bf16.msra.mxu0 0
  %210 = vmatprep.subr.bf16.mxu0 0
  %211 = vmatpush1.bf16.msra.mxu0 0
  %212 = vmatprep.subr.bf16.mxu0 0
  %213 = vmatpush1.bf16.msra.mxu0 0
  %214 = vmatprep.subr.bf16.mxu0 0
  %215 = vmatpush1.bf16.msra.mxu0 0
  %216 = vmatprep.subr.bf16.mxu0 0
  %217 = vmatpush1.bf16.msra.mxu0 0
  %218 = vmatprep.subr.bf16.mxu0 0
  %219 = vmatpush1.bf16.msra.mxu0 0
  %220 = vmatprep.subr.bf16.mxu0 0
  %221 = vmatpush1.bf16.msra.mxu0 0
  %222 = vmatprep.subr.bf16.mxu0 0
  %223 = vmatpush1.bf16.msra.mxu0 0
  %224 = vmatprep.subr.bf16.mxu0 0
  %225 = vmatpush1.bf16.msra.mxu0 0
  %226 = vmatprep.subr.bf16.mxu0 0
  %227 = vmatpush1.bf16.msra.mxu0 0
  %228 = vmatprep.subr.bf16.mxu0 0
  %229 = vmatpush1.bf16.msra.mxu0 0
  %230 = vmatprep.subr.bf16.mxu0 0
  %231 = vmatpush1.bf16.msra.mxu0 0
  %232 = vmatprep.mubr.bf16.mxu0 0
  %233 = vmatmul.mubr.bf16.gmra.mrb[0].mxu0 %v189
  %v234 = vpop.f32.mrb[0].mxu0
  %v235 = vadd.f32 0.0, %v234
  %v236 = vpop.f32.mrb[0].mxu0
  %v237 = vpop.f32.mrb[0].mxu0
  %v238 = vadd.f32 0.0, %v237
  %v239 = vpop.f32.mrb[0].mxu0
  %240 = vmatprep.mubr.bf16.mxu0 0
  %241 = vmatmul.mubr.bf16.gmra.mrb[0].mxu0 %v192
  %v242 = vpop.f32.mrb[0].mxu0
  %v243 = vadd.f32 0.0, %v242
  %v244 = vpop.f32.mrb[0].mxu0
  %v245 = vpop.f32.mrb[0].mxu0
  %v246 = vadd.f32 0.0, %v245
  %v247 = vpop.f32.mrb[0].mxu0
  %248 = vmatprep.mubr.bf16.mxu0 0
  %249 = vmatmul.mubr.bf16.gmra.mrb[0].mxu0 %v195
  %v250 = vpop.f32.mrb[0].mxu0
  %v251 = vadd.f32 0.0, %v250
  %v252 = vpop.f32.mrb[0].mxu0
  %v253 = vpop.f32.mrb[0].mxu0
  %v254 = vadd.f32 0.0, %v253
  %v255 = vpop.f32.mrb[0].mxu0
  %256 = vmatprep.mubr.bf16.mxu0 0
  %257 = vmatmul.mubr.bf16.gmra.mrb[0].mxu0 %v198
  %v258 = vpop.f32.mrb[0].mxu0
  %v259 = vadd.f32 0.0, %v258
  %v260 = vpop.f32.mrb[0].mxu0
  %v261 = vpop.f32.mrb[0].mxu0
  %v262 = vadd.f32 0.0, %v261
  %v263 = vpop.f32.mrb[0].mxu0
  %264 = vdwg.mxu0
  %v265 = vpack.c.bf16 %v238, %v235
  %v266 = vpack.c.bf16 %v246, %v243
  %v267 = vpack.c.bf16 %v254, %v251
  %v268 = vpack.c.bf16 %v262, %v259
  %s269 = scalar_lea.vmem %s2, 8
  %v270 = vld [vmem:[%s269] sm:$0xf]
  %v271 = vld [vmem:[%s269 + $0x4] sm:$0xf]
  %v274 = vunpack.c.l.b16 %v270
  %v275 = vunpack.c.l.b16 %v271
  %v276 = vpack.c.b16 %v275, %v274
  %vm278 = vcmask 130048
  %v280 = vsel %vm278, %v265, 0
  %v283 = vsel %vm278, %v266, 0
  %v286 = vsel %vm278, %v267, 0
  %v289 = vsel %vm278, %v268, 0
  %291 = vmatprep.subr.bf16.mxu0 0
  %292 = vmatpush1.bf16.msra.mxu0 %v276
  %293 = vmatprep.subr.bf16.mxu0 0
  %294 = vmatpush1.bf16.msra.mxu0 0
  %295 = vmatprep.subr.bf16.mxu0 0
  %296 = vmatpush1.bf16.msra.mxu0 0
  %297 = vmatprep.subr.bf16.mxu0 0
  %298 = vmatpush1.bf16.msra.mxu0 0
  %299 = vmatprep.subr.bf16.mxu0 0
  %300 = vmatpush1.bf16.msra.mxu0 0
  %301 = vmatprep.subr.bf16.mxu0 0
  %302 = vmatpush1.bf16.msra.mxu0 0
  %303 = vmatprep.subr.bf16.mxu0 0
  %304 = vmatpush1.bf16.msra.mxu0 0
  %305 = vmatprep.subr.bf16.mxu0 0
  %306 = vmatpush1.bf16.msra.mxu0 0
  %307 = vmatprep.subr.bf16.mxu0 0
  %308 = vmatpush1.bf16.msra.mxu0 0
  %309 = vmatprep.subr.bf16.mxu0 0
  %310 = vmatpush1.bf16.msra.mxu0 0
  %311 = vmatprep.subr.bf16.mxu0 0
  %312 = vmatpush1.bf16.msra.mxu0 0
  %313 = vmatprep.subr.bf16.mxu0 0
  %314 = vmatpush1.bf16.msra.mxu0 0
  %315 = vmatprep.subr.bf16.mxu0 0
  %316 = vmatpush1.bf16.msra.mxu0 0
  %317 = vmatprep.subr.bf16.mxu0 0
  %318 = vmatpush1.bf16.msra.mxu0 0
  %319 = vmatprep.subr.bf16.mxu0 0
  %320 = vmatpush1.bf16.msra.mxu0 0
  %321 = vmatprep.subr.bf16.mxu0 0
  %322 = vmatpush1.bf16.msra.mxu0 0
  %323 = vmatprep.mubr.bf16.mxu0 0
  %324 = vmatmul.mubr.bf16.gmra.mrb[0].mxu0 %v280
  %v325 = vpop.f32.mrb[0].mxu0
  %v326 = vadd.f32 0.0, %v325
  %v327 = vpop.f32.mrb[0].mxu0
  %v328 = vpop.f32.mrb[0].mxu0
  %v329 = vadd.f32 0.0, %v328
  %v330 = vpop.f32.mrb[0].mxu0
  %331 = vmatprep.mubr.bf16.mxu0 0
  %332 = vmatmul.mubr.bf16.gmra.mrb[0].mxu0 %v283
  %v333 = vpop.f32.mrb[0].mxu0
  %v334 = vadd.f32 0.0, %v333
  %v335 = vpop.f32.mrb[0].mxu0
  %v336 = vpop.f32.mrb[0].mxu0
  %v337 = vadd.f32 0.0, %v336
  %v338 = vpop.f32.mrb[0].mxu0
  %339 = vmatprep.mubr.bf16.mxu0 0
  %340 = vmatmul.mubr.bf16.gmra.mrb[0].mxu0 %v286
  %v341 = vpop.f32.mrb[0].mxu0
  %v342 = vadd.f32 0.0, %v341
  %v343 = vpop.f32.mrb[0].mxu0
  %v344 = vpop.f32.mrb[0].mxu0
  %v345 = vadd.f32 0.0, %v344
  %v346 = vpop.f32.mrb[0].mxu0
  %347 = vmatprep.mubr.bf16.mxu0 0
  %348 = vmatmul.mubr.bf16.gmra.mrb[0].mxu0 %v289
  %v349 = vpop.f32.mrb[0].mxu0
  %v350 = vadd.f32 0.0, %v349
  %v351 = vpop.f32.mrb[0].mxu0
  %v352 = vpop.f32.mrb[0].mxu0
  %v353 = vadd.f32 0.0, %v352
  %v354 = vpop.f32.mrb[0].mxu0
  %355 = vdwg.mxu0
  %v358 = vunpack.c.l.b16 %v157
  %v359 = vunpack.c.l.b16 %v158
  %v360 = vpack.c.b16 %v359, %v358
  %v363 = vsel %vm278, %v153, 0
  %v366 = vsel %vm278, %v154, 0
  %v369 = vsel %vm278, %v155, 0
  %v372 = vsel %vm278, %v156, 0
  %374 = vmatprep.subr.bf16.mxu0 0
  %375 = vmatpush1.bf16.msra.mxu0 %v360
  %376 = vmatprep.subr.bf16.mxu0 0
  %377 = vmatpush1.bf16.msra.mxu0 0
  %378 = vmatprep.subr.bf16.mxu0 0
  %379 = vmatpush1.bf16.msra.mxu0 0
  %380 = vmatprep.subr.bf16.mxu0 0
  %381 = vmatpush1.bf16.msra.mxu0 0
  %382 = vmatprep.subr.bf16.mxu0 0
  %383 = vmatpush1.bf16.msra.mxu0 0
  %384 = vmatprep.subr.bf16.mxu0 0
  %385 = vmatpush1.bf16.msra.mxu0 0
  %386 = vmatprep.subr.bf16.mxu0 0
  %387 = vmatpush1.bf16.msra.mxu0 0
  %388 = vmatprep.subr.bf16.mxu0 0
  %389 = vmatpush1.bf16.msra.mxu0 0
  %390 = vmatprep.subr.bf16.mxu0 0
  %391 = vmatpush1.bf16.msra.mxu0 0
  %392 = vmatprep.subr.bf16.mxu0 0
  %393 = vmatpush1.bf16.msra.mxu0 0
  %394 = vmatprep.subr.bf16.mxu0 0
  %395 = vmatpush1.bf16.msra.mxu0 0
  %396 = vmatprep.subr.bf16.mxu0 0
  %397 = vmatpush1.bf16.msra.mxu0 0
  %398 = vmatprep.subr.bf16.mxu0 0
  %399 = vmatpush1.bf16.msra.mxu0 0
  %400 = vmatprep.subr.bf16.mxu0 0
  %401 = vmatpush1.bf16.msra.mxu0 0
  %402 = vmatprep.subr.bf16.mxu0 0
  %403 = vmatpush1.bf16.msra.mxu0 0
  %404 = vmatprep.subr.bf16.mxu0 0
  %405 = vmatpush1.bf16.msra.mxu0 0
  %406 = vmatprep.mubr.bf16.mxu0 0
  %407 = vmatmul.mubr.bf16.gmra.mrb[0].mxu0 %v363
  %v408 = vpop.f32.mrb[0].mxu0
  %v409 = vadd.f32 %v326, %v408
  %v410 = vpop.f32.mrb[0].mxu0
  %v411 = vpop.f32.mrb[0].mxu0
  %v412 = vadd.f32 %v329, %v411
  %v413 = vpop.f32.mrb[0].mxu0
  %414 = vmatprep.mubr.bf16.mxu0 0
  %415 = vmatmul.mubr.bf16.gmra.mrb[0].mxu0 %v366
  %v416 = vpop.f32.mrb[0].mxu0
  %v417 = vadd.f32 %v334, %v416
  %v418 = vpop.f32.mrb[0].mxu0
  %v419 = vpop.f32.mrb[0].mxu0
  %v420 = vadd.f32 %v337, %v419
  %v421 = vpop.f32.mrb[0].mxu0
  %422 = vmatprep.mubr.bf16.mxu0 0
  %423 = vmatmul.mubr.bf16.gmra.mrb[0].mxu0 %v369
  %v424 = vpop.f32.mrb[0].mxu0
  %v425 = vadd.f32 %v342, %v424
  %v426 = vpop.f32.mrb[0].mxu0
  %v427 = vpop.f32.mrb[0].mxu0
  %v428 = vadd.f32 %v345, %v427
  %v429 = vpop.f32.mrb[0].mxu0
  %430 = vmatprep.mubr.bf16.mxu0 0
  %431 = vmatmul.mubr.bf16.gmra.mrb[0].mxu0 %v372
  %v432 = vpop.f32.mrb[0].mxu0
  %v433 = vadd.f32 %v350, %v432
  %v434 = vpop.f32.mrb[0].mxu0
  %v435 = vpop.f32.mrb[0].mxu0
  %v436 = vadd.f32 %v353, %v435
  %v437 = vpop.f32.mrb[0].mxu0
  %438 = vdwg.mxu0
  %s439 = scalar_lea.vmem %s1, 64
  %v440 = vld [vmem:[%s439] sm:$0xf]
  %v441 = vld [vmem:[%s439 + $0x4] sm:$0xf]
  %v442 = vld [vmem:[%s439 + $0x8] sm:$0xf]
  %v443 = vld [vmem:[%s439 + $0xc] sm:$0xf]
  %v444 = vld [vmem:[%s439 + $0x10] sm:$0xf]
  %v445 = vld [vmem:[%s439 + $0x14] sm:$0xf]
  %v446 = vld [vmem:[%s439 + $0x18] sm:$0xf]
  %v447 = vld [vmem:[%s439 + $0x1c] sm:$0x3]
  %v456 = vunpack.c.l.b16 %v440
  %v457 = vunpack.c.l.b16 %v441
  %v458 = vunpack.c.l.b16 %v442
  %v459 = vunpack.c.l.b16 %v443
  %v460 = vunpack.c.l.b16 %v444
  %v461 = vunpack.c.l.b16 %v445
  %v462 = vunpack.c.l.b16 %v446
  %v463 = vunpack.c.l.b16 %v447
  %v464 = vpack.c.b16 %v457, %v456
  %v465 = vpack.c.b16 %v459, %v458
  %v466 = vpack.c.b16 %v461, %v460
  %v467 = vpack.c.b16 %v463, %v462
  %v469 = vsel %vm71, %v464, 0
  %v472 = vsel %vm71, %v465, 0
  %v475 = vsel %vm71, %v466, 0
  %v478 = vsel %vm71, %v467, 0
  %480 = vmatprep.subr.bf16.mxu0 0
  %481 = vmatpush1.bf16.msra.mxu0 %v86
  %482 = vmatprep.subr.bf16.mxu0 0
  %483 = vmatpush1.bf16.msra.mxu0 0
  %484 = vmatprep.subr.bf16.mxu0 0
  %485 = vmatpush1.bf16.msra.mxu0 0
  %486 = vmatprep.subr.bf16.mxu0 0
  %487 = vmatpush1.bf16.msra.mxu0 0
  %488 = vmatprep.subr.bf16.mxu0 0
  %489 = vmatpush1.bf16.msra.mxu0 0
  %490 = vmatprep.subr.bf16.mxu0 0
  %491 = vmatpush1.bf16.msra.mxu0 0
  %492 = vmatprep.subr.bf16.mxu0 0
  %493 = vmatpush1.bf16.msra.mxu0 0
  %494 = vmatprep.subr.bf16.mxu0 0
  %495 = vmatpush1.bf16.msra.mxu0 0
  %496 = vmatprep.subr.bf16.mxu0 0
  %497 = vmatpush1.bf16.msra.mxu0 0
  %498 = vmatprep.subr.bf16.mxu0 0
  %499 = vmatpush1.bf16.msra.mxu0 0
  %500 = vmatprep.subr.bf16.mxu0 0
  %501 = vmatpush1.bf16.msra.mxu0 0
  %502 = vmatprep.subr.bf16.mxu0 0
  %503 = vmatpush1.bf16.msra.mxu0 0
  %504 = vmatprep.subr.bf16.mxu0 0
  %505 = vmatpush1.bf16.msra.mxu0 0
  %506 = vmatprep.subr.bf16.mxu0 0
  %507 = vmatpush1.bf16.msra.mxu0 0
  %508 = vmatprep.subr.bf16.mxu0 0
  %509 = vmatpush1.bf16.msra.mxu0 0
  %510 = vmatprep.subr.bf16.mxu0 0
  %511 = vmatpush1.bf16.msra.mxu0 0
  %512 = vmatprep.mubr.bf16.mxu0 0
  %513 = vmatmul.mubr.bf16.gmra.mrb[0].mxu0 %v469
  %v514 = vpop.f32.mrb[0].mxu0
  %v515 = vadd.f32 0.0, %v514
  %v516 = vpop.f32.mrb[0].mxu0
  %v517 = vpop.f32.mrb[0].mxu0
  %v518 = vadd.f32 0.0, %v517
  %v519 = vpop.f32.mrb[0].mxu0
  %520 = vmatprep.mubr.bf16.mxu0 0
  %521 = vmatmul.mubr.bf16.gmra.mrb[0].mxu0 %v472
  %v522 = vpop.f32.mrb[0].mxu0
  %v523 = vadd.f32 0.0, %v522
  %v524 = vpop.f32.mrb[0].mxu0
  %v525 = vpop.f32.mrb[0].mxu0
  %v526 = vadd.f32 0.0, %v525
  %v527 = vpop.f32.mrb[0].mxu0
  %528 = vmatprep.mubr.bf16.mxu0 0
  %529 = vmatmul.mubr.bf16.gmra.mrb[0].mxu0 %v475
  %v530 = vpop.f32.mrb[0].mxu0
  %v531 = vadd.f32 0.0, %v530
  %v532 = vpop.f32.mrb[0].mxu0
  %v533 = vpop.f32.mrb[0].mxu0
  %v534 = vadd.f32 0.0, %v533
  %v535 = vpop.f32.mrb[0].mxu0
  %536 = vmatprep.mubr.bf16.mxu0 0
  %537 = vmatmul.mubr.bf16.gmra.mrb[0].mxu0 %v478
  %v538 = vpop.f32.mrb[0].mxu0
  %v539 = vadd.f32 0.0, %v538
  %v540 = vpop.f32.mrb[0].mxu0
  %v541 = vpop.f32.mrb[0].mxu0
  %v542 = vadd.f32 0.0, %v541
  %v543 = vpop.f32.mrb[0].mxu0
  %544 = vdwg.mxu0
  %v545 = vpack.c.bf16 %v518, %v515
  %v546 = vpack.c.bf16 %v526, %v523
  %v547 = vpack.c.bf16 %v534, %v531
  %v548 = vpack.c.bf16 %v542, %v539
  %s549 = scalar_lea.vmem %s2, 16
  %v550 = vld [vmem:[%s549] sm:$0xf]
  %v551 = vld [vmem:[%s549 + $0x4] sm:$0xf]
  %v554 = vunpack.c.l.b16 %v550
  %v555 = vunpack.c.l.b16 %v551
  %v556 = vpack.c.b16 %v555, %v554
  %v559 = vsel %vm278, %v545, 0
  %v562 = vsel %vm278, %v546, 0
  %v565 = vsel %vm278, %v547, 0
  %v568 = vsel %vm278, %v548, 0
  %570 = vmatprep.subr.bf16.mxu0 0
  %571 = vmatpush1.bf16.msra.mxu0 %v556
  %572 = vmatprep.subr.bf16.mxu0 0
  %573 = vmatpush1.bf16.msra.mxu0 0
  %574 = vmatprep.subr.bf16.mxu0 0
  %575 = vmatpush1.bf16.msra.mxu0 0
  %576 = vmatprep.subr.bf16.mxu0 0
  %577 = vmatpush1.bf16.msra.mxu0 0
  %578 = vmatprep.subr.bf16.mxu0 0
  %579 = vmatpush1.bf16.msra.mxu0 0
  %580 = vmatprep.subr.bf16.mxu0 0
  %581 = vmatpush1.bf16.msra.mxu0 0
  %582 = vmatprep.subr.bf16.mxu0 0
  %583 = vmatpush1.bf16.msra.mxu0 0
  %584 = vmatprep.subr.bf16.mxu0 0
  %585 = vmatpush1.bf16.msra.mxu0 0
  %586 = vmatprep.subr.bf16.mxu0 0
  %587 = vmatpush1.bf16.msra.mxu0 0
  %588 = vmatprep.subr.bf16.mxu0 0
  %589 = vmatpush1.bf16.msra.mxu0 0
  %590 = vmatprep.subr.bf16.mxu0 0
  %591 = vmatpush1.bf16.msra.mxu0 0
  %592 = vmatprep.subr.bf16.mxu0 0
  %593 = vmatpush1.bf16.msra.mxu0 0
  %594 = vmatprep.subr.bf16.mxu0 0
  %595 = vmatpush1.bf16.msra.mxu0 0
  %596 = vmatprep.subr.bf16.mxu0 0
  %597 = vmatpush1.bf16.msra.mxu0 0
  %598 = vmatprep.subr.bf16.mxu0 0
  %599 = vmatpush1.bf16.msra.mxu0 0
  %600 = vmatprep.subr.bf16.mxu0 0
  %601 = vmatpush1.bf16.msra.mxu0 0
  %602 = vmatprep.mubr.bf16.mxu0 0
  %603 = vmatmul.mubr.bf16.gmra.mrb[0].mxu0 %v559
  %v604 = vpop.f32.mrb[0].mxu0
  %v605 = vadd.f32 0.0, %v604
  %v606 = vpop.f32.mrb[0].mxu0
  %v607 = vpop.f32.mrb[0].mxu0
  %v608 = vadd.f32 0.0, %v607
  %v609 = vpop.f32.mrb[0].mxu0
  %610 = vmatprep.mubr.bf16.mxu0 0
  %611 = vmatmul.mubr.bf16.gmra.mrb[0].mxu0 %v562
  %v612 = vpop.f32.mrb[0].mxu0
  %v613 = vadd.f32 0.0, %v612
  %v614 = vpop.f32.mrb[0].mxu0
  %v615 = vpop.f32.mrb[0].mxu0
  %v616 = vadd.f32 0.0, %v615
  %v617 = vpop.f32.mrb[0].mxu0
  %618 = vmatprep.mubr.bf16.mxu0 0
  %619 = vmatmul.mubr.bf16.gmra.mrb[0].mxu0 %v565
  %v620 = vpop.f32.mrb[0].mxu0
  %v621 = vadd.f32 0.0, %v620
  %v622 = vpop.f32.mrb[0].mxu0
  %v623 = vpop.f32.mrb[0].mxu0
  %v624 = vadd.f32 0.0, %v623
  %v625 = vpop.f32.mrb[0].mxu0
  %626 = vmatprep.mubr.bf16.mxu0 0
  %627 = vmatmul.mubr.bf16.gmra.mrb[0].mxu0 %v568
  %v628 = vpop.f32.mrb[0].mxu0
  %v629 = vadd.f32 0.0, %v628
  %v630 = vpop.f32.mrb[0].mxu0
  %v631 = vpop.f32.mrb[0].mxu0
  %v632 = vadd.f32 0.0, %v631
  %v633 = vpop.f32.mrb[0].mxu0
  %634 = vdwg.mxu0
  %v635 = vadd.f32 %v409, %v605
  %v636 = vadd.f32 %v412, %v608
  %v637 = vadd.f32 %v417, %v613
  %v638 = vadd.f32 %v420, %v616
  %v639 = vadd.f32 %v425, %v621
  %v640 = vadd.f32 %v428, %v624
  %v641 = vadd.f32 %v433, %v629
  %v642 = vadd.f32 %v436, %v632
  %v643 = vld [vmem:[%s3] sm:$0xff]
  %v644 = vld [vmem:[%s3 + $0x8] sm:$0xff]
  %v645 = vld [vmem:[%s3 + $0x10] sm:$0xff]
  %v646 = vld [vmem:[%s3 + $0x18] sm:$0xff]
  %v647 = vld [vmem:[%s3 + $0x20] sm:$0xff]
  %v648 = vld [vmem:[%s3 + $0x28] sm:$0xff]
  %v649 = vld [vmem:[%s3 + $0x30] sm:$0xff]
  %v650 = vld [vmem:[%s3 + $0x38] sm:$0xf]
  %652 = vset.pattern.permute.xlu0 0
  %653 = vperm.xlu0 %652, %v643
  %v654 = vpop.permute.xlu0 %653
  %657 = vset.pattern.permute.xlu0 0
  %658 = vperm.xlu0 %657, %v644
  %v659 = vpop.permute.xlu0 %658
  %662 = vset.pattern.permute.xlu0 0
  %663 = vperm.xlu0 %662, %v645
  %v664 = vpop.permute.xlu0 %663
  %667 = vset.pattern.permute.xlu0 0
  %668 = vperm.xlu0 %667, %v646
  %v669 = vpop.permute.xlu0 %668
  %672 = vset.pattern.permute.xlu0 0
  %673 = vperm.xlu0 %672, %v647
  %v674 = vpop.permute.xlu0 %673
  %677 = vset.pattern.permute.xlu0 0
  %678 = vperm.xlu0 %677, %v648
  %v679 = vpop.permute.xlu0 %678
  %682 = vset.pattern.permute.xlu0 0
  %683 = vperm.xlu0 %682, %v649
  %v684 = vpop.permute.xlu0 %683
  %687 = vset.pattern.permute.xlu0 0
  %688 = vperm.xlu0 %687, %v650
  %v689 = vpop.permute.xlu0 %688
  %v691 = vadd.f32 %v635, %v654
  %v692 = vadd.f32 %v636, %v659
  %v693 = vadd.f32 %v637, %v664
  %v694 = vadd.f32 %v638, %v669
  %v695 = vadd.f32 %v639, %v674
  %v696 = vadd.f32 %v640, %v679
  %v697 = vadd.f32 %v641, %v684
  %v698 = vadd.f32 %v642, %v689
  %v699 = vmax.f32 %v691, 0.0
  %v700 = vmax.f32 %v692, 0.0
  %v701 = vmax.f32 %v693, 0.0
  %v702 = vmax.f32 %v694, 0.0
  %v703 = vmax.f32 %v695, 0.0
  %v704 = vmax.f32 %v696, 0.0
  %v705 = vmax.f32 %v697, 0.0
  %v706 = vmax.f32 %v698, 0.0
  %v707 = vpack.c.bf16 %v700, %v699
  %v708 = vpack.c.bf16 %v702, %v701
  %v709 = vpack.c.bf16 %v704, %v703
  %v710 = vpack.c.bf16 %v706, %v705
  %v711 = vld [vmem:[%s4] sm:$0xf]
  %v712 = vld [vmem:[%s4 + $0x4] sm:$0xf]
  %v713 = vld [vmem:[%s4 + $0x8] sm:$0xf]
  %v714 = vld [vmem:[%s4 + $0xc] sm:$0xf]
  %v715 = vld [vmem:[%s4 + $0x10] sm:$0xf]
  %v716 = vld [vmem:[%s4 + $0x14] sm:$0xf]
  %v717 = vld [vmem:[%s4 + $0x18] sm:$0xf]
  %v718 = vld [vmem:[%s4 + $0x1c] sm:$0xf]
  %v719 = vld [vmem:[%s4 + $0x20] sm:$0xf]
  %v720 = vld [vmem:[%s4 + $0x24] sm:$0xf]
  %v721 = vld [vmem:[%s4 + $0x28] sm:$0xf]
  %v722 = vld [vmem:[%s4 + $0x2c] sm:$0xf]
  %v723 = vld [vmem:[%s4 + $0x30] sm:$0xf]
  %v724 = vld [vmem:[%s4 + $0x34] sm:$0xf]
  %v725 = vld [vmem:[%s4 + $0x38] sm:$0x3]
  %v741 = vunpack.c.l.b16 %v711
  %v742 = vunpack.c.l.b16 %v712
  %v743 = vunpack.c.l.b16 %v713
  %v744 = vunpack.c.l.b16 %v714
  %v745 = vunpack.c.l.b16 %v715
  %v746 = vunpack.c.l.b16 %v716
  %v747 = vunpack.c.l.b16 %v717
  %v748 = vunpack.c.l.b16 %v718
  %v749 = vunpack.c.l.b16 %v719
  %v750 = vunpack.c.l.b16 %v720
  %v751 = vunpack.c.l.b16 %v721
  %v752 = vunpack.c.l.b16 %v722
  %v753 = vunpack.c.l.b16 %v723
  %v754 = vunpack.c.l.b16 %v724
  %v755 = vunpack.c.l.b16 %v725
  %v756 = vpack.c.b16 %v742, %v741
  %v757 = vpack.c.b16 %v744, %v743
  %v758 = vpack.c.b16 %v746, %v745
  %v759 = vpack.c.b16 %v748, %v747
  %v760 = vpack.c.b16 %v750, %v749
  %v761 = vpack.c.b16 %v752, %v751
  %v762 = vpack.c.b16 %v754, %v753
  %v763 = vpack.c.b16 %v755, %v755
  %vm764 = vcmask 490496
  %v766 = vsel %vm764, %v756, 0
  %v769 = vsel %vm764, %v757, 0
  %v772 = vsel %vm764, %v758, 0
  %v775 = vsel %vm764, %v759, 0
  %v778 = vsel %vm764, %v760, 0
  %v781 = vsel %vm764, %v761, 0
  %v784 = vsel %vm764, %v762, 0
  %v787 = vsel %vm764, %v763, 0
  %vm789 = vcmask 1045504
  %v791 = vsel %vm789, %v710, 0
  %793 = vmatprep.subr.bf16.mxu0 0
  %794 = vmatpush1.bf16.msra.mxu0 %v707
  %795 = vmatprep.subr.bf16.mxu0 0
  %796 = vmatpush1.bf16.msra.mxu0 %v708
  %797 = vmatprep.subr.bf16.mxu0 0
  %798 = vmatpush1.bf16.msra.mxu0 %v709
  %799 = vmatprep.subr.bf16.mxu0 0
  %800 = vmatpush1.bf16.msra.mxu0 %v791
  %801 = vmatprep.subr.bf16.mxu0 0
  %802 = vmatpush1.bf16.msra.mxu0 0
  %803 = vmatprep.subr.bf16.mxu0 0
  %804 = vmatpush1.bf16.msra.mxu0 0
  %805 = vmatprep.subr.bf16.mxu0 0
  %806 = vmatpush1.bf16.msra.mxu0 0
  %807 = vmatprep.subr.bf16.mxu0 0
  %808 = vmatpush1.bf16.msra.mxu0 0
  %809 = vmatprep.subr.bf16.mxu0 0
  %810 = vmatpush1.bf16.msra.mxu0 0
  %811 = vmatprep.subr.bf16.mxu0 0
  %812 = vmatpush1.bf16.msra.mxu0 0
  %813 = vmatprep.subr.bf16.mxu0 0
  %814 = vmatpush1.bf16.msra.mxu0 0
  %815 = vmatprep.subr.bf16.mxu0 0
  %816 = vmatpush1.bf16.msra.mxu0 0
  %817 = vmatprep.subr.bf16.mxu0 0
  %818 = vmatpush1.bf16.msra.mxu0 0
  %819 = vmatprep.subr.bf16.mxu0 0
  %820 = vmatpush1.bf16.msra.mxu0 0
  %821 = vmatprep.subr.bf16.mxu0 0
  %822 = vmatpush1.bf16.msra.mxu0 0
  %823 = vmatprep.subr.bf16.mxu0 0
  %824 = vmatpush1.bf16.msra.mxu0 0
  %825 = vmatprep.mubr.bf16.mxu0 0
  %826 = vmatmul.mubr.bf16.gmra.mrb[0].mxu0 %v766
  %v827 = vpop.f32.mrb[0].mxu0
  %v828 = vadd.f32 0.0, %v827
  %v829 = vpop.f32.mrb[0].mxu0
  %v830 = vpop.f32.mrb[0].mxu0
  %v831 = vadd.f32 0.0, %v830
  %v832 = vpop.f32.mrb[0].mxu0
  %833 = vmatprep.mubr.bf16.mxu0 0
  %834 = vmatmul.mubr.bf16.gmra.mrb[0].mxu0 %v769
  %v835 = vpop.f32.mrb[0].mxu0
  %v836 = vadd.f32 0.0, %v835
  %v837 = vpop.f32.mrb[0].mxu0
  %v838 = vpop.f32.mrb[0].mxu0
  %v839 = vadd.f32 0.0, %v838
  %v840 = vpop.f32.mrb[0].mxu0
  %841 = vmatprep.mubr.bf16.mxu0 0
  %842 = vmatmul.mubr.bf16.gmra.mrb[0].mxu0 %v772
  %v843 = vpop.f32.mrb[0].mxu0
  %v844 = vadd.f32 0.0, %v843
  %v845 = vpop.f32.mrb[0].mxu0
  %v846 = vpop.f32.mrb[0].mxu0
  %v847 = vadd.f32 0.0, %v846
  %v848 = vpop.f32.mrb[0].mxu0
  %849 = vmatprep.mubr.bf16.mxu0 0
  %850 = vmatmul.mubr.bf16.gmra.mrb[0].mxu0 %v775
  %v851 = vpop.f32.mrb[0].mxu0
  %v852 = vadd.f32 0.0, %v851
  %v853 = vpop.f32.mrb[0].mxu0
  %v854 = vpop.f32.mrb[0].mxu0
  %v855 = vadd.f32 0.0, %v854
  %v856 = vpop.f32.mrb[0].mxu0
  %857 = vmatprep.mubr.bf16.mxu0 0
  %858 = vmatmul.mubr.bf16.gmra.mrb[0].mxu0 %v778
  %v859 = vpop.f32.mrb[0].mxu0
  %v860 = vadd.f32 0.0, %v859
  %v861 = vpop.f32.mrb[0].mxu0
  %v862 = vpop.f32.mrb[0].mxu0
  %v863 = vadd.f32 0.0, %v862
  %v864 = vpop.f32.mrb[0].mxu0
  %865 = vmatprep.mubr.bf16.mxu0 0
  %866 = vmatmul.mubr.bf16.gmra.mrb[0].mxu0 %v781
  %v867 = vpop.f32.mrb[0].mxu0
  %v868 = vadd.f32 0.0, %v867
  %v869 = vpop.f32.mrb[0].mxu0
  %v870 = vpop.f32.mrb[0].mxu0
  %v871 = vadd.f32 0.0, %v870
  %v872 = vpop.f32.mrb[0].mxu0
  %873 = vmatprep.mubr.bf16.mxu0 0
  %874 = vmatmul.mubr.bf16.gmra.mrb[0].mxu0 %v784
  %v875 = vpop.f32.mrb[0].mxu0
  %v876 = vadd.f32 0.0, %v875
  %v877 = vpop.f32.mrb[0].mxu0
  %v878 = vpop.f32.mrb[0].mxu0
  %v879 = vadd.f32 0.0, %v878
  %v880 = vpop.f32.mrb[0].mxu0
  %881 = vmatprep.mubr.bf16.mxu0 0
  %882 = vmatmul.mubr.bf16.gmra.mrb[0].mxu0 %v787
  %v883 = vpop.f32.mrb[0].mxu0
  %v884 = vadd.f32 0.0, %v883
  %v885 = vpop.f32.mrb[0].mxu0
  %v886 = vpop.f32.mrb[0].mxu0
  %v887 = vpop.f32.mrb[0].mxu0
  %888 = vdwg.mxu0
  %v889 = vpack.c.bf16 %v831, %v828
  %v890 = vpack.c.bf16 %v839, %v836
  %v891 = vpack.c.bf16 %v847, %v844
  %v892 = vpack.c.bf16 %v855, %v852
  %v893 = vpack.c.bf16 %v863, %v860
  %v894 = vpack.c.bf16 %v871, %v868
  %v895 = vpack.c.bf16 %v879, %v876
  %v896 = vpack.c.bf16 %v884, %v884
  %v897 = vld [vmem:[%s5] sm:$0xf]
  %v898 = vld [vmem:[%s5 + $0x4] sm:$0xf]
  %v899 = vld [vmem:[%s5 + $0x8] sm:$0xf]
  %v900 = vld [vmem:[%s5 + $0xc] sm:$0x7]
  %s901 = scalar_lea.vmem %s4, 60
  %v902 = vld [vmem:[%s901] sm:$0xf]
  %v903 = vld [vmem:[%s901 + $0x4] sm:$0xf]
  %v904 = vld [vmem:[%s901 + $0x8] sm:$0xf]
  %v905 = vld [vmem:[%s901 + $0xc] sm:$0xf]
  %v906 = vld [vmem:[%s901 + $0x10] sm:$0xf]
  %v907 = vld [vmem:[%s901 + $0x14] sm:$0xf]
  %v908 = vld [vmem:[%s901 + $0x18] sm:$0xf]
  %v909 = vld [vmem:[%s901 + $0x1c] sm:$0xf]
  %v910 = vld [vmem:[%s901 + $0x20] sm:$0xf]
  %v911 = vld [vmem:[%s901 + $0x24] sm:$0xf]
  %v912 = vld [vmem:[%s901 + $0x28] sm:$0xf]
  %v913 = vld [vmem:[%s901 + $0x2c] sm:$0xf]
  %v914 = vld [vmem:[%s901 + $0x30] sm:$0xf]
  %v915 = vld [vmem:[%s901 + $0x34] sm:$0xf]
  %v916 = vld [vmem:[%s901 + $0x38] sm:$0x3]
  %v932 = vunpack.c.l.b16 %v902
  %v933 = vunpack.c.l.b16 %v903
  %v934 = vunpack.c.l.b16 %v904
  %v935 = vunpack.c.l.b16 %v905
  %v936 = vunpack.c.l.b16 %v906
  %v937 = vunpack.c.l.b16 %v907
  %v938 = vunpack.c.l.b16 %v908
  %v939 = vunpack.c.l.b16 %v909
  %v940 = vunpack.c.l.b16 %v910
  %v941 = vunpack.c.l.b16 %v911
  %v942 = vunpack.c.l.b16 %v912
  %v943 = vunpack.c.l.b16 %v913
  %v944 = vunpack.c.l.b16 %v914
  %v945 = vunpack.c.l.b16 %v915
  %v946 = vunpack.c.l.b16 %v916
  %v947 = vpack.c.b16 %v933, %v932
  %v948 = vpack.c.b16 %v935, %v934
  %v949 = vpack.c.b16 %v937, %v936
  %v950 = vpack.c.b16 %v939, %v938
  %v951 = vpack.c.b16 %v941, %v940
  %v952 = vpack.c.b16 %v943, %v942
  %v953 = vpack.c.b16 %v945, %v944
  %v954 = vpack.c.b16 %v946, %v946
  %v956 = vsel %vm764, %v947, 0
  %v959 = vsel %vm764, %v948, 0
  %v962 = vsel %vm764, %v949, 0
  %v965 = vsel %vm764, %v950, 0
  %v968 = vsel %vm764, %v951, 0
  %v971 = vsel %vm764, %v952, 0
  %v974 = vsel %vm764, %v953, 0
  %v977 = vsel %vm764, %v954, 0
  %979 = vmatprep.subr.bf16.mxu0 0
  %980 = vmatpush1.bf16.msra.mxu0 %v707
  %981 = vmatprep.subr.bf16.mxu0 0
  %982 = vmatpush1.bf16.msra.mxu0 %v708
  %983 = vmatprep.subr.bf16.mxu0 0
  %984 = vmatpush1.bf16.msra.mxu0 %v709
  %985 = vmatprep.subr.bf16.mxu0 0
  %986 = vmatpush1.bf16.msra.mxu0 %v791
  %987 = vmatprep.subr.bf16.mxu0 0
  %988 = vmatpush1.bf16.msra.mxu0 0
  %989 = vmatprep.subr.bf16.mxu0 0
  %990 = vmatpush1.bf16.msra.mxu0 0
  %991 = vmatprep.subr.bf16.mxu0 0
  %992 = vmatpush1.bf16.msra.mxu0 0
  %993 = vmatprep.subr.bf16.mxu0 0
  %994 = vmatpush1.bf16.msra.mxu0 0
  %995 = vmatprep.subr.bf16.mxu0 0
  %996 = vmatpush1.bf16.msra.mxu0 0
  %997 = vmatprep.subr.bf16.mxu0 0
  %998 = vmatpush1.bf16.msra.mxu0 0
  %999 = vmatprep.subr.bf16.mxu0 0
  %1000 = vmatpush1.bf16.msra.mxu0 0
  %1001 = vmatprep.subr.bf16.mxu0 0
  %1002 = vmatpush1.bf16.msra.mxu0 0
  %1003 = vmatprep.subr.bf16.mxu0 0
  %1004 = vmatpush1.bf16.msra.mxu0 0
  %1005 = vmatprep.subr.bf16.mxu0 0
  %1006 = vmatpush1.bf16.msra.mxu0 0
  %1007 = vmatprep.subr.bf16.mxu0 0
  %1008 = vmatpush1.bf16.msra.mxu0 0
  %1009 = vmatprep.subr.bf16.mxu0 0
  %1010 = vmatpush1.bf16.msra.mxu0 0
  %1011 = vmatprep.mubr.bf16.mxu0 0
  %1012 = vmatmul.mubr.bf16.gmra.mrb[0].mxu0 %v956
  %v1013 = vpop.f32.mrb[0].mxu0
  %v1014 = vadd.f32 0.0, %v1013
  %v1015 = vpop.f32.mrb[0].mxu0
  %v1016 = vpop.f32.mrb[0].mxu0
  %v1017 = vadd.f32 0.0, %v1016
  %v1018 = vpop.f32.mrb[0].mxu0
  %1019 = vmatprep.mubr.bf16.mxu0 0
  %1020 = vmatmul.mubr.bf16.gmra.mrb[0].mxu0 %v959
  %v1021 = vpop.f32.mrb[0].mxu0
  %v1022 = vadd.f32 0.0, %v1021
  %v1023 = vpop.f32.mrb[0].mxu0
  %v1024 = vpop.f32.mrb[0].mxu0
  %v1025 = vadd.f32 0.0, %v1024
  %v1026 = vpop.f32.mrb[0].mxu0
  %1027 = vmatprep.mubr.bf16.mxu0 0
  %1028 = vmatmul.mubr.bf16.gmra.mrb[0].mxu0 %v962
  %v1029 = vpop.f32.mrb[0].mxu0
  %v1030 = vadd.f32 0.0, %v1029
  %v1031 = vpop.f32.mrb[0].mxu0
  %v1032 = vpop.f32.mrb[0].mxu0
  %v1033 = vadd.f32 0.0, %v1032
  %v1034 = vpop.f32.mrb[0].mxu0
  %1035 = vmatprep.mubr.bf16.mxu0 0
  %1036 = vmatmul.mubr.bf16.gmra.mrb[0].mxu0 %v965
  %v1037 = vpop.f32.mrb[0].mxu0
  %v1038 = vadd.f32 0.0, %v1037
  %v1039 = vpop.f32.mrb[0].mxu0
  %v1040 = vpop.f32.mrb[0].mxu0
  %v1041 = vadd.f32 0.0, %v1040
  %v1042 = vpop.f32.mrb[0].mxu0
  %1043 = vmatprep.mubr.bf16.mxu0 0
  %1044 = vmatmul.mubr.bf16.gmra.mrb[0].mxu0 %v968
  %v1045 = vpop.f32.mrb[0].mxu0
  %v1046 = vadd.f32 0.0, %v1045
  %v1047 = vpop.f32.mrb[0].mxu0
  %v1048 = vpop.f32.mrb[0].mxu0
  %v1049 = vadd.f32 0.0, %v1048
  %v1050 = vpop.f32.mrb[0].mxu0
  %1051 = vmatprep.mubr.bf16.mxu0 0
  %1052 = vmatmul.mubr.bf16.gmra.mrb[0].mxu0 %v971
  %v1053 = vpop.f32.mrb[0].mxu0
  %v1054 = vadd.f32 0.0, %v1053
  %v1055 = vpop.f32.mrb[0].mxu0
  %v1056 = vpop.f32.mrb[0].mxu0
  %v1057 = vadd.f32 0.0, %v1056
  %v1058 = vpop.f32.mrb[0].mxu0
  %1059 = vmatprep.mubr.bf16.mxu0 0
  %1060 = vmatmul.mubr.bf16.gmra.mrb[0].mxu0 %v974
  %v1061 = vpop.f32.mrb[0].mxu0
  %v1062 = vadd.f32 0.0, %v1061
  %v1063 = vpop.f32.mrb[0].mxu0
  %v1064 = vpop.f32.mrb[0].mxu0
  %v1065 = vadd.f32 0.0, %v1064
  %v1066 = vpop.f32.mrb[0].mxu0
  %1067 = vmatprep.mubr.bf16.mxu0 0
  %1068 = vmatmul.mubr.bf16.gmra.mrb[0].mxu0 %v977
  %v1069 = vpop.f32.mrb[0].mxu0
  %v1070 = vadd.f32 0.0, %v1069
  %v1071 = vpop.f32.mrb[0].mxu0
  %v1072 = vpop.f32.mrb[0].mxu0
  %v1073 = vpop.f32.mrb[0].mxu0
  %1074 = vdwg.mxu0
  %v1075 = vpack.c.bf16 %v1017, %v1014
  %v1076 = vpack.c.bf16 %v1025, %v1022
  %v1077 = vpack.c.bf16 %v1033, %v1030
  %v1078 = vpack.c.bf16 %v1041, %v1038
  %v1079 = vpack.c.bf16 %v1049, %v1046
  %v1080 = vpack.c.bf16 %v1057, %v1054
  %v1081 = vpack.c.bf16 %v1065, %v1062
  %v1082 = vpack.c.bf16 %v1070, %v1070
  %s1083 = scalar_lea.vmem %s5, 16
  %v1084 = vld [vmem:[%s1083] sm:$0xf]
  %v1085 = vld [vmem:[%s1083 + $0x4] sm:$0xf]
  %v1086 = vld [vmem:[%s1083 + $0x8] sm:$0xf]
  %v1087 = vld [vmem:[%s1083 + $0xc] sm:$0x7]
  %v1092 = vunpack.c.l.b16 %v1084
  %v1093 = vunpack.c.l.b16 %v1085
  %v1094 = vunpack.c.l.b16 %v1086
  %v1095 = vunpack.c.l.b16 %v1087
  %v1096 = vpack.c.b16 %v1093, %v1092
  %v1097 = vpack.c.b16 %v1095, %v1094
  %vm1099 = vcmask 244736
  %v1101 = vsel %vm1099, %v1075, 0
  %v1104 = vsel %vm1099, %v1076, 0
  %v1107 = vsel %vm1099, %v1077, 0
  %v1110 = vsel %vm1099, %v1078, 0
  %v1113 = vsel %vm1099, %v1079, 0
  %v1116 = vsel %vm1099, %v1080, 0
  %v1119 = vsel %vm1099, %v1081, 0
  %v1122 = vsel %vm1099, %v1082, 0
  %vm1124 = vcmask 1046528
  %v1126 = vsel %vm1124, %v1097, 0
  %1128 = vmatprep.subr.bf16.mxu0 0
  %1129 = vmatpush1.bf16.msra.mxu0 %v1096
  %1130 = vmatprep.subr.bf16.mxu0 0
  %1131 = vmatpush1.bf16.msra.mxu0 %v1126
  %1132 = vmatprep.subr.bf16.mxu0 0
  %1133 = vmatpush1.bf16.msra.mxu0 0
  %1134 = vmatprep.subr.bf16.mxu0 0
  %1135 = vmatpush1.bf16.msra.mxu0 0
  %1136 = vmatprep.subr.bf16.mxu0 0
  %1137 = vmatpush1.bf16.msra.mxu0 0
  %1138 = vmatprep.subr.bf16.mxu0 0
  %1139 = vmatpush1.bf16.msra.mxu0 0
  %1140 = vmatprep.subr.bf16.mxu0 0
  %1141 = vmatpush1.bf16.msra.mxu0 0
  %1142 = vmatprep.subr.bf16.mxu0 0
  %1143 = vmatpush1.bf16.msra.mxu0 0
  %1144 = vmatprep.subr.bf16.mxu0 0
  %1145 = vmatpush1.bf16.msra.mxu0 0
  %1146 = vmatprep.subr.bf16.mxu0 0
  %1147 = vmatpush1.bf16.msra.mxu0 0
  %1148 = vmatprep.subr.bf16.mxu0 0
  %1149 = vmatpush1.bf16.msra.mxu0 0
  %1150 = vmatprep.subr.bf16.mxu0 0
  %1151 = vmatpush1.bf16.msra.mxu0 0
  %1152 = vmatprep.subr.bf16.mxu0 0
  %1153 = vmatpush1.bf16.msra.mxu0 0
  %1154 = vmatprep.subr.bf16.mxu0 0
  %1155 = vmatpush1.bf16.msra.mxu0 0
  %1156 = vmatprep.subr.bf16.mxu0 0
  %1157 = vmatpush1.bf16.msra.mxu0 0
  %1158 = vmatprep.subr.bf16.mxu0 0
  %1159 = vmatpush1.bf16.msra.mxu0 0
  %1160 = vmatprep.mubr.bf16.mxu0 0
  %1161 = vmatmul.mubr.bf16.gmra.mrb[0].mxu0 %v1101
  %v1162 = vpop.f32.mrb[0].mxu0
  %v1163 = vadd.f32 0.0, %v1162
  %v1164 = vpop.f32.mrb[0].mxu0
  %v1165 = vpop.f32.mrb[0].mxu0
  %v1166 = vadd.f32 0.0, %v1165
  %v1167 = vpop.f32.mrb[0].mxu0
  %1168 = vmatprep.mubr.bf16.mxu0 0
  %1169 = vmatmul.mubr.bf16.gmra.mrb[0].mxu0 %v1104
  %v1170 = vpop.f32.mrb[0].mxu0
  %v1171 = vadd.f32 0.0, %v1170
  %v1172 = vpop.f32.mrb[0].mxu0
  %v1173 = vpop.f32.mrb[0].mxu0
  %v1174 = vadd.f32 0.0, %v1173
  %v1175 = vpop.f32.mrb[0].mxu0
  %1176 = vmatprep.mubr.bf16.mxu0 0
  %1177 = vmatmul.mubr.bf16.gmra.mrb[0].mxu0 %v1107
  %v1178 = vpop.f32.mrb[0].mxu0
  %v1179 = vadd.f32 0.0, %v1178
  %v1180 = vpop.f32.mrb[0].mxu0
  %v1181 = vpop.f32.mrb[0].mxu0
  %v1182 = vadd.f32 0.0, %v1181
  %v1183 = vpop.f32.mrb[0].mxu0
  %1184 = vmatprep.mubr.bf16.mxu0 0
  %1185 = vmatmul.mubr.bf16.gmra.mrb[0].mxu0 %v1110
  %v1186 = vpop.f32.mrb[0].mxu0
  %v1187 = vadd.f32 0.0, %v1186
  %v1188 = vpop.f32.mrb[0].mxu0
  %v1189 = vpop.f32.mrb[0].mxu0
  %v1190 = vadd.f32 0.0, %v1189
  %v1191 = vpop.f32.mrb[0].mxu0
  %1192 = vmatprep.mubr.bf16.mxu0 0
  %1193 = vmatmul.mubr.bf16.gmra.mrb[0].mxu0 %v1113
  %v1194 = vpop.f32.mrb[0].mxu0
  %v1195 = vadd.f32 0.0, %v1194
  %v1196 = vpop.f32.mrb[0].mxu0
  %v1197 = vpop.f32.mrb[0].mxu0
  %v1198 = vadd.f32 0.0, %v1197
  %v1199 = vpop.f32.mrb[0].mxu0
  %1200 = vmatprep.mubr.bf16.mxu0 0
  %1201 = vmatmul.mubr.bf16.gmra.mrb[0].mxu0 %v1116
  %v1202 = vpop.f32.mrb[0].mxu0
  %v1203 = vadd.f32 0.0, %v1202
  %v1204 = vpop.f32.mrb[0].mxu0
  %v1205 = vpop.f32.mrb[0].mxu0
  %v1206 = vadd.f32 0.0, %v1205
  %v1207 = vpop.f32.mrb[0].mxu0
  %1208 = vmatprep.mubr.bf16.mxu0 0
  %1209 = vmatmul.mubr.bf16.gmra.mrb[0].mxu0 %v1119
  %v1210 = vpop.f32.mrb[0].mxu0
  %v1211 = vadd.f32 0.0, %v1210
  %v1212 = vpop.f32.mrb[0].mxu0
  %v1213 = vpop.f32.mrb[0].mxu0
  %v1214 = vadd.f32 0.0, %v1213
  %v1215 = vpop.f32.mrb[0].mxu0
  %1216 = vmatprep.mubr.bf16.mxu0 0
  %1217 = vmatmul.mubr.bf16.gmra.mrb[0].mxu0 %v1122
  %v1218 = vpop.f32.mrb[0].mxu0
  %v1219 = vadd.f32 0.0, %v1218
  %v1220 = vpop.f32.mrb[0].mxu0
  %v1221 = vpop.f32.mrb[0].mxu0
  %v1222 = vpop.f32.mrb[0].mxu0
  %1223 = vdwg.mxu0
  %v1228 = vunpack.c.l.b16 %v897
  %v1229 = vunpack.c.l.b16 %v898
  %v1230 = vunpack.c.l.b16 %v899
  %v1231 = vunpack.c.l.b16 %v900
  %v1232 = vpack.c.b16 %v1229, %v1228
  %v1233 = vpack.c.b16 %v1231, %v1230
  %v1236 = vsel %vm1099, %v889, 0
  %v1239 = vsel %vm1099, %v890, 0
  %v1242 = vsel %vm1099, %v891, 0
  %v1245 = vsel %vm1099, %v892, 0
  %v1248 = vsel %vm1099, %v893, 0
  %v1251 = vsel %vm1099, %v894, 0
  %v1254 = vsel %vm1099, %v895, 0
  %v1257 = vsel %vm1099, %v896, 0
  %v1260 = vsel %vm1124, %v1233, 0
  %1262 = vmatprep.subr.bf16.mxu0 0
  %1263 = vmatpush1.bf16.msra.mxu0 %v1232
  %1264 = vmatprep.subr.bf16.mxu0 0
  %1265 = vmatpush1.bf16.msra.mxu0 %v1260
  %1266 = vmatprep.subr.bf16.mxu0 0
  %1267 = vmatpush1.bf16.msra.mxu0 0
  %1268 = vmatprep.subr.bf16.mxu0 0
  %1269 = vmatpush1.bf16.msra.mxu0 0
  %1270 = vmatprep.subr.bf16.mxu0 0
  %1271 = vmatpush1.bf16.msra.mxu0 0
  %1272 = vmatprep.subr.bf16.mxu0 0
  %1273 = vmatpush1.bf16.msra.mxu0 0
  %1274 = vmatprep.subr.bf16.mxu0 0
  %1275 = vmatpush1.bf16.msra.mxu0 0
  %1276 = vmatprep.subr.bf16.mxu0 0
  %1277 = vmatpush1.bf16.msra.mxu0 0
  %1278 = vmatprep.subr.bf16.mxu0 0
  %1279 = vmatpush1.bf16.msra.mxu0 0
  %1280 = vmatprep.subr.bf16.mxu0 0
  %1281 = vmatpush1.bf16.msra.mxu0 0
  %1282 = vmatprep.subr.bf16.mxu0 0
  %1283 = vmatpush1.bf16.msra.mxu0 0
  %1284 = vmatprep.subr.bf16.mxu0 0
  %1285 = vmatpush1.bf16.msra.mxu0 0
  %1286 = vmatprep.subr.bf16.mxu0 0
  %1287 = vmatpush1.bf16.msra.mxu0 0
  %1288 = vmatprep.subr.bf16.mxu0 0
  %1289 = vmatpush1.bf16.msra.mxu0 0
  %1290 = vmatprep.subr.bf16.mxu0 0
  %1291 = vmatpush1.bf16.msra.mxu0 0
  %1292 = vmatprep.subr.bf16.mxu0 0
  %1293 = vmatpush1.bf16.msra.mxu0 0
  %1294 = vmatprep.mubr.bf16.mxu0 0
  %1295 = vmatmul.mubr.bf16.gmra.mrb[0].mxu0 %v1236
  %v1296 = vpop.f32.mrb[0].mxu0
  %v1297 = vadd.f32 %v1163, %v1296
  %v1298 = vpop.f32.mrb[0].mxu0
  %v1299 = vpop.f32.mrb[0].mxu0
  %v1300 = vadd.f32 %v1166, %v1299
  %v1301 = vpop.f32.mrb[0].mxu0
  %1302 = vmatprep.mubr.bf16.mxu0 0
  %1303 = vmatmul.mubr.bf16.gmra.mrb[0].mxu0 %v1239
  %v1304 = vpop.f32.mrb[0].mxu0
  %v1305 = vadd.f32 %v1171, %v1304
  %v1306 = vpop.f32.mrb[0].mxu0
  %v1307 = vpop.f32.mrb[0].mxu0
  %v1308 = vadd.f32 %v1174, %v1307
  %v1309 = vpop.f32.mrb[0].mxu0
  %1310 = vmatprep.mubr.bf16.mxu0 0
  %1311 = vmatmul.mubr.bf16.gmra.mrb[0].mxu0 %v1242
  %v1312 = vpop.f32.mrb[0].mxu0
  %v1313 = vadd.f32 %v1179, %v1312
  %v1314 = vpop.f32.mrb[0].mxu0
  %v1315 = vpop.f32.mrb[0].mxu0
  %v1316 = vadd.f32 %v1182, %v1315
  %v1317 = vpop.f32.mrb[0].mxu0
  %1318 = vmatprep.mubr.bf16.mxu0 0
  %1319 = vmatmul.mubr.bf16.gmra.mrb[0].mxu0 %v1245
  %v1320 = vpop.f32.mrb[0].mxu0
  %v1321 = vadd.f32 %v1187, %v1320
  %v1322 = vpop.f32.mrb[0].mxu0
  %v1323 = vpop.f32.mrb[0].mxu0
  %v1324 = vadd.f32 %v1190, %v1323
  %v1325 = vpop.f32.mrb[0].mxu0
  %1326 = vmatprep.mubr.bf16.mxu0 0
  %1327 = vmatmul.mubr.bf16.gmra.mrb[0].mxu0 %v1248
  %v1328 = vpop.f32.mrb[0].mxu0
  %v1329 = vadd.f32 %v1195, %v1328
  %v1330 = vpop.f32.mrb[0].mxu0
  %v1331 = vpop.f32.mrb[0].mxu0
  %v1332 = vadd.f32 %v1198, %v1331
  %v1333 = vpop.f32.mrb[0].mxu0
  %1334 = vmatprep.mubr.bf16.mxu0 0
  %1335 = vmatmul.mubr.bf16.gmra.mrb[0].mxu0 %v1251
  %v1336 = vpop.f32.mrb[0].mxu0
  %v1337 = vadd.f32 %v1203, %v1336
  %v1338 = vpop.f32.mrb[0].mxu0
  %v1339 = vpop.f32.mrb[0].mxu0
  %v1340 = vadd.f32 %v1206, %v1339
  %v1341 = vpop.f32.mrb[0].mxu0
  %1342 = vmatprep.mubr.bf16.mxu0 0
  %1343 = vmatmul.mubr.bf16.gmra.mrb[0].mxu0 %v1254
  %v1344 = vpop.f32.mrb[0].mxu0
  %v1345 = vadd.f32 %v1211, %v1344
  %v1346 = vpop.f32.mrb[0].mxu0
  %v1347 = vpop.f32.mrb[0].mxu0
  %v1348 = vadd.f32 %v1214, %v1347
  %v1349 = vpop.f32.mrb[0].mxu0
  %1350 = vmatprep.mubr.bf16.mxu0 0
  %1351 = vmatmul.mubr.bf16.gmra.mrb[0].mxu0 %v1257
  %v1352 = vpop.f32.mrb[0].mxu0
  %v1353 = vadd.f32 %v1219, %v1352
  %v1354 = vpop.f32.mrb[0].mxu0
  %v1355 = vpop.f32.mrb[0].mxu0
  %v1356 = vpop.f32.mrb[0].mxu0
  %1357 = vdwg.mxu0
  %s1358 = scalar_lea.vmem %s4, 120
  %v1359 = vld [vmem:[%s1358] sm:$0xf]
  %v1360 = vld [vmem:[%s1358 + $0x4] sm:$0xf]
  %v1361 = vld [vmem:[%s1358 + $0x8] sm:$0xf]
  %v1362 = vld [vmem:[%s1358 + $0xc] sm:$0xf]
  %v1363 = vld [vmem:[%s1358 + $0x10] sm:$0xf]
  %v1364 = vld [vmem:[%s1358 + $0x14] sm:$0xf]
  %v1365 = vld [vmem:[%s1358 + $0x18] sm:$0xf]
  %v1366 = vld [vmem:[%s1358 + $0x1c] sm:$0xf]
  %v1367 = vld [vmem:[%s1358 + $0x20] sm:$0xf]
  %v1368 = vld [vmem:[%s1358 + $0x24] sm:$0xf]
  %v1369 = vld [vmem:[%s1358 + $0x28] sm:$0xf]
  %v1370 = vld [vmem:[%s1358 + $0x2c] sm:$0xf]
  %v1371 = vld [vmem:[%s1358 + $0x30] sm:$0xf]
  %v1372 = vld [vmem:[%s1358 + $0x34] sm:$0xf]
  %v1373 = vld [vmem:[%s1358 + $0x38] sm:$0x3]
  %v1389 = vunpack.c.l.b16 %v1359
  %v1390 = vunpack.c.l.b16 %v1360
  %v1391 = vunpack.c.l.b16 %v1361
  %v1392 = vunpack.c.l.b16 %v1362
  %v1393 = vunpack.c.l.b16 %v1363
  %v1394 = vunpack.c.l.b16 %v1364
  %v1395 = vunpack.c.l.b16 %v1365
  %v1396 = vunpack.c.l.b16 %v1366
  %v1397 = vunpack.c.l.b16 %v1367
  %v1398 = vunpack.c.l.b16 %v1368
  %v1399 = vunpack.c.l.b16 %v1369
  %v1400 = vunpack.c.l.b16 %v1370
  %v1401 = vunpack.c.l.b16 %v1371
  %v1402 = vunpack.c.l.b16 %v1372
  %v1403 = vunpack.c.l.b16 %v1373
  %v1404 = vpack.c.b16 %v1390, %v1389
  %v1405 = vpack.c.b16 %v1392, %v1391
  %v1406 = vpack.c.b16 %v1394, %v1393
  %v1407 = vpack.c.b16 %v1396, %v1395
  %v1408 = vpack.c.b16 %v1398, %v1397
  %v1409 = vpack.c.b16 %v1400, %v1399
  %v1410 = vpack.c.b16 %v1402, %v1401
  %v1411 = vpack.c.b16 %v1403, %v1403
  %v1413 = vsel %vm764, %v1404, 0
  %v1416 = vsel %vm764, %v1405, 0
  %v1419 = vsel %vm764, %v1406, 0
  %v1422 = vsel %vm764, %v1407, 0
  %v1425 = vsel %vm764, %v1408, 0
  %v1428 = vsel %vm764, %v1409, 0
  %v1431 = vsel %vm764, %v1410, 0
  %v1434 = vsel %vm764, %v1411, 0
  %1436 = vmatprep.subr.bf16.mxu0 0
  %1437 = vmatpush1.bf16.msra.mxu0 %v707
  %1438 = vmatprep.subr.bf16.mxu0 0
  %1439 = vmatpush1.bf16.msra.mxu0 %v708
  %1440 = vmatprep.subr.bf16.mxu0 0
  %1441 = vmatpush1.bf16.msra.mxu0 %v709
  %1442 = vmatprep.subr.bf16.mxu0 0
  %1443 = vmatpush1.bf16.msra.mxu0 %v791
  %1444 = vmatprep.subr.bf16.mxu0 0
  %1445 = vmatpush1.bf16.msra.mxu0 0
  %1446 = vmatprep.subr.bf16.mxu0 0
  %1447 = vmatpush1.bf16.msra.mxu0 0
  %1448 = vmatprep.subr.bf16.mxu0 0
  %1449 = vmatpush1.bf16.msra.mxu0 0
  %1450 = vmatprep.subr.bf16.mxu0 0
  %1451 = vmatpush1.bf16.msra.mxu0 0
  %1452 = vmatprep.subr.bf16.mxu0 0
  %1453 = vmatpush1.bf16.msra.mxu0 0
  %1454 = vmatprep.subr.bf16.mxu0 0
  %1455 = vmatpush1.bf16.msra.mxu0 0
  %1456 = vmatprep.subr.bf16.mxu0 0
  %1457 = vmatpush1.bf16.msra.mxu0 0
  %1458 = vmatprep.subr.bf16.mxu0 0
  %1459 = vmatpush1.bf16.msra.mxu0 0
  %1460 = vmatprep.subr.bf16.mxu0 0
  %1461 = vmatpush1.bf16.msra.mxu0 0
  %1462 = vmatprep.subr.bf16.mxu0 0
  %1463 = vmatpush1.bf16.msra.mxu0 0
  %1464 = vmatprep.subr.bf16.mxu0 0
  %1465 = vmatpush1.bf16.msra.mxu0 0
  %1466 = vmatprep.subr.bf16.mxu0 0
  %1467 = vmatpush1.bf16.msra.mxu0 0
  %1468 = vmatprep.mubr.bf16.mxu0 0
  %1469 = vmatmul.mubr.bf16.gmra.mrb[0].mxu0 %v1413
  %v1470 = vpop.f32.mrb[0].mxu0
  %v1471 = vadd.f32 0.0, %v1470
  %v1472 = vpop.f32.mrb[0].mxu0
  %v1473 = vpop.f32.mrb[0].mxu0
  %v1474 = vadd.f32 0.0, %v1473
  %v1475 = vpop.f32.mrb[0].mxu0
  %1476 = vmatprep.mubr.bf16.mxu0 0
  %1477 = vmatmul.mubr.bf16.gmra.mrb[0].mxu0 %v1416
  %v1478 = vpop.f32.mrb[0].mxu0
  %v1479 = vadd.f32 0.0, %v1478
  %v1480 = vpop.f32.mrb[0].mxu0
  %v1481 = vpop.f32.mrb[0].mxu0
  %v1482 = vadd.f32 0.0, %v1481
  %v1483 = vpop.f32.mrb[0].mxu0
  %1484 = vmatprep.mubr.bf16.mxu0 0
  %1485 = vmatmul.mubr.bf16.gmra.mrb[0].mxu0 %v1419
  %v1486 = vpop.f32.mrb[0].mxu0
  %v1487 = vadd.f32 0.0, %v1486
  %v1488 = vpop.f32.mrb[0].mxu0
  %v1489 = vpop.f32.mrb[0].mxu0
  %v1490 = vadd.f32 0.0, %v1489
  %v1491 = vpop.f32.mrb[0].mxu0
  %1492 = vmatprep.mubr.bf16.mxu0 0
  %1493 = vmatmul.mubr.bf16.gmra.mrb[0].mxu0 %v1422
  %v1494 = vpop.f32.mrb[0].mxu0
  %v1495 = vadd.f32 0.0, %v1494
  %v1496 = vpop.f32.mrb[0].mxu0
  %v1497 = vpop.f32.mrb[0].mxu0
  %v1498 = vadd.f32 0.0, %v1497
  %v1499 = vpop.f32.mrb[0].mxu0
  %1500 = vmatprep.mubr.bf16.mxu0 0
  %1501 = vmatmul.mubr.bf16.gmra.mrb[0].mxu0 %v1425
  %v1502 = vpop.f32.mrb[0].mxu0
  %v1503 = vadd.f32 0.0, %v1502
  %v1504 = vpop.f32.mrb[0].mxu0
  %v1505 = vpop.f32.mrb[0].mxu0
  %v1506 = vadd.f32 0.0, %v1505
  %v1507 = vpop.f32.mrb[0].mxu0
  %1508 = vmatprep.mubr.bf16.mxu0 0
  %1509 = vmatmul.mubr.bf16.gmra.mrb[0].mxu0 %v1428
  %v1510 = vpop.f32.mrb[0].mxu0
  %v1511 = vadd.f32 0.0, %v1510
  %v1512 = vpop.f32.mrb[0].mxu0
  %v1513 = vpop.f32.mrb[0].mxu0
  %v1514 = vadd.f32 0.0, %v1513
  %v1515 = vpop.f32.mrb[0].mxu0
  %1516 = vmatprep.mubr.bf16.mxu0 0
  %1517 = vmatmul.mubr.bf16.gmra.mrb[0].mxu0 %v1431
  %v1518 = vpop.f32.mrb[0].mxu0
  %v1519 = vadd.f32 0.0, %v1518
  %v1520 = vpop.f32.mrb[0].mxu0
  %v1521 = vpop.f32.mrb[0].mxu0
  %v1522 = vadd.f32 0.0, %v1521
  %v1523 = vpop.f32.mrb[0].mxu0
  %1524 = vmatprep.mubr.bf16.mxu0 0
  %1525 = vmatmul.mubr.bf16.gmra.mrb[0].mxu0 %v1434
  %v1526 = vpop.f32.mrb[0].mxu0
  %v1527 = vadd.f32 0.0, %v1526
  %v1528 = vpop.f32.mrb[0].mxu0
  %v1529 = vpop.f32.mrb[0].mxu0
  %v1530 = vpop.f32.mrb[0].mxu0
  %1531 = vdwg.mxu0
  %v1532 = vpack.c.bf16 %v1474, %v1471
  %v1533 = vpack.c.bf16 %v1482, %v1479
  %v1534 = vpack.c.bf16 %v1490, %v1487
  %v1535 = vpack.c.bf16 %v1498, %v1495
  %v1536 = vpack.c.bf16 %v1506, %v1503
  %v1537 = vpack.c.bf16 %v1514, %v1511
  %v1538 = vpack.c.bf16 %v1522, %v1519
  %v1539 = vpack.c.bf16 %v1527, %v1527
  %s1540 = scalar_lea.vmem %s5, 32
  %v1541 = vld [vmem:[%s1540] sm:$0xf]
  %v1542 = vld [vmem:[%s1540 + $0x4] sm:$0xf]
  %v1543 = vld [vmem:[%s1540 + $0x8] sm:$0xf]
  %v1544 = vld [vmem:[%s1540 + $0xc] sm:$0x7]
  %v1549 = vunpack.c.l.b16 %v1541
  %v1550 = vunpack.c.l.b16 %v1542
  %v1551 = vunpack.c.l.b16 %v1543
  %v1552 = vunpack.c.l.b16 %v1544
  %v1553 = vpack.c.b16 %v1550, %v1549
  %v1554 = vpack.c.b16 %v1552, %v1551
  %v1557 = vsel %vm1099, %v1532, 0
  %v1560 = vsel %vm1099, %v1533, 0
  %v1563 = vsel %vm1099, %v1534, 0
  %v1566 = vsel %vm1099, %v1535, 0
  %v1569 = vsel %vm1099, %v1536, 0
  %v1572 = vsel %vm1099, %v1537, 0
  %v1575 = vsel %vm1099, %v1538, 0
  %v1578 = vsel %vm1099, %v1539, 0
  %v1581 = vsel %vm1124, %v1554, 0
  %1583 = vmatprep.subr.bf16.mxu0 0
  %1584 = vmatpush1.bf16.msra.mxu0 %v1553
  %1585 = vmatprep.subr.bf16.mxu0 0
  %1586 = vmatpush1.bf16.msra.mxu0 %v1581
  %1587 = vmatprep.subr.bf16.mxu0 0
  %1588 = vmatpush1.bf16.msra.mxu0 0
  %1589 = vmatprep.subr.bf16.mxu0 0
  %1590 = vmatpush1.bf16.msra.mxu0 0
  %1591 = vmatprep.subr.bf16.mxu0 0
  %1592 = vmatpush1.bf16.msra.mxu0 0
  %1593 = vmatprep.subr.bf16.mxu0 0
  %1594 = vmatpush1.bf16.msra.mxu0 0
  %1595 = vmatprep.subr.bf16.mxu0 0
  %1596 = vmatpush1.bf16.msra.mxu0 0
  %1597 = vmatprep.subr.bf16.mxu0 0
  %1598 = vmatpush1.bf16.msra.mxu0 0
  %1599 = vmatprep.subr.bf16.mxu0 0
  %1600 = vmatpush1.bf16.msra.mxu0 0
  %1601 = vmatprep.subr.bf16.mxu0 0
  %1602 = vmatpush1.bf16.msra.mxu0 0
  %1603 = vmatprep.subr.bf16.mxu0 0
  %1604 = vmatpush1.bf16.msra.mxu0 0
  %1605 = vmatprep.subr.bf16.mxu0 0
  %1606 = vmatpush1.bf16.msra.mxu0 0
  %1607 = vmatprep.subr.bf16.mxu0 0
  %1608 = vmatpush1.bf16.msra.mxu0 0
  %1609 = vmatprep.subr.bf16.mxu0 0
  %1610 = vmatpush1.bf16.msra.mxu0 0
  %1611 = vmatprep.subr.bf16.mxu0 0
  %1612 = vmatpush1.bf16.msra.mxu0 0
  %1613 = vmatprep.subr.bf16.mxu0 0
  %1614 = vmatpush1.bf16.msra.mxu0 0
  %1615 = vmatprep.mubr.bf16.mxu0 0
  %1616 = vmatmul.mubr.bf16.gmra.mrb[0].mxu0 %v1557
  %v1617 = vpop.f32.mrb[0].mxu0
  %v1618 = vadd.f32 0.0, %v1617
  %v1619 = vpop.f32.mrb[0].mxu0
  %v1620 = vpop.f32.mrb[0].mxu0
  %v1621 = vadd.f32 0.0, %v1620
  %v1622 = vpop.f32.mrb[0].mxu0
  %1623 = vmatprep.mubr.bf16.mxu0 0
  %1624 = vmatmul.mubr.bf16.gmra.mrb[0].mxu0 %v1560
  %v1625 = vpop.f32.mrb[0].mxu0
  %v1626 = vadd.f32 0.0, %v1625
  %v1627 = vpop.f32.mrb[0].mxu0
  %v1628 = vpop.f32.mrb[0].mxu0
  %v1629 = vadd.f32 0.0, %v1628
  %v1630 = vpop.f32.mrb[0].mxu0
  %1631 = vmatprep.mubr.bf16.mxu0 0
  %1632 = vmatmul.mubr.bf16.gmra.mrb[0].mxu0 %v1563
  %v1633 = vpop.f32.mrb[0].mxu0
  %v1634 = vadd.f32 0.0, %v1633
  %v1635 = vpop.f32.mrb[0].mxu0
  %v1636 = vpop.f32.mrb[0].mxu0
  %v1637 = vadd.f32 0.0, %v1636
  %v1638 = vpop.f32.mrb[0].mxu0
  %1639 = vmatprep.mubr.bf16.mxu0 0
  %1640 = vmatmul.mubr.bf16.gmra.mrb[0].mxu0 %v1566
  %v1641 = vpop.f32.mrb[0].mxu0
  %v1642 = vadd.f32 0.0, %v1641
  %v1643 = vpop.f32.mrb[0].mxu0
  %v1644 = vpop.f32.mrb[0].mxu0
  %v1645 = vadd.f32 0.0, %v1644
  %v1646 = vpop.f32.mrb[0].mxu0
  %1647 = vmatprep.mubr.bf16.mxu0 0
  %1648 = vmatmul.mubr.bf16.gmra.mrb[0].mxu0 %v1569
  %v1649 = vpop.f32.mrb[0].mxu0
  %v1650 = vadd.f32 0.0, %v1649
  %v1651 = vpop.f32.mrb[0].mxu0
  %v1652 = vpop.f32.mrb[0].mxu0
  %v1653 = vadd.f32 0.0, %v1652
  %v1654 = vpop.f32.mrb[0].mxu0
  %1655 = vmatprep.mubr.bf16.mxu0 0
  %1656 = vmatmul.mubr.bf16.gmra.mrb[0].mxu0 %v1572
  %v1657 = vpop.f32.mrb[0].mxu0
  %v1658 = vadd.f32 0.0, %v1657
  %v1659 = vpop.f32.mrb[0].mxu0
  %v1660 = vpop.f32.mrb[0].mxu0
  %v1661 = vadd.f32 0.0, %v1660
  %v1662 = vpop.f32.mrb[0].mxu0
  %1663 = vmatprep.mubr.bf16.mxu0 0
  %1664 = vmatmul.mubr.bf16.gmra.mrb[0].mxu0 %v1575
  %v1665 = vpop.f32.mrb[0].mxu0
  %v1666 = vadd.f32 0.0, %v1665
  %v1667 = vpop.f32.mrb[0].mxu0
  %v1668 = vpop.f32.mrb[0].mxu0
  %v1669 = vadd.f32 0.0, %v1668
  %v1670 = vpop.f32.mrb[0].mxu0
  %1671 = vmatprep.mubr.bf16.mxu0 0
  %1672 = vmatmul.mubr.bf16.gmra.mrb[0].mxu0 %v1578
  %v1673 = vpop.f32.mrb[0].mxu0
  %v1674 = vadd.f32 0.0, %v1673
  %v1675 = vpop.f32.mrb[0].mxu0
  %v1676 = vpop.f32.mrb[0].mxu0
  %v1677 = vpop.f32.mrb[0].mxu0
  %1678 = vdwg.mxu0
  %v1679 = vadd.f32 %v1297, %v1618
  %v1680 = vadd.f32 %v1300, %v1621
  %v1681 = vadd.f32 %v1305, %v1626
  %v1682 = vadd.f32 %v1308, %v1629
  %v1683 = vadd.f32 %v1313, %v1634
  %v1684 = vadd.f32 %v1316, %v1637
  %v1685 = vadd.f32 %v1321, %v1642
  %v1686 = vadd.f32 %v1324, %v1645
  %v1687 = vadd.f32 %v1329, %v1650
  %v1688 = vadd.f32 %v1332, %v1653
  %v1689 = vadd.f32 %v1337, %v1658
  %v1690 = vadd.f32 %v1340, %v1661
  %v1691 = vadd.f32 %v1345, %v1666
  %v1692 = vadd.f32 %v1348, %v1669
  %v1693 = vadd.f32 %v1353, %v1674
  %v1694 = vld [vmem:[%s6] sm:$0xff]
  %v1695 = vld [vmem:[%s6 + $0x8] sm:$0xff]
  %v1696 = vld [vmem:[%s6 + $0x10] sm:$0xff]
  %v1697 = vld [vmem:[%s6 + $0x18] sm:$0xff]
  %v1698 = vld [vmem:[%s6 + $0x20] sm:$0xff]
  %v1699 = vld [vmem:[%s6 + $0x28] sm:$0xff]
  %v1700 = vld [vmem:[%s6 + $0x30] sm:$0xff]
  %v1701 = vld [vmem:[%s6 + $0x38] sm:$0xff]
  %v1702 = vld [vmem:[%s6 + $0x40] sm:$0xff]
  %v1703 = vld [vmem:[%s6 + $0x48] sm:$0xff]
  %v1704 = vld [vmem:[%s6 + $0x50] sm:$0xff]
  %v1705 = vld [vmem:[%s6 + $0x58] sm:$0xff]
  %v1706 = vld [vmem:[%s6 + $0x60] sm:$0xff]
  %v1707 = vld [vmem:[%s6 + $0x68] sm:$0xff]
  %v1708 = vld [vmem:[%s6 + $0x70] sm:$0xf]
  %1710 = vset.pattern.permute.xlu0 0
  %1711 = vperm.xlu0 %1710, %v1694
  %v1712 = vpop.permute.xlu0 %1711
  %1715 = vset.pattern.permute.xlu0 0
  %1716 = vperm.xlu0 %1715, %v1695
  %v1717 = vpop.permute.xlu0 %1716
  %1720 = vset.pattern.permute.xlu0 0
  %1721 = vperm.xlu0 %1720, %v1696
  %v1722 = vpop.permute.xlu0 %1721
  %1725 = vset.pattern.permute.xlu0 0
  %1726 = vperm.xlu0 %1725, %v1697
  %v1727 = vpop.permute.xlu0 %1726
  %1730 = vset.pattern.permute.xlu0 0
  %1731 = vperm.xlu0 %1730, %v1698
  %v1732 = vpop.permute.xlu0 %1731
  %1735 = vset.pattern.permute.xlu0 0
  %1736 = vperm.xlu0 %1735, %v1699
  %v1737 = vpop.permute.xlu0 %1736
  %1740 = vset.pattern.permute.xlu0 0
  %1741 = vperm.xlu0 %1740, %v1700
  %v1742 = vpop.permute.xlu0 %1741
  %1745 = vset.pattern.permute.xlu0 0
  %1746 = vperm.xlu0 %1745, %v1701
  %v1747 = vpop.permute.xlu0 %1746
  %1750 = vset.pattern.permute.xlu0 0
  %1751 = vperm.xlu0 %1750, %v1702
  %v1752 = vpop.permute.xlu0 %1751
  %1755 = vset.pattern.permute.xlu0 0
  %1756 = vperm.xlu0 %1755, %v1703
  %v1757 = vpop.permute.xlu0 %1756
  %1760 = vset.pattern.permute.xlu0 0
  %1761 = vperm.xlu0 %1760, %v1704
  %v1762 = vpop.permute.xlu0 %1761
  %1765 = vset.pattern.permute.xlu0 0
  %1766 = vperm.xlu0 %1765, %v1705
  %v1767 = vpop.permute.xlu0 %1766
  %1770 = vset.pattern.permute.xlu0 0
  %1771 = vperm.xlu0 %1770, %v1706
  %v1772 = vpop.permute.xlu0 %1771
  %1775 = vset.pattern.permute.xlu0 0
  %1776 = vperm.xlu0 %1775, %v1707
  %v1777 = vpop.permute.xlu0 %1776
  %1780 = vset.pattern.permute.xlu0 0
  %1781 = vperm.xlu0 %1780, %v1708
  %v1782 = vpop.permute.xlu0 %1781
  %v1784 = vadd.f32 %v1679, %v1712
  %v1785 = vadd.f32 %v1680, %v1717
  %v1786 = vadd.f32 %v1681, %v1722
  %v1787 = vadd.f32 %v1682, %v1727
  %v1788 = vadd.f32 %v1683, %v1732
  %v1789 = vadd.f32 %v1684, %v1737
  %v1790 = vadd.f32 %v1685, %v1742
  %v1791 = vadd.f32 %v1686, %v1747
  %v1792 = vadd.f32 %v1687, %v1752
  %v1793 = vadd.f32 %v1688, %v1757
  %v1794 = vadd.f32 %v1689, %v1762
  %v1795 = vadd.f32 %v1690, %v1767
  %v1796 = vadd.f32 %v1691, %v1772
  %v1797 = vadd.f32 %v1692, %v1777
  %v1798 = vadd.f32 %v1693, %v1782
  %v1799 = vmax.f32 %v1784, 0.0
  %v1800 = vmax.f32 %v1785, 0.0
  %v1801 = vmax.f32 %v1786, 0.0
  %v1802 = vmax.f32 %v1787, 0.0
  %v1803 = vmax.f32 %v1788, 0.0
  %v1804 = vmax.f32 %v1789, 0.0
  %v1805 = vmax.f32 %v1790, 0.0
  %v1806 = vmax.f32 %v1791, 0.0
  %v1807 = vmax.f32 %v1792, 0.0
  %v1808 = vmax.f32 %v1793, 0.0
  %v1809 = vmax.f32 %v1794, 0.0
  %v1810 = vmax.f32 %v1795, 0.0
  %v1811 = vmax.f32 %v1796, 0.0
  %v1812 = vmax.f32 %v1797, 0.0
  %v1813 = vmax.f32 %v1798, 0.0
  %v1814 = vpack.c.bf16 %v1800, %v1799
  %v1815 = vpack.c.bf16 %v1802, %v1801
  %v1816 = vpack.c.bf16 %v1804, %v1803
  %v1817 = vpack.c.bf16 %v1806, %v1805
  %v1818 = vpack.c.bf16 %v1808, %v1807
  %v1819 = vpack.c.bf16 %v1810, %v1809
  %v1820 = vpack.c.bf16 %v1812, %v1811
  %v1821 = vpack.c.bf16 %v1813, %v1813
  %v1822 = vld [vmem:[%s7] sm:$0xf]
  %v1823 = vld [vmem:[%s7 + $0x4] sm:$0xf]
  %v1824 = vld [vmem:[%s7 + $0x8] sm:$0xf]
  %v1825 = vld [vmem:[%s7 + $0xc] sm:$0xf]
  %v1826 = vld [vmem:[%s7 + $0x10] sm:$0xf]
  %v1827 = vld [vmem:[%s7 + $0x14] sm:$0xf]
  %v1828 = vld [vmem:[%s7 + $0x18] sm:$0xf]
  %v1829 = vld [vmem:[%s7 + $0x1c] sm:$0xf]
  %v1830 = vld [vmem:[%s7 + $0x20] sm:$0xf]
  %v1831 = vld [vmem:[%s7 + $0x24] sm:$0xf]
  %v1832 = vld [vmem:[%s7 + $0x28] sm:$0xf]
  %v1833 = vld [vmem:[%s7 + $0x2c] sm:$0xf]
  %v1834 = vld [vmem:[%s7 + $0x30] sm:$0xf]
  %v1835 = vld [vmem:[%s7 + $0x34] sm:$0xf]
  %v1836 = vld [vmem:[%s7 + $0x38] sm:$0xf]
  %v1837 = vld [vmem:[%s7 + $0x3c] sm:$0xf]
  %v1838 = vld [vmem:[%s7 + $0x40] sm:$0xf]
  %v1839 = vld [vmem:[%s7 + $0x44] sm:$0xf]
  %v1840 = vld [vmem:[%s7 + $0x48] sm:$0xf]
  %v1841 = vld [vmem:[%s7 + $0x4c] sm:$0xf]
  %v1842 = vld [vmem:[%s7 + $0x50] sm:$0xf]
  %v1843 = vld [vmem:[%s7 + $0x54] sm:$0x3]
  %v1866 = vunpack.c.l.b16 %v1822
  %v1867 = vunpack.c.l.b16 %v1823
  %v1868 = vunpack.c.l.b16 %v1824
  %v1869 = vunpack.c.l.b16 %v1825
  %v1870 = vunpack.c.l.b16 %v1826
  %v1871 = vunpack.c.l.b16 %v1827
  %v1872 = vunpack.c.l.b16 %v1828
  %v1873 = vunpack.c.l.b16 %v1829
  %v1874 = vunpack.c.l.b16 %v1830
  %v1875 = vunpack.c.l.b16 %v1831
  %v1876 = vunpack.c.l.b16 %v1832
  %v1877 = vunpack.c.l.b16 %v1833
  %v1878 = vunpack.c.l.b16 %v1834
  %v1879 = vunpack.c.l.b16 %v1835
  %v1880 = vunpack.c.l.b16 %v1836
  %v1881 = vunpack.c.l.b16 %v1837
  %v1882 = vunpack.c.l.b16 %v1838
  %v1883 = vunpack.c.l.b16 %v1839
  %v1884 = vunpack.c.l.b16 %v1840
  %v1885 = vunpack.c.l.b16 %v1841
  %v1886 = vunpack.c.l.b16 %v1842
  %v1887 = vunpack.c.l.b16 %v1843
  %v1888 = vpack.c.b16 %v1867, %v1866
  %v1889 = vpack.c.b16 %v1869, %v1868
  %v1890 = vpack.c.b16 %v1871, %v1870
  %v1891 = vpack.c.b16 %v1873, %v1872
  %v1892 = vpack.c.b16 %v1875, %v1874
  %v1893 = vpack.c.b16 %v1877, %v1876
  %v1894 = vpack.c.b16 %v1879, %v1878
  %v1895 = vpack.c.b16 %v1881, %v1880
  %v1896 = vpack.c.b16 %v1883, %v1882
  %v1897 = vpack.c.b16 %v1885, %v1884
  %v1898 = vpack.c.b16 %v1887, %v1886
  %vm1899 = vcmask 949248
  %v1901 = vsel %vm1899, %v1888, 0
  %v1904 = vsel %vm1899, %v1889, 0
  %v1907 = vsel %vm1899, %v1890, 0
  %v1910 = vsel %vm1899, %v1891, 0
  %v1913 = vsel %vm1899, %v1892, 0
  %v1916 = vsel %vm1899, %v1893, 0
  %v1919 = vsel %vm1899, %v1894, 0
  %v1922 = vsel %vm1899, %v1895, 0
  %v1925 = vsel %vm1899, %v1896, 0
  %v1928 = vsel %vm1899, %v1897, 0
  %v1931 = vsel %vm1899, %v1898, 0
  %vm1933 = vcmask 1041408
  %v1935 = vsel %vm1933, %v1821, 0
  %1937 = vmatprep.subr.bf16.mxu0 0
  %1938 = vmatpush1.bf16.msra.mxu0 %v1814
  %1939 = vmatprep.subr.bf16.mxu0 0
  %1940 = vmatpush1.bf16.msra.mxu0 %v1815
  %1941 = vmatprep.subr.bf16.mxu0 0
  %1942 = vmatpush1.bf16.msra.mxu0 %v1816
  %1943 = vmatprep.subr.bf16.mxu0 0
  %1944 = vmatpush1.bf16.msra.mxu0 %v1817
  %1945 = vmatprep.subr.bf16.mxu0 0
  %1946 = vmatpush1.bf16.msra.mxu0 %v1818
  %1947 = vmatprep.subr.bf16.mxu0 0
  %1948 = vmatpush1.bf16.msra.mxu0 %v1819
  %1949 = vmatprep.subr.bf16.mxu0 0
  %1950 = vmatpush1.bf16.msra.mxu0 %v1820
  %1951 = vmatprep.subr.bf16.mxu0 0
  %1952 = vmatpush1.bf16.msra.mxu0 %v1935
  %1953 = vmatprep.subr.bf16.mxu0 0
  %1954 = vmatpush1.bf16.msra.mxu0 0
  %1955 = vmatprep.subr.bf16.mxu0 0
  %1956 = vmatpush1.bf16.msra.mxu0 0
  %1957 = vmatprep.subr.bf16.mxu0 0
  %1958 = vmatpush1.bf16.msra.mxu0 0
  %1959 = vmatprep.subr.bf16.mxu0 0
  %1960 = vmatpush1.bf16.msra.mxu0 0
  %1961 = vmatprep.subr.bf16.mxu0 0
  %1962 = vmatpush1.bf16.msra.mxu0 0
  %1963 = vmatprep.subr.bf16.mxu0 0
  %1964 = vmatpush1.bf16.msra.mxu0 0
  %1965 = vmatprep.subr.bf16.mxu0 0
  %1966 = vmatpush1.bf16.msra.mxu0 0
  %1967 = vmatprep.subr.bf16.mxu0 0
  %1968 = vmatpush1.bf16.msra.mxu0 0
  %1969 = vmatprep.mubr.bf16.mxu0 0
  %1970 = vmatmul.mubr.bf16.gmra.mrb[0].mxu0 %v1901
  %v1971 = vpop.f32.mrb[0].mxu0
  %v1972 = vadd.f32 0.0, %v1971
  %v1973 = vpop.f32.mrb[0].mxu0
  %v1974 = vpop.f32.mrb[0].mxu0
  %v1975 = vadd.f32 0.0, %v1974
  %v1976 = vpop.f32.mrb[0].mxu0
  %1977 = vmatprep.mubr.bf16.mxu0 0
  %1978 = vmatmul.mubr.bf16.gmra.mrb[0].mxu0 %v1904
  %v1979 = vpop.f32.mrb[0].mxu0
  %v1980 = vadd.f32 0.0, %v1979
  %v1981 = vpop.f32.mrb[0].mxu0
  %v1982 = vpop.f32.mrb[0].mxu0
  %v1983 = vadd.f32 0.0, %v1982
  %v1984 = vpop.f32.mrb[0].mxu0
  %1985 = vmatprep.mubr.bf16.mxu0 0
  %1986 = vmatmul.mubr.bf16.gmra.mrb[0].mxu0 %v1907
  %v1987 = vpop.f32.mrb[0].mxu0
  %v1988 = vadd.f32 0.0, %v1987
  %v1989 = vpop.f32.mrb[0].mxu0
  %v1990 = vpop.f32.mrb[0].mxu0
  %v1991 = vadd.f32 0.0, %v1990
  %v1992 = vpop.f32.mrb[0].mxu0
  %1993 = vmatprep.mubr.bf16.mxu0 0
  %1994 = vmatmul.mubr.bf16.gmra.mrb[0].mxu0 %v1910
  %v1995 = vpop.f32.mrb[0].mxu0
  %v1996 = vadd.f32 0.0, %v1995
  %v1997 = vpop.f32.mrb[0].mxu0
  %v1998 = vpop.f32.mrb[0].mxu0
  %v1999 = vadd.f32 0.0, %v1998
  %v2000 = vpop.f32.mrb[0].mxu0
  %2001 = vmatprep.mubr.bf16.mxu0 0
  %2002 = vmatmul.mubr.bf16.gmra.mrb[0].mxu0 %v1913
  %v2003 = vpop.f32.mrb[0].mxu0
  %v2004 = vadd.f32 0.0, %v2003
  %v2005 = vpop.f32.mrb[0].mxu0
  %v2006 = vpop.f32.mrb[0].mxu0
  %v2007 = vadd.f32 0.0, %v2006
  %v2008 = vpop.f32.mrb[0].mxu0
  %2009 = vmatprep.mubr.bf16.mxu0 0
  %2010 = vmatmul.mubr.bf16.gmra.mrb[0].mxu0 %v1916
  %v2011 = vpop.f32.mrb[0].mxu0
  %v2012 = vadd.f32 0.0, %v2011
  %v2013 = vpop.f32.mrb[0].mxu0
  %v2014 = vpop.f32.mrb[0].mxu0
  %v2015 = vadd.f32 0.0, %v2014
  %v2016 = vpop.f32.mrb[0].mxu0
  %2017 = vmatprep.mubr.bf16.mxu0 0
  %2018 = vmatmul.mubr.bf16.gmra.mrb[0].mxu0 %v1919
  %v2019 = vpop.f32.mrb[0].mxu0
  %v2020 = vadd.f32 0.0, %v2019
  %v2021 = vpop.f32.mrb[0].mxu0
  %v2022 = vpop.f32.mrb[0].mxu0
  %v2023 = vadd.f32 0.0, %v2022
  %v2024 = vpop.f32.mrb[0].mxu0
  %2025 = vmatprep.mubr.bf16.mxu0 0
  %2026 = vmatmul.mubr.bf16.gmra.mrb[0].mxu0 %v1922
  %v2027 = vpop.f32.mrb[0].mxu0
  %v2028 = vadd.f32 0.0, %v2027
  %v2029 = vpop.f32.mrb[0].mxu0
  %v2030 = vpop.f32.mrb[0].mxu0
  %v2031 = vadd.f32 0.0, %v2030
  %v2032 = vpop.f32.mrb[0].mxu0
  %2033 = vmatprep.mubr.bf16.mxu0 0
  %2034 = vmatmul.mubr.bf16.gmra.mrb[0].mxu0 %v1925
  %v2035 = vpop.f32.mrb[0].mxu0
  %v2036 = vadd.f32 0.0, %v2035
  %v2037 = vpop.f32.mrb[0].mxu0
  %v2038 = vpop.f32.mrb[0].mxu0
  %v2039 = vadd.f32 0.0, %v2038
  %v2040 = vpop.f32.mrb[0].mxu0
  %2041 = vmatprep.mubr.bf16.mxu0 0
  %2042 = vmatmul.mubr.bf16.gmra.mrb[0].mxu0 %v1928
  %v2043 = vpop.f32.mrb[0].mxu0
  %v2044 = vadd.f32 0.0, %v2043
  %v2045 = vpop.f32.mrb[0].mxu0
  %v2046 = vpop.f32.mrb[0].mxu0
  %v2047 = vadd.f32 0.0, %v2046
  %v2048 = vpop.f32.mrb[0].mxu0
  %2049 = vmatprep.mubr.bf16.mxu0 0
  %2050 = vmatmul.mubr.bf16.gmra.mrb[0].mxu0 %v1931
  %v2051 = vpop.f32.mrb[0].mxu0
  %v2052 = vadd.f32 0.0, %v2051
  %v2053 = vpop.f32.mrb[0].mxu0
  %v2054 = vpop.f32.mrb[0].mxu0
  %v2055 = vadd.f32 0.0, %v2054
  %v2056 = vpop.f32.mrb[0].mxu0
  %2057 = vdwg.mxu0
  %v2058 = vpack.c.bf16 %v1975, %v1972
  %v2059 = vpack.c.bf16 %v1983, %v1980
  %v2060 = vpack.c.bf16 %v1991, %v1988
  %v2061 = vpack.c.bf16 %v1999, %v1996
  %v2062 = vpack.c.bf16 %v2007, %v2004
  %v2063 = vpack.c.bf16 %v2015, %v2012
  %v2064 = vpack.c.bf16 %v2023, %v2020
  %v2065 = vpack.c.bf16 %v2031, %v2028
  %v2066 = vpack.c.bf16 %v2039, %v2036
  %v2067 = vpack.c.bf16 %v2047, %v2044
  %v2068 = vpack.c.bf16 %v2055, %v2052
  %v2069 = vld [vmem:[%s8] sm:$0xf]
  %v2070 = vld [vmem:[%s8 + $0x4] sm:$0xf]
  %v2071 = vld [vmem:[%s8 + $0x8] sm:$0xf]
  %v2072 = vld [vmem:[%s8 + $0xc] sm:$0xf]
  %v2073 = vld [vmem:[%s8 + $0x10] sm:$0xf]
  %v2074 = vld [vmem:[%s8 + $0x14] sm:$0xf]
  %v2075 = vld [vmem:[%s8 + $0x18] sm:$0xf]
  %v2076 = vld [vmem:[%s8 + $0x1c] sm:$0x1]
  %s2077 = scalar_lea.vmem %s7, 88
  %v2078 = vld [vmem:[%s2077] sm:$0xf]
  %v2079 = vld [vmem:[%s2077 + $0x4] sm:$0xf]
  %v2080 = vld [vmem:[%s2077 + $0x8] sm:$0xf]
  %v2081 = vld [vmem:[%s2077 + $0xc] sm:$0xf]
  %v2082 = vld [vmem:[%s2077 + $0x10] sm:$0xf]
  %v2083 = vld [vmem:[%s2077 + $0x14] sm:$0xf]
  %v2084 = vld [vmem:[%s2077 + $0x18] sm:$0xf]
  %v2085 = vld [vmem:[%s2077 + $0x1c] sm:$0xf]
  %v2086 = vld [vmem:[%s2077 + $0x20] sm:$0xf]
  %v2087 = vld [vmem:[%s2077 + $0x24] sm:$0xf]
  %v2088 = vld [vmem:[%s2077 + $0x28] sm:$0xf]
  %v2089 = vld [vmem:[%s2077 + $0x2c] sm:$0xf]
  %v2090 = vld [vmem:[%s2077 + $0x30] sm:$0xf]
  %v2091 = vld [vmem:[%s2077 + $0x34] sm:$0xf]
  %v2092 = vld [vmem:[%s2077 + $0x38] sm:$0xf]
  %v2093 = vld [vmem:[%s2077 + $0x3c] sm:$0xf]
  %v2094 = vld [vmem:[%s2077 + $0x40] sm:$0xf]
  %v2095 = vld [vmem:[%s2077 + $0x44] sm:$0xf]
  %v2096 = vld [vmem:[%s2077 + $0x48] sm:$0xf]
  %v2097 = vld [vmem:[%s2077 + $0x4c] sm:$0xf]
  %v2098 = vld [vmem:[%s2077 + $0x50] sm:$0xf]
  %v2099 = vld [vmem:[%s2077 + $0x54] sm:$0x3]
  %v2122 = vunpack.c.l.b16 %v2078
  %v2123 = vunpack.c.l.b16 %v2079
  %v2124 = vunpack.c.l.b16 %v2080
  %v2125 = vunpack.c.l.b16 %v2081
  %v2126 = vunpack.c.l.b16 %v2082
  %v2127 = vunpack.c.l.b16 %v2083
  %v2128 = vunpack.c.l.b16 %v2084
  %v2129 = vunpack.c.l.b16 %v2085
  %v2130 = vunpack.c.l.b16 %v2086
  %v2131 = vunpack.c.l.b16 %v2087
  %v2132 = vunpack.c.l.b16 %v2088
  %v2133 = vunpack.c.l.b16 %v2089
  %v2134 = vunpack.c.l.b16 %v2090
  %v2135 = vunpack.c.l.b16 %v2091
  %v2136 = vunpack.c.l.b16 %v2092
  %v2137 = vunpack.c.l.b16 %v2093
  %v2138 = vunpack.c.l.b16 %v2094
  %v2139 = vunpack.c.l.b16 %v2095
  %v2140 = vunpack.c.l.b16 %v2096
  %v2141 = vunpack.c.l.b16 %v2097
  %v2142 = vunpack.c.l.b16 %v2098
  %v2143 = vunpack.c.l.b16 %v2099
  %v2144 = vpack.c.b16 %v2123, %v2122
  %v2145 = vpack.c.b16 %v2125, %v2124
  %v2146 = vpack.c.b16 %v2127, %v2126
  %v2147 = vpack.c.b16 %v2129, %v2128
  %v2148 = vpack.c.b16 %v2131, %v2130
  %v2149 = vpack.c.b16 %v2133, %v2132
  %v2150 = vpack.c.b16 %v2135, %v2134
  %v2151 = vpack.c.b16 %v2137, %v2136
  %v2152 = vpack.c.b16 %v2139, %v2138
  %v2153 = vpack.c.b16 %v2141, %v2140
  %v2154 = vpack.c.b16 %v2143, %v2142
  %v2156 = vsel %vm1899, %v2144, 0
  %v2159 = vsel %vm1899, %v2145, 0
  %v2162 = vsel %vm1899, %v2146, 0
  %v2165 = vsel %vm1899, %v2147, 0
  %v2168 = vsel %vm1899, %v2148, 0
  %v2171 = vsel %vm1899, %v2149, 0
  %v2174 = vsel %vm1899, %v2150, 0
  %v2177 = vsel %vm1899, %v2151, 0
  %v2180 = vsel %vm1899, %v2152, 0
  %v2183 = vsel %vm1899, %v2153, 0
  %v2186 = vsel %vm1899, %v2154, 0
  %2188 = vmatprep.subr.bf16.mxu0 0
  %2189 = vmatpush1.bf16.msra.mxu0 %v1814
  %2190 = vmatprep.subr.bf16.mxu0 0
  %2191 = vmatpush1.bf16.msra.mxu0 %v1815
  %2192 = vmatprep.subr.bf16.mxu0 0
  %2193 = vmatpush1.bf16.msra.mxu0 %v1816
  %2194 = vmatprep.subr.bf16.mxu0 0
  %2195 = vmatpush1.bf16.msra.mxu0 %v1817
  %2196 = vmatprep.subr.bf16.mxu0 0
  %2197 = vmatpush1.bf16.msra.mxu0 %v1818
  %2198 = vmatprep.subr.bf16.mxu0 0
  %2199 = vmatpush1.bf16.msra.mxu0 %v1819
  %2200 = vmatprep.subr.bf16.mxu0 0
  %2201 = vmatpush1.bf16.msra.mxu0 %v1820
  %2202 = vmatprep.subr.bf16.mxu0 0
  %2203 = vmatpush1.bf16.msra.mxu0 %v1935
  %2204 = vmatprep.subr.bf16.mxu0 0
  %2205 = vmatpush1.bf16.msra.mxu0 0
  %2206 = vmatprep.subr.bf16.mxu0 0
  %2207 = vmatpush1.bf16.msra.mxu0 0
  %2208 = vmatprep.subr.bf16.mxu0 0
  %2209 = vmatpush1.bf16.msra.mxu0 0
  %2210 = vmatprep.subr.bf16.mxu0 0
  %2211 = vmatpush1.bf16.msra.mxu0 0
  %2212 = vmatprep.subr.bf16.mxu0 0
  %2213 = vmatpush1.bf16.msra.mxu0 0
  %2214 = vmatprep.subr.bf16.mxu0 0
  %2215 = vmatpush1.bf16.msra.mxu0 0
  %2216 = vmatprep.subr.bf16.mxu0 0
  %2217 = vmatpush1.bf16.msra.mxu0 0
  %2218 = vmatprep.subr.bf16.mxu0 0
  %2219 = vmatpush1.bf16.msra.mxu0 0
  %2220 = vmatprep.mubr.bf16.mxu0 0
  %2221 = vmatmul.mubr.bf16.gmra.mrb[0].mxu0 %v2156
  %v2222 = vpop.f32.mrb[0].mxu0
  %v2223 = vadd.f32 0.0, %v2222
  %v2224 = vpop.f32.mrb[0].mxu0
  %v2225 = vpop.f32.mrb[0].mxu0
  %v2226 = vadd.f32 0.0, %v2225
  %v2227 = vpop.f32.mrb[0].mxu0
  %2228 = vmatprep.mubr.bf16.mxu0 0
  %2229 = vmatmul.mubr.bf16.gmra.mrb[0].mxu0 %v2159
  %v2230 = vpop.f32.mrb[0].mxu0
  %v2231 = vadd.f32 0.0, %v2230
  %v2232 = vpop.f32.mrb[0].mxu0
  %v2233 = vpop.f32.mrb[0].mxu0
  %v2234 = vadd.f32 0.0, %v2233
  %v2235 = vpop.f32.mrb[0].mxu0
  %2236 = vmatprep.mubr.bf16.mxu0 0
  %2237 = vmatmul.mubr.bf16.gmra.mrb[0].mxu0 %v2162
  %v2238 = vpop.f32.mrb[0].mxu0
  %v2239 = vadd.f32 0.0, %v2238
  %v2240 = vpop.f32.mrb[0].mxu0
  %v2241 = vpop.f32.mrb[0].mxu0
  %v2242 = vadd.f32 0.0, %v2241
  %v2243 = vpop.f32.mrb[0].mxu0
  %2244 = vmatprep.mubr.bf16.mxu0 0
  %2245 = vmatmul.mubr.bf16.gmra.mrb[0].mxu0 %v2165
  %v2246 = vpop.f32.mrb[0].mxu0
  %v2247 = vadd.f32 0.0, %v2246
  %v2248 = vpop.f32.mrb[0].mxu0
  %v2249 = vpop.f32.mrb[0].mxu0
  %v2250 = vadd.f32 0.0, %v2249
  %v2251 = vpop.f32.mrb[0].mxu0
  %2252 = vmatprep.mubr.bf16.mxu0 0
  %2253 = vmatmul.mubr.bf16.gmra.mrb[0].mxu0 %v2168
  %v2254 = vpop.f32.mrb[0].mxu0
  %v2255 = vadd.f32 0.0, %v2254
  %v2256 = vpop.f32.mrb[0].mxu0
  %v2257 = vpop.f32.mrb[0].mxu0
  %v2258 = vadd.f32 0.0, %v2257
  %v2259 = vpop.f32.mrb[0].mxu0
  %2260 = vmatprep.mubr.bf16.mxu0 0
  %2261 = vmatmul.mubr.bf16.gmra.mrb[0].mxu0 %v2171
  %v2262 = vpop.f32.mrb[0].mxu0
  %v2263 = vadd.f32 0.0, %v2262
  %v2264 = vpop.f32.mrb[0].mxu0
  %v2265 = vpop.f32.mrb[0].mxu0
  %v2266 = vadd.f32 0.0, %v2265
  %v2267 = vpop.f32.mrb[0].mxu0
  %2268 = vmatprep.mubr.bf16.mxu0 0
  %2269 = vmatmul.mubr.bf16.gmra.mrb[0].mxu0 %v2174
  %v2270 = vpop.f32.mrb[0].mxu0
  %v2271 = vadd.f32 0.0, %v2270
  %v2272 = vpop.f32.mrb[0].mxu0
  %v2273 = vpop.f32.mrb[0].mxu0
  %v2274 = vadd.f32 0.0, %v2273
  %v2275 = vpop.f32.mrb[0].mxu0
  %2276 = vmatprep.mubr.bf16.mxu0 0
  %2277 = vmatmul.mubr.bf16.gmra.mrb[0].mxu0 %v2177
  %v2278 = vpop.f32.mrb[0].mxu0
  %v2279 = vadd.f32 0.0, %v2278
  %v2280 = vpop.f32.mrb[0].mxu0
  %v2281 = vpop.f32.mrb[0].mxu0
  %v2282 = vadd.f32 0.0, %v2281
  %v2283 = vpop.f32.mrb[0].mxu0
  %2284 = vmatprep.mubr.bf16.mxu0 0
  %2285 = vmatmul.mubr.bf16.gmra.mrb[0].mxu0 %v2180
  %v2286 = vpop.f32.mrb[0].mxu0
  %v2287 = vadd.f32 0.0, %v2286
  %v2288 = vpop.f32.mrb[0].mxu0
  %v2289 = vpop.f32.mrb[0].mxu0
  %v2290 = vadd.f32 0.0, %v2289
  %v2291 = vpop.f32.mrb[0].mxu0
  %2292 = vmatprep.mubr.bf16.mxu0 0
  %2293 = vmatmul.mubr.bf16.gmra.mrb[0].mxu0 %v2183
  %v2294 = vpop.f32.mrb[0].mxu0
  %v2295 = vadd.f32 0.0, %v2294
  %v2296 = vpop.f32.mrb[0].mxu0
  %v2297 = vpop.f32.mrb[0].mxu0
  %v2298 = vadd.f32 0.0, %v2297
  %v2299 = vpop.f32.mrb[0].mxu0
  %2300 = vmatprep.mubr.bf16.mxu0 0
  %2301 = vmatmul.mubr.bf16.gmra.mrb[0].mxu0 %v2186
  %v2302 = vpop.f32.mrb[0].mxu0
  %v2303 = vadd.f32 0.0, %v2302
  %v2304 = vpop.f32.mrb[0].mxu0
  %v2305 = vpop.f32.mrb[0].mxu0
  %v2306 = vadd.f32 0.0, %v2305
  %v2307 = vpop.f32.mrb[0].mxu0
  %2308 = vdwg.mxu0
  %v2309 = vpack.c.bf16 %v2226, %v2223
  %v2310 = vpack.c.bf16 %v2234, %v2231
  %v2311 = vpack.c.bf16 %v2242, %v2239
  %v2312 = vpack.c.bf16 %v2250, %v2247
  %v2313 = vpack.c.bf16 %v2258, %v2255
  %v2314 = vpack.c.bf16 %v2266, %v2263
  %v2315 = vpack.c.bf16 %v2274, %v2271
  %v2316 = vpack.c.bf16 %v2282, %v2279
  %v2317 = vpack.c.bf16 %v2290, %v2287
  %v2318 = vpack.c.bf16 %v2298, %v2295
  %v2319 = vpack.c.bf16 %v2306, %v2303
  %s2320 = scalar_lea.vmem %s8, 32
  %v2321 = vld [vmem:[%s2320] sm:$0xf]
  %v2322 = vld [vmem:[%s2320 + $0x4] sm:$0xf]
  %v2323 = vld [vmem:[%s2320 + $0x8] sm:$0xf]
  %v2324 = vld [vmem:[%s2320 + $0xc] sm:$0xf]
  %v2325 = vld [vmem:[%s2320 + $0x10] sm:$0xf]
  %v2326 = vld [vmem:[%s2320 + $0x14] sm:$0xf]
  %v2327 = vld [vmem:[%s2320 + $0x18] sm:$0xf]
  %v2328 = vld [vmem:[%s2320 + $0x1c] sm:$0x1]
  %v2337 = vunpack.c.l.b16 %v2321
  %v2338 = vunpack.c.l.b16 %v2322
  %v2339 = vunpack.c.l.b16 %v2323
  %v2340 = vunpack.c.l.b16 %v2324
  %v2341 = vunpack.c.l.b16 %v2325
  %v2342 = vunpack.c.l.b16 %v2326
  %v2343 = vunpack.c.l.b16 %v2327
  %v2344 = vunpack.c.l.b16 %v2328
  %v2345 = vpack.c.b16 %v2338, %v2337
  %v2346 = vpack.c.b16 %v2340, %v2339
  %v2347 = vpack.c.b16 %v2342, %v2341
  %v2348 = vpack.c.b16 %v2344, %v2343
  %vm2352 = vcmask 474112
  %v2354 = vsel %vm2352, %v2309, 0
  %v2357 = vsel %vm2352, %v2310, 0
  %v2360 = vsel %vm2352, %v2311, 0
  %v2363 = vsel %vm2352, %v2312, 0
  %v2366 = vsel %vm2352, %v2313, 0
  %v2369 = vsel %vm2352, %v2314, 0
  %v2372 = vsel %vm2352, %v2315, 0
  %v2375 = vsel %vm2352, %v2316, 0
  %v2378 = vsel %vm2352, %v2317, 0
  %v2381 = vsel %vm2352, %v2318, 0
  %v2384 = vsel %vm2352, %v2319, 0
  %vm2386 = vcmask 1044480
  %v2388 = vsel %vm2386, %v2348, 0
  %2390 = vmatprep.subr.bf16.mxu0 0
  %2391 = vmatpush1.bf16.msra.mxu0 %v2345
  %2392 = vmatprep.subr.bf16.mxu0 0
  %2393 = vmatpush1.bf16.msra.mxu0 %v2346
  %2394 = vmatprep.subr.bf16.mxu0 0
  %2395 = vmatpush1.bf16.msra.mxu0 %v2347
  %2396 = vmatprep.subr.bf16.mxu0 0
  %2397 = vmatpush1.bf16.msra.mxu0 %v2388
  %2398 = vmatprep.subr.bf16.mxu0 0
  %2399 = vmatpush1.bf16.msra.mxu0 0
  %2400 = vmatprep.subr.bf16.mxu0 0
  %2401 = vmatpush1.bf16.msra.mxu0 0
  %2402 = vmatprep.subr.bf16.mxu0 0
  %2403 = vmatpush1.bf16.msra.mxu0 0
  %2404 = vmatprep.subr.bf16.mxu0 0
  %2405 = vmatpush1.bf16.msra.mxu0 0
  %2406 = vmatprep.subr.bf16.mxu0 0
  %2407 = vmatpush1.bf16.msra.mxu0 0
  %2408 = vmatprep.subr.bf16.mxu0 0
  %2409 = vmatpush1.bf16.msra.mxu0 0
  %2410 = vmatprep.subr.bf16.mxu0 0
  %2411 = vmatpush1.bf16.msra.mxu0 0
  %2412 = vmatprep.subr.bf16.mxu0 0
  %2413 = vmatpush1.bf16.msra.mxu0 0
  %2414 = vmatprep.subr.bf16.mxu0 0
  %2415 = vmatpush1.bf16.msra.mxu0 0
  %2416 = vmatprep.subr.bf16.mxu0 0
  %2417 = vmatpush1.bf16.msra.mxu0 0
  %2418 = vmatprep.subr.bf16.mxu0 0
  %2419 = vmatpush1.bf16.msra.mxu0 0
  %2420 = vmatprep.subr.bf16.mxu0 0
  %2421 = vmatpush1.bf16.msra.mxu0 0
  %2422 = vmatprep.mubr.bf16.mxu0 0
  %2423 = vmatmul.mubr.bf16.gmra.mrb[0].mxu0 %v2354
  %v2424 = vpop.f32.mrb[0].mxu0
  %v2425 = vadd.f32 0.0, %v2424
  %v2426 = vpop.f32.mrb[0].mxu0
  %v2427 = vpop.f32.mrb[0].mxu0
  %v2428 = vadd.f32 0.0, %v2427
  %v2429 = vpop.f32.mrb[0].mxu0
  %2430 = vmatprep.mubr.bf16.mxu0 0
  %2431 = vmatmul.mubr.bf16.gmra.mrb[0].mxu0 %v2357
  %v2432 = vpop.f32.mrb[0].mxu0
  %v2433 = vadd.f32 0.0, %v2432
  %v2434 = vpop.f32.mrb[0].mxu0
  %v2435 = vpop.f32.mrb[0].mxu0
  %v2436 = vadd.f32 0.0, %v2435
  %v2437 = vpop.f32.mrb[0].mxu0
  %2438 = vmatprep.mubr.bf16.mxu0 0
  %2439 = vmatmul.mubr.bf16.gmra.mrb[0].mxu0 %v2360
  %v2440 = vpop.f32.mrb[0].mxu0
  %v2441 = vadd.f32 0.0, %v2440
  %v2442 = vpop.f32.mrb[0].mxu0
  %v2443 = vpop.f32.mrb[0].mxu0
  %v2444 = vadd.f32 0.0, %v2443
  %v2445 = vpop.f32.mrb[0].mxu0
  %2446 = vmatprep.mubr.bf16.mxu0 0
  %2447 = vmatmul.mubr.bf16.gmra.mrb[0].mxu0 %v2363
  %v2448 = vpop.f32.mrb[0].mxu0
  %v2449 = vadd.f32 0.0, %v2448
  %v2450 = vpop.f32.mrb[0].mxu0
  %v2451 = vpop.f32.mrb[0].mxu0
  %v2452 = vadd.f32 0.0, %v2451
  %v2453 = vpop.f32.mrb[0].mxu0
  %2454 = vmatprep.mubr.bf16.mxu0 0
  %2455 = vmatmul.mubr.bf16.gmra.mrb[0].mxu0 %v2366
  %v2456 = vpop.f32.mrb[0].mxu0
  %v2457 = vadd.f32 0.0, %v2456
  %v2458 = vpop.f32.mrb[0].mxu0
  %v2459 = vpop.f32.mrb[0].mxu0
  %v2460 = vadd.f32 0.0, %v2459
  %v2461 = vpop.f32.mrb[0].mxu0
  %2462 = vmatprep.mubr.bf16.mxu0 0
  %2463 = vmatmul.mubr.bf16.gmra.mrb[0].mxu0 %v2369
  %v2464 = vpop.f32.mrb[0].mxu0
  %v2465 = vadd.f32 0.0, %v2464
  %v2466 = vpop.f32.mrb[0].mxu0
  %v2467 = vpop.f32.mrb[0].mxu0
  %v2468 = vadd.f32 0.0, %v2467
  %v2469 = vpop.f32.mrb[0].mxu0
  %2470 = vmatprep.mubr.bf16.mxu0 0
  %2471 = vmatmul.mubr.bf16.gmra.mrb[0].mxu0 %v2372
  %v2472 = vpop.f32.mrb[0].mxu0
  %v2473 = vadd.f32 0.0, %v2472
  %v2474 = vpop.f32.mrb[0].mxu0
  %v2475 = vpop.f32.mrb[0].mxu0
  %v2476 = vadd.f32 0.0, %v2475
  %v2477 = vpop.f32.mrb[0].mxu0
  %2478 = vmatprep.mubr.bf16.mxu0 0
  %2479 = vmatmul.mubr.bf16.gmra.mrb[0].mxu0 %v2375
  %v2480 = vpop.f32.mrb[0].mxu0
  %v2481 = vadd.f32 0.0, %v2480
  %v2482 = vpop.f32.mrb[0].mxu0
  %v2483 = vpop.f32.mrb[0].mxu0
  %v2484 = vadd.f32 0.0, %v2483
  %v2485 = vpop.f32.mrb[0].mxu0
  %2486 = vmatprep.mubr.bf16.mxu0 0
  %2487 = vmatmul.mubr.bf16.gmra.mrb[0].mxu0 %v2378
  %v2488 = vpop.f32.mrb[0].mxu0
  %v2489 = vadd.f32 0.0, %v2488
  %v2490 = vpop.f32.mrb[0].mxu0
  %v2491 = vpop.f32.mrb[0].mxu0
  %v2492 = vadd.f32 0.0, %v2491
  %v2493 = vpop.f32.mrb[0].mxu0
  %2494 = vmatprep.mubr.bf16.mxu0 0
  %2495 = vmatmul.mubr.bf16.gmra.mrb[0].mxu0 %v2381
  %v2496 = vpop.f32.mrb[0].mxu0
  %v2497 = vadd.f32 0.0, %v2496
  %v2498 = vpop.f32.mrb[0].mxu0
  %v2499 = vpop.f32.mrb[0].mxu0
  %v2500 = vadd.f32 0.0, %v2499
  %v2501 = vpop.f32.mrb[0].mxu0
  %2502 = vmatprep.mubr.bf16.mxu0 0
  %2503 = vmatmul.mubr.bf16.gmra.mrb[0].mxu0 %v2384
  %v2504 = vpop.f32.mrb[0].mxu0
  %v2505 = vadd.f32 0.0, %v2504
  %v2506 = vpop.f32.mrb[0].mxu0
  %v2507 = vpop.f32.mrb[0].mxu0
  %v2508 = vadd.f32 0.0, %v2507
  %v2509 = vpop.f32.mrb[0].mxu0
  %2510 = vdwg.mxu0
  %v2519 = vunpack.c.l.b16 %v2069
  %v2520 = vunpack.c.l.b16 %v2070
  %v2521 = vunpack.c.l.b16 %v2071
  %v2522 = vunpack.c.l.b16 %v2072
  %v2523 = vunpack.c.l.b16 %v2073
  %v2524 = vunpack.c.l.b16 %v2074
  %v2525 = vunpack.c.l.b16 %v2075
  %v2526 = vunpack.c.l.b16 %v2076
  %v2527 = vpack.c.b16 %v2520, %v2519
  %v2528 = vpack.c.b16 %v2522, %v2521
  %v2529 = vpack.c.b16 %v2524, %v2523
  %v2530 = vpack.c.b16 %v2526, %v2525
  %v2535 = vsel %vm2352, %v2058, 0
  %v2538 = vsel %vm2352, %v2059, 0
  %v2541 = vsel %vm2352, %v2060, 0
  %v2544 = vsel %vm2352, %v2061, 0
  %v2547 = vsel %vm2352, %v2062, 0
  %v2550 = vsel %vm2352, %v2063, 0
  %v2553 = vsel %vm2352, %v2064, 0
  %v2556 = vsel %vm2352, %v2065, 0
  %v2559 = vsel %vm2352, %v2066, 0
  %v2562 = vsel %vm2352, %v2067, 0
  %v2565 = vsel %vm2352, %v2068, 0
  %v2568 = vsel %vm2386, %v2530, 0
  %2570 = vmatprep.subr.bf16.mxu0 0
  %2571 = vmatpush1.bf16.msra.mxu0 %v2527
  %2572 = vmatprep.subr.bf16.mxu0 0
  %2573 = vmatpush1.bf16.msra.mxu0 %v2528
  %2574 = vmatprep.subr.bf16.mxu0 0
  %2575 = vmatpush1.bf16.msra.mxu0 %v2529
  %2576 = vmatprep.subr.bf16.mxu0 0
  %2577 = vmatpush1.bf16.msra.mxu0 %v2568
  %2578 = vmatprep.subr.bf16.mxu0 0
  %2579 = vmatpush1.bf16.msra.mxu0 0
  %2580 = vmatprep.subr.bf16.mxu0 0
  %2581 = vmatpush1.bf16.msra.mxu0 0
  %2582 = vmatprep.subr.bf16.mxu0 0
  %2583 = vmatpush1.bf16.msra.mxu0 0
  %2584 = vmatprep.subr.bf16.mxu0 0
  %2585 = vmatpush1.bf16.msra.mxu0 0
  %2586 = vmatprep.subr.bf16.mxu0 0
  %2587 = vmatpush1.bf16.msra.mxu0 0
  %2588 = vmatprep.subr.bf16.mxu0 0
  %2589 = vmatpush1.bf16.msra.mxu0 0
  %2590 = vmatprep.subr.bf16.mxu0 0
  %2591 = vmatpush1.bf16.msra.mxu0 0
  %2592 = vmatprep.subr.bf16.mxu0 0
  %2593 = vmatpush1.bf16.msra.mxu0 0
  %2594 = vmatprep.subr.bf16.mxu0 0
  %2595 = vmatpush1.bf16.msra.mxu0 0
  %2596 = vmatprep.subr.bf16.mxu0 0
  %2597 = vmatpush1.bf16.msra.mxu0 0
  %2598 = vmatprep.subr.bf16.mxu0 0
  %2599 = vmatpush1.bf16.msra.mxu0 0
  %2600 = vmatprep.subr.bf16.mxu0 0
  %2601 = vmatpush1.bf16.msra.mxu0 0
  %2602 = vmatprep.mubr.bf16.mxu0 0
  %2603 = vmatmul.mubr.bf16.gmra.mrb[0].mxu0 %v2535
  %v2604 = vpop.f32.mrb[0].mxu0
  %v2605 = vadd.f32 %v2425, %v2604
  %v2606 = vpop.f32.mrb[0].mxu0
  %v2607 = vpop.f32.mrb[0].mxu0
  %v2608 = vadd.f32 %v2428, %v2607
  %v2609 = vpop.f32.mrb[0].mxu0
  %2610 = vmatprep.mubr.bf16.mxu0 0
  %2611 = vmatmul.mubr.bf16.gmra.mrb[0].mxu0 %v2538
  %v2612 = vpop.f32.mrb[0].mxu0
  %v2613 = vadd.f32 %v2433, %v2612
  %v2614 = vpop.f32.mrb[0].mxu0
  %v2615 = vpop.f32.mrb[0].mxu0
  %v2616 = vadd.f32 %v2436, %v2615
  %v2617 = vpop.f32.mrb[0].mxu0
  %2618 = vmatprep.mubr.bf16.mxu0 0
  %2619 = vmatmul.mubr.bf16.gmra.mrb[0].mxu0 %v2541
  %v2620 = vpop.f32.mrb[0].mxu0
  %v2621 = vadd.f32 %v2441, %v2620
  %v2622 = vpop.f32.mrb[0].mxu0
  %v2623 = vpop.f32.mrb[0].mxu0
  %v2624 = vadd.f32 %v2444, %v2623
  %v2625 = vpop.f32.mrb[0].mxu0
  %2626 = vmatprep.mubr.bf16.mxu0 0
  %2627 = vmatmul.mubr.bf16.gmra.mrb[0].mxu0 %v2544
  %v2628 = vpop.f32.mrb[0].mxu0
  %v2629 = vadd.f32 %v2449, %v2628
  %v2630 = vpop.f32.mrb[0].mxu0
  %v2631 = vpop.f32.mrb[0].mxu0
  %v2632 = vadd.f32 %v2452, %v2631
  %v2633 = vpop.f32.mrb[0].mxu0
  %2634 = vmatprep.mubr.bf16.mxu0 0
  %2635 = vmatmul.mubr.bf16.gmra.mrb[0].mxu0 %v2547
  %v2636 = vpop.f32.mrb[0].mxu0
  %v2637 = vadd.f32 %v2457, %v2636
  %v2638 = vpop.f32.mrb[0].mxu0
  %v2639 = vpop.f32.mrb[0].mxu0
  %v2640 = vadd.f32 %v2460, %v2639
  %v2641 = vpop.f32.mrb[0].mxu0
  %2642 = vmatprep.mubr.bf16.mxu0 0
  %2643 = vmatmul.mubr.bf16.gmra.mrb[0].mxu0 %v2550
  %v2644 = vpop.f32.mrb[0].mxu0
  %v2645 = vadd.f32 %v2465, %v2644
  %v2646 = vpop.f32.mrb[0].mxu0
  %v2647 = vpop.f32.mrb[0].mxu0
  %v2648 = vadd.f32 %v2468, %v2647
  %v2649 = vpop.f32.mrb[0].mxu0
  %2650 = vmatprep.mubr.bf16.mxu0 0
  %2651 = vmatmul.mubr.bf16.gmra.mrb[0].mxu0 %v2553
  %v2652 = vpop.f32.mrb[0].mxu0
  %v2653 = vadd.f32 %v2473, %v2652
  %v2654 = vpop.f32.mrb[0].mxu0
  %v2655 = vpop.f32.mrb[0].mxu0
  %v2656 = vadd.f32 %v2476, %v2655
  %v2657 = vpop.f32.mrb[0].mxu0
  %2658 = vmatprep.mubr.bf16.mxu0 0
  %2659 = vmatmul.mubr.bf16.gmra.mrb[0].mxu0 %v2556
  %v2660 = vpop.f32.mrb[0].mxu0
  %v2661 = vadd.f32 %v2481, %v2660
  %v2662 = vpop.f32.mrb[0].mxu0
  %v2663 = vpop.f32.mrb[0].mxu0
  %v2664 = vadd.f32 %v2484, %v2663
  %v2665 = vpop.f32.mrb[0].mxu0
  %2666 = vmatprep.mubr.bf16.mxu0 0
  %2667 = vmatmul.mubr.bf16.gmra.mrb[0].mxu0 %v2559
  %v2668 = vpop.f32.mrb[0].mxu0
  %v2669 = vadd.f32 %v2489, %v2668
  %v2670 = vpop.f32.mrb[0].mxu0
  %v2671 = vpop.f32.mrb[0].mxu0
  %v2672 = vadd.f32 %v2492, %v2671
  %v2673 = vpop.f32.mrb[0].mxu0
  %2674 = vmatprep.mubr.bf16.mxu0 0
  %2675 = vmatmul.mubr.bf16.gmra.mrb[0].mxu0 %v2562
  %v2676 = vpop.f32.mrb[0].mxu0
  %v2677 = vadd.f32 %v2497, %v2676
  %v2678 = vpop.f32.mrb[0].mxu0
  %v2679 = vpop.f32.mrb[0].mxu0
  %v2680 = vadd.f32 %v2500, %v2679
  %v2681 = vpop.f32.mrb[0].mxu0
  %2682 = vmatprep.mubr.bf16.mxu0 0
  %2683 = vmatmul.mubr.bf16.gmra.mrb[0].mxu0 %v2565
  %v2684 = vpop.f32.mrb[0].mxu0
  %v2685 = vadd.f32 %v2505, %v2684
  %v2686 = vpop.f32.mrb[0].mxu0
  %v2687 = vpop.f32.mrb[0].mxu0
  %v2688 = vadd.f32 %v2508, %v2687
  %v2689 = vpop.f32.mrb[0].mxu0
  %2690 = vdwg.mxu0
  %s2691 = scalar_lea.vmem %s7, 176
  %v2692 = vld [vmem:[%s2691] sm:$0xf]
  %v2693 = vld [vmem:[%s2691 + $0x4] sm:$0xf]
  %v2694 = vld [vmem:[%s2691 + $0x8] sm:$0xf]
  %v2695 = vld [vmem:[%s2691 + $0xc] sm:$0xf]
  %v2696 = vld [vmem:[%s2691 + $0x10] sm:$0xf]
  %v2697 = vld [vmem:[%s2691 + $0x14] sm:$0xf]
  %v2698 = vld [vmem:[%s2691 + $0x18] sm:$0xf]
  %v2699 = vld [vmem:[%s2691 + $0x1c] sm:$0xf]
  %v2700 = vld [vmem:[%s2691 + $0x20] sm:$0xf]
  %v2701 = vld [vmem:[%s2691 + $0x24] sm:$0xf]
  %v2702 = vld [vmem:[%s2691 + $0x28] sm:$0xf]
  %v2703 = vld [vmem:[%s2691 + $0x2c] sm:$0xf]
  %v2704 = vld [vmem:[%s2691 + $0x30] sm:$0xf]
  %v2705 = vld [vmem:[%s2691 + $0x34] sm:$0xf]
  %v2706 = vld [vmem:[%s2691 + $0x38] sm:$0xf]
  %v2707 = vld [vmem:[%s2691 + $0x3c] sm:$0xf]
  %v2708 = vld [vmem:[%s2691 + $0x40] sm:$0xf]
  %v2709 = vld [vmem:[%s2691 + $0x44] sm:$0xf]
  %v2710 = vld [vmem:[%s2691 + $0x48] sm:$0xf]
  %v2711 = vld [vmem:[%s2691 + $0x4c] sm:$0xf]
  %v2712 = vld [vmem:[%s2691 + $0x50] sm:$0xf]
  %v2713 = vld [vmem:[%s2691 + $0x54] sm:$0x3]
  %v2736 = vunpack.c.l.b16 %v2692
  %v2737 = vunpack.c.l.b16 %v2693
  %v2738 = vunpack.c.l.b16 %v2694
  %v2739 = vunpack.c.l.b16 %v2695
  %v2740 = vunpack.c.l.b16 %v2696
  %v2741 = vunpack.c.l.b16 %v2697
  %v2742 = vunpack.c.l.b16 %v2698
  %v2743 = vunpack.c.l.b16 %v2699
  %v2744 = vunpack.c.l.b16 %v2700
  %v2745 = vunpack.c.l.b16 %v2701
  %v2746 = vunpack.c.l.b16 %v2702
  %v2747 = vunpack.c.l.b16 %v2703
  %v2748 = vunpack.c.l.b16 %v2704
  %v2749 = vunpack.c.l.b16 %v2705
  %v2750 = vunpack.c.l.b16 %v2706
  %v2751 = vunpack.c.l.b16 %v2707
  %v2752 = vunpack.c.l.b16 %v2708
  %v2753 = vunpack.c.l.b16 %v2709
  %v2754 = vunpack.c.l.b16 %v2710
  %v2755 = vunpack.c.l.b16 %v2711
  %v2756 = vunpack.c.l.b16 %v2712
  %v2757 = vunpack.c.l.b16 %v2713
  %v2758 = vpack.c.b16 %v2737, %v2736
  %v2759 = vpack.c.b16 %v2739, %v2738
  %v2760 = vpack.c.b16 %v2741, %v2740
  %v2761 = vpack.c.b16 %v2743, %v2742
  %v2762 = vpack.c.b16 %v2745, %v2744
  %v2763 = vpack.c.b16 %v2747, %v2746
  %v2764 = vpack.c.b16 %v2749, %v2748
  %v2765 = vpack.c.b16 %v2751, %v2750
  %v2766 = vpack.c.b16 %v2753, %v2752
  %v2767 = vpack.c.b16 %v2755, %v2754
  %v2768 = vpack.c.b16 %v2757, %v2756
  %v2770 = vsel %vm1899, %v2758, 0
  %v2773 = vsel %vm1899, %v2759, 0
  %v2776 = vsel %vm1899, %v2760, 0
  %v2779 = vsel %vm1899, %v2761, 0
  %v2782 = vsel %vm1899, %v2762, 0
  %v2785 = vsel %vm1899, %v2763, 0
  %v2788 = vsel %vm1899, %v2764, 0
  %v2791 = vsel %vm1899, %v2765, 0
  %v2794 = vsel %vm1899, %v2766, 0
  %v2797 = vsel %vm1899, %v2767, 0
  %v2800 = vsel %vm1899, %v2768, 0
  %2802 = vmatprep.subr.bf16.mxu0 0
  %2803 = vmatpush1.bf16.msra.mxu0 %v1814
  %2804 = vmatprep.subr.bf16.mxu0 0
  %2805 = vmatpush1.bf16.msra.mxu0 %v1815
  %2806 = vmatprep.subr.bf16.mxu0 0
  %2807 = vmatpush1.bf16.msra.mxu0 %v1816
  %2808 = vmatprep.subr.bf16.mxu0 0
  %2809 = vmatpush1.bf16.msra.mxu0 %v1817
  %2810 = vmatprep.subr.bf16.mxu0 0
  %2811 = vmatpush1.bf16.msra.mxu0 %v1818
  %2812 = vmatprep.subr.bf16.mxu0 0
  %2813 = vmatpush1.bf16.msra.mxu0 %v1819
  %2814 = vmatprep.subr.bf16.mxu0 0
  %2815 = vmatpush1.bf16.msra.mxu0 %v1820
  %2816 = vmatprep.subr.bf16.mxu0 0
  %2817 = vmatpush1.bf16.msra.mxu0 %v1935
  %2818 = vmatprep.subr.bf16.mxu0 0
  %2819 = vmatpush1.bf16.msra.mxu0 0
  %2820 = vmatprep.subr.bf16.mxu0 0
  %2821 = vmatpush1.bf16.msra.mxu0 0
  %2822 = vmatprep.subr.bf16.mxu0 0
  %2823 = vmatpush1.bf16.msra.mxu0 0
  %2824 = vmatprep.subr.bf16.mxu0 0
  %2825 = vmatpush1.bf16.msra.mxu0 0
  %2826 = vmatprep.subr.bf16.mxu0 0
  %2827 = vmatpush1.bf16.msra.mxu0 0
  %2828 = vmatprep.subr.bf16.mxu0 0
  %2829 = vmatpush1.bf16.msra.mxu0 0
  %2830 = vmatprep.subr.bf16.mxu0 0
  %2831 = vmatpush1.bf16.msra.mxu0 0
  %2832 = vmatprep.subr.bf16.mxu0 0
  %2833 = vmatpush1.bf16.msra.mxu0 0
  %2834 = vmatprep.mubr.bf16.mxu0 0
  %2835 = vmatmul.mubr.bf16.gmra.mrb[0].mxu0 %v2770
  %v2836 = vpop.f32.mrb[0].mxu0
  %v2837 = vadd.f32 0.0, %v2836
  %v2838 = vpop.f32.mrb[0].mxu0
  %v2839 = vpop.f32.mrb[0].mxu0
  %v2840 = vadd.f32 0.0, %v2839
  %v2841 = vpop.f32.mrb[0].mxu0
  %2842 = vmatprep.mubr.bf16.mxu0 0
  %2843 = vmatmul.mubr.bf16.gmra.mrb[0].mxu0 %v2773
  %v2844 = vpop.f32.mrb[0].mxu0
  %v2845 = vadd.f32 0.0, %v2844
  %v2846 = vpop.f32.mrb[0].mxu0
  %v2847 = vpop.f32.mrb[0].mxu0
  %v2848 = vadd.f32 0.0, %v2847
  %v2849 = vpop.f32.mrb[0].mxu0
  %2850 = vmatprep.mubr.bf16.mxu0 0
  %2851 = vmatmul.mubr.bf16.gmra.mrb[0].mxu0 %v2776
  %v2852 = vpop.f32.mrb[0].mxu0
  %v2853 = vadd.f32 0.0, %v2852
  %v2854 = vpop.f32.mrb[0].mxu0
  %v2855 = vpop.f32.mrb[0].mxu0
  %v2856 = vadd.f32 0.0, %v2855
  %v2857 = vpop.f32.mrb[0].mxu0
  %2858 = vmatprep.mubr.bf16.mxu0 0
  %2859 = vmatmul.mubr.bf16.gmra.mrb[0].mxu0 %v2779
  %v2860 = vpop.f32.mrb[0].mxu0
  %v2861 = vadd.f32 0.0, %v2860
  %v2862 = vpop.f32.mrb[0].mxu0
  %v2863 = vpop.f32.mrb[0].mxu0
  %v2864 = vadd.f32 0.0, %v2863
  %v2865 = vpop.f32.mrb[0].mxu0
  %2866 = vmatprep.mubr.bf16.mxu0 0
  %2867 = vmatmul.mubr.bf16.gmra.mrb[0].mxu0 %v2782
  %v2868 = vpop.f32.mrb[0].mxu0
  %v2869 = vadd.f32 0.0, %v2868
  %v2870 = vpop.f32.mrb[0].mxu0
  %v2871 = vpop.f32.mrb[0].mxu0
  %v2872 = vadd.f32 0.0, %v2871
  %v2873 = vpop.f32.mrb[0].mxu0
  %2874 = vmatprep.mubr.bf16.mxu0 0
  %2875 = vmatmul.mubr.bf16.gmra.mrb[0].mxu0 %v2785
  %v2876 = vpop.f32.mrb[0].mxu0
  %v2877 = vadd.f32 0.0, %v2876
  %v2878 = vpop.f32.mrb[0].mxu0
  %v2879 = vpop.f32.mrb[0].mxu0
  %v2880 = vadd.f32 0.0, %v2879
  %v2881 = vpop.f32.mrb[0].mxu0
  %2882 = vmatprep.mubr.bf16.mxu0 0
  %2883 = vmatmul.mubr.bf16.gmra.mrb[0].mxu0 %v2788
  %v2884 = vpop.f32.mrb[0].mxu0
  %v2885 = vadd.f32 0.0, %v2884
  %v2886 = vpop.f32.mrb[0].mxu0
  %v2887 = vpop.f32.mrb[0].mxu0
  %v2888 = vadd.f32 0.0, %v2887
  %v2889 = vpop.f32.mrb[0].mxu0
  %2890 = vmatprep.mubr.bf16.mxu0 0
  %2891 = vmatmul.mubr.bf16.gmra.mrb[0].mxu0 %v2791
  %v2892 = vpop.f32.mrb[0].mxu0
  %v2893 = vadd.f32 0.0, %v2892
  %v2894 = vpop.f32.mrb[0].mxu0
  %v2895 = vpop.f32.mrb[0].mxu0
  %v2896 = vadd.f32 0.0, %v2895
  %v2897 = vpop.f32.mrb[0].mxu0
  %2898 = vmatprep.mubr.bf16.mxu0 0
  %2899 = vmatmul.mubr.bf16.gmra.mrb[0].mxu0 %v2794
  %v2900 = vpop.f32.mrb[0].mxu0
  %v2901 = vadd.f32 0.0, %v2900
  %v2902 = vpop.f32.mrb[0].mxu0
  %v2903 = vpop.f32.mrb[0].mxu0
  %v2904 = vadd.f32 0.0, %v2903
  %v2905 = vpop.f32.mrb[0].mxu0
  %2906 = vmatprep.mubr.bf16.mxu0 0
  %2907 = vmatmul.mubr.bf16.gmra.mrb[0].mxu0 %v2797
  %v2908 = vpop.f32.mrb[0].mxu0
  %v2909 = vadd.f32 0.0, %v2908
  %v2910 = vpop.f32.mrb[0].mxu0
  %v2911 = vpop.f32.mrb[0].mxu0
  %v2912 = vadd.f32 0.0, %v2911
  %v2913 = vpop.f32.mrb[0].mxu0
  %2914 = vmatprep.mubr.bf16.mxu0 0
  %2915 = vmatmul.mubr.bf16.gmra.mrb[0].mxu0 %v2800
  %v2916 = vpop.f32.mrb[0].mxu0
  %v2917 = vadd.f32 0.0, %v2916
  %v2918 = vpop.f32.mrb[0].mxu0
  %v2919 = vpop.f32.mrb[0].mxu0
  %v2920 = vadd.f32 0.0, %v2919
  %v2921 = vpop.f32.mrb[0].mxu0
  %2922 = vdwg.mxu0
  %v2923 = vpack.c.bf16 %v2840, %v2837
  %v2924 = vpack.c.bf16 %v2848, %v2845
  %v2925 = vpack.c.bf16 %v2856, %v2853
  %v2926 = vpack.c.bf16 %v2864, %v2861
  %v2927 = vpack.c.bf16 %v2872, %v2869
  %v2928 = vpack.c.bf16 %v2880, %v2877
  %v2929 = vpack.c.bf16 %v2888, %v2885
  %v2930 = vpack.c.bf16 %v2896, %v2893
  %v2931 = vpack.c.bf16 %v2904, %v2901
  %v2932 = vpack.c.bf16 %v2912, %v2909
  %v2933 = vpack.c.bf16 %v2920, %v2917
  %s2934 = scalar_lea.vmem %s8, 64
  %v2935 = vld [vmem:[%s2934] sm:$0xf]
  %v2936 = vld [vmem:[%s2934 + $0x4] sm:$0xf]
  %v2937 = vld [vmem:[%s2934 + $0x8] sm:$0xf]
  %v2938 = vld [vmem:[%s2934 + $0xc] sm:$0xf]
  %v2939 = vld [vmem:[%s2934 + $0x10] sm:$0xf]
  %v2940 = vld [vmem:[%s2934 + $0x14] sm:$0xf]
  %v2941 = vld [vmem:[%s2934 + $0x18] sm:$0xf]
  %v2942 = vld [vmem:[%s2934 + $0x1c] sm:$0x1]
  %v2951 = vunpack.c.l.b16 %v2935
  %v2952 = vunpack.c.l.b16 %v2936
  %v2953 = vunpack.c.l.b16 %v2937
  %v2954 = vunpack.c.l.b16 %v2938
  %v2955 = vunpack.c.l.b16 %v2939
  %v2956 = vunpack.c.l.b16 %v2940
  %v2957 = vunpack.c.l.b16 %v2941
  %v2958 = vunpack.c.l.b16 %v2942
  %v2959 = vpack.c.b16 %v2952, %v2951
  %v2960 = vpack.c.b16 %v2954, %v2953
  %v2961 = vpack.c.b16 %v2956, %v2955
  %v2962 = vpack.c.b16 %v2958, %v2957
  %v2967 = vsel %vm2352, %v2923, 0
  %v2970 = vsel %vm2352, %v2924, 0
  %v2973 = vsel %vm2352, %v2925, 0
  %v2976 = vsel %vm2352, %v2926, 0
  %v2979 = vsel %vm2352, %v2927, 0
  %v2982 = vsel %vm2352, %v2928, 0
  %v2985 = vsel %vm2352, %v2929, 0
  %v2988 = vsel %vm2352, %v2930, 0
  %v2991 = vsel %vm2352, %v2931, 0
  %v2994 = vsel %vm2352, %v2932, 0
  %v2997 = vsel %vm2352, %v2933, 0
  %v3000 = vsel %vm2386, %v2962, 0
  %3002 = vmatprep.subr.bf16.mxu0 0
  %3003 = vmatpush1.bf16.msra.mxu0 %v2959
  %3004 = vmatprep.subr.bf16.mxu0 0
  %3005 = vmatpush1.bf16.msra.mxu0 %v2960
  %3006 = vmatprep.subr.bf16.mxu0 0
  %3007 = vmatpush1.bf16.msra.mxu0 %v2961
  %3008 = vmatprep.subr.bf16.mxu0 0
  %3009 = vmatpush1.bf16.msra.mxu0 %v3000
  %3010 = vmatprep.subr.bf16.mxu0 0
  %3011 = vmatpush1.bf16.msra.mxu0 0
  %3012 = vmatprep.subr.bf16.mxu0 0
  %3013 = vmatpush1.bf16.msra.mxu0 0
  %3014 = vmatprep.subr.bf16.mxu0 0
  %3015 = vmatpush1.bf16.msra.mxu0 0
  %3016 = vmatprep.subr.bf16.mxu0 0
  %3017 = vmatpush1.bf16.msra.mxu0 0
  %3018 = vmatprep.subr.bf16.mxu0 0
  %3019 = vmatpush1.bf16.msra.mxu0 0
  %3020 = vmatprep.subr.bf16.mxu0 0
  %3021 = vmatpush1.bf16.msra.mxu0 0
  %3022 = vmatprep.subr.bf16.mxu0 0
  %3023 = vmatpush1.bf16.msra.mxu0 0
  %3024 = vmatprep.subr.bf16.mxu0 0
  %3025 = vmatpush1.bf16.msra.mxu0 0
  %3026 = vmatprep.subr.bf16.mxu0 0
  %3027 = vmatpush1.bf16.msra.mxu0 0
  %3028 = vmatprep.subr.bf16.mxu0 0
  %3029 = vmatpush1.bf16.msra.mxu0 0
  %3030 = vmatprep.subr.bf16.mxu0 0
  %3031 = vmatpush1.bf16.msra.mxu0 0
  %3032 = vmatprep.subr.bf16.mxu0 0
  %3033 = vmatpush1.bf16.msra.mxu0 0
  %3034 = vmatprep.mubr.bf16.mxu0 0
  %3035 = vmatmul.mubr.bf16.gmra.mrb[0].mxu0 %v2967
  %v3036 = vpop.f32.mrb[0].mxu0
  %v3037 = vadd.f32 0.0, %v3036
  %v3038 = vpop.f32.mrb[0].mxu0
  %v3039 = vpop.f32.mrb[0].mxu0
  %v3040 = vadd.f32 0.0, %v3039
  %v3041 = vpop.f32.mrb[0].mxu0
  %3042 = vmatprep.mubr.bf16.mxu0 0
  %3043 = vmatmul.mubr.bf16.gmra.mrb[0].mxu0 %v2970
  %v3044 = vpop.f32.mrb[0].mxu0
  %v3045 = vadd.f32 0.0, %v3044
  %v3046 = vpop.f32.mrb[0].mxu0
  %v3047 = vpop.f32.mrb[0].mxu0
  %v3048 = vadd.f32 0.0, %v3047
  %v3049 = vpop.f32.mrb[0].mxu0
  %3050 = vmatprep.mubr.bf16.mxu0 0
  %3051 = vmatmul.mubr.bf16.gmra.mrb[0].mxu0 %v2973
  %v3052 = vpop.f32.mrb[0].mxu0
  %v3053 = vadd.f32 0.0, %v3052
  %v3054 = vpop.f32.mrb[0].mxu0
  %v3055 = vpop.f32.mrb[0].mxu0
  %v3056 = vadd.f32 0.0, %v3055
  %v3057 = vpop.f32.mrb[0].mxu0
  %3058 = vmatprep.mubr.bf16.mxu0 0
  %3059 = vmatmul.mubr.bf16.gmra.mrb[0].mxu0 %v2976
  %v3060 = vpop.f32.mrb[0].mxu0
  %v3061 = vadd.f32 0.0, %v3060
  %v3062 = vpop.f32.mrb[0].mxu0
  %v3063 = vpop.f32.mrb[0].mxu0
  %v3064 = vadd.f32 0.0, %v3063
  %v3065 = vpop.f32.mrb[0].mxu0
  %3066 = vmatprep.mubr.bf16.mxu0 0
  %3067 = vmatmul.mubr.bf16.gmra.mrb[0].mxu0 %v2979
  %v3068 = vpop.f32.mrb[0].mxu0
  %v3069 = vadd.f32 0.0, %v3068
  %v3070 = vpop.f32.mrb[0].mxu0
  %v3071 = vpop.f32.mrb[0].mxu0
  %v3072 = vadd.f32 0.0, %v3071
  %v3073 = vpop.f32.mrb[0].mxu0
  %3074 = vmatprep.mubr.bf16.mxu0 0
  %3075 = vmatmul.mubr.bf16.gmra.mrb[0].mxu0 %v2982
  %v3076 = vpop.f32.mrb[0].mxu0
  %v3077 = vadd.f32 0.0, %v3076
  %v3078 = vpop.f32.mrb[0].mxu0
  %v3079 = vpop.f32.mrb[0].mxu0
  %v3080 = vadd.f32 0.0, %v3079
  %v3081 = vpop.f32.mrb[0].mxu0
  %3082 = vmatprep.mubr.bf16.mxu0 0
  %3083 = vmatmul.mubr.bf16.gmra.mrb[0].mxu0 %v2985
  %v3084 = vpop.f32.mrb[0].mxu0
  %v3085 = vadd.f32 0.0, %v3084
  %v3086 = vpop.f32.mrb[0].mxu0
  %v3087 = vpop.f32.mrb[0].mxu0
  %v3088 = vadd.f32 0.0, %v3087
  %v3089 = vpop.f32.mrb[0].mxu0
  %3090 = vmatprep.mubr.bf16.mxu0 0
  %3091 = vmatmul.mubr.bf16.gmra.mrb[0].mxu0 %v2988
  %v3092 = vpop.f32.mrb[0].mxu0
  %v3093 = vadd.f32 0.0, %v3092
  %v3094 = vpop.f32.mrb[0].mxu0
  %v3095 = vpop.f32.mrb[0].mxu0
  %v3096 = vadd.f32 0.0, %v3095
  %v3097 = vpop.f32.mrb[0].mxu0
  %3098 = vmatprep.mubr.bf16.mxu0 0
  %3099 = vmatmul.mubr.bf16.gmra.mrb[0].mxu0 %v2991
  %v3100 = vpop.f32.mrb[0].mxu0
  %v3101 = vadd.f32 0.0, %v3100
  %v3102 = vpop.f32.mrb[0].mxu0
  %v3103 = vpop.f32.mrb[0].mxu0
  %v3104 = vadd.f32 0.0, %v3103
  %v3105 = vpop.f32.mrb[0].mxu0
  %3106 = vmatprep.mubr.bf16.mxu0 0
  %3107 = vmatmul.mubr.bf16.gmra.mrb[0].mxu0 %v2994
  %v3108 = vpop.f32.mrb[0].mxu0
  %v3109 = vadd.f32 0.0, %v3108
  %v3110 = vpop.f32.mrb[0].mxu0
  %v3111 = vpop.f32.mrb[0].mxu0
  %v3112 = vadd.f32 0.0, %v3111
  %v3113 = vpop.f32.mrb[0].mxu0
  %3114 = vmatprep.mubr.bf16.mxu0 0
  %3115 = vmatmul.mubr.bf16.gmra.mrb[0].mxu0 %v2997
  %v3116 = vpop.f32.mrb[0].mxu0
  %v3117 = vadd.f32 0.0, %v3116
  %v3118 = vpop.f32.mrb[0].mxu0
  %v3119 = vpop.f32.mrb[0].mxu0
  %v3120 = vadd.f32 0.0, %v3119
  %v3121 = vpop.f32.mrb[0].mxu0
  %3122 = vdwg.mxu0
  %v3123 = vadd.f32 %v2605, %v3037
  %v3124 = vadd.f32 %v2608, %v3040
  %v3125 = vadd.f32 %v2613, %v3045
  %v3126 = vadd.f32 %v2616, %v3048
  %v3127 = vadd.f32 %v2621, %v3053
  %v3128 = vadd.f32 %v2624, %v3056
  %v3129 = vadd.f32 %v2629, %v3061
  %v3130 = vadd.f32 %v2632, %v3064
  %v3131 = vadd.f32 %v2637, %v3069
  %v3132 = vadd.f32 %v2640, %v3072
  %v3133 = vadd.f32 %v2645, %v3077
  %v3134 = vadd.f32 %v2648, %v3080
  %v3135 = vadd.f32 %v2653, %v3085
  %v3136 = vadd.f32 %v2656, %v3088
  %v3137 = vadd.f32 %v2661, %v3093
  %v3138 = vadd.f32 %v2664, %v3096
  %v3139 = vadd.f32 %v2669, %v3101
  %v3140 = vadd.f32 %v2672, %v3104
  %v3141 = vadd.f32 %v2677, %v3109
  %v3142 = vadd.f32 %v2680, %v3112
  %v3143 = vadd.f32 %v2685, %v3117
  %v3144 = vadd.f32 %v2688, %v3120
  %v3145 = vld [vmem:[%s9] sm:$0xff]
  %v3146 = vld [vmem:[%s9 + $0x8] sm:$0xff]
  %v3147 = vld [vmem:[%s9 + $0x10] sm:$0xff]
  %v3148 = vld [vmem:[%s9 + $0x18] sm:$0xff]
  %v3149 = vld [vmem:[%s9 + $0x20] sm:$0xff]
  %v3150 = vld [vmem:[%s9 + $0x28] sm:$0xff]
  %v3151 = vld [vmem:[%s9 + $0x30] sm:$0xff]
  %v3152 = vld [vmem:[%s9 + $0x38] sm:$0xff]
  %v3153 = vld [vmem:[%s9 + $0x40] sm:$0xff]
  %v3154 = vld [vmem:[%s9 + $0x48] sm:$0xff]
  %v3155 = vld [vmem:[%s9 + $0x50] sm:$0xff]
  %v3156 = vld [vmem:[%s9 + $0x58] sm:$0xff]
  %v3157 = vld [vmem:[%s9 + $0x60] sm:$0xff]
  %v3158 = vld [vmem:[%s9 + $0x68] sm:$0xff]
  %v3159 = vld [vmem:[%s9 + $0x70] sm:$0xff]
  %v3160 = vld [vmem:[%s9 + $0x78] sm:$0xff]
  %v3161 = vld [vmem:[%s9 + $0x80] sm:$0xff]
  %v3162 = vld [vmem:[%s9 + $0x88] sm:$0xff]
  %v3163 = vld [vmem:[%s9 + $0x90] sm:$0xff]
  %v3164 = vld [vmem:[%s9 + $0x98] sm:$0xff]
  %v3165 = vld [vmem:[%s9 + $0xa0] sm:$0xff]
  %v3166 = vld [vmem:[%s9 + $0xa8] sm:$0x7]
  %3168 = vset.pattern.permute.xlu0 0
  %3169 = vperm.xlu0 %3168, %v3145
  %v3170 = vpop.permute.xlu0 %3169
  %3173 = vset.pattern.permute.xlu0 0
  %3174 = vperm.xlu0 %3173, %v3146
  %v3175 = vpop.permute.xlu0 %3174
  %3178 = vset.pattern.permute.xlu0 0
  %3179 = vperm.xlu0 %3178, %v3147
  %v3180 = vpop.permute.xlu0 %3179
  %3183 = vset.pattern.permute.xlu0 0
  %3184 = vperm.xlu0 %3183, %v3148
  %v3185 = vpop.permute.xlu0 %3184
  %3188 = vset.pattern.permute.xlu0 0
  %3189 = vperm.xlu0 %3188, %v3149
  %v3190 = vpop.permute.xlu0 %3189
  %3193 = vset.pattern.permute.xlu0 0
  %3194 = vperm.xlu0 %3193, %v3150
  %v3195 = vpop.permute.xlu0 %3194
  %3198 = vset.pattern.permute.xlu0 0
  %3199 = vperm.xlu0 %3198, %v3151
  %v3200 = vpop.permute.xlu0 %3199
  %3203 = vset.pattern.permute.xlu0 0
  %3204 = vperm.xlu0 %3203, %v3152
  %v3205 = vpop.permute.xlu0 %3204
  %3208 = vset.pattern.permute.xlu0 0
  %3209 = vperm.xlu0 %3208, %v3153
  %v3210 = vpop.permute.xlu0 %3209
  %3213 = vset.pattern.permute.xlu0 0
  %3214 = vperm.xlu0 %3213, %v3154
  %v3215 = vpop.permute.xlu0 %3214
  %3218 = vset.pattern.permute.xlu0 0
  %3219 = vperm.xlu0 %3218, %v3155
  %v3220 = vpop.permute.xlu0 %3219
  %3223 = vset.pattern.permute.xlu0 0
  %3224 = vperm.xlu0 %3223, %v3156
  %v3225 = vpop.permute.xlu0 %3224
  %3228 = vset.pattern.permute.xlu0 0
  %3229 = vperm.xlu0 %3228, %v3157
  %v3230 = vpop.permute.xlu0 %3229
  %3233 = vset.pattern.permute.xlu0 0
  %3234 = vperm.xlu0 %3233, %v3158
  %v3235 = vpop.permute.xlu0 %3234
  %3238 = vset.pattern.permute.xlu0 0
  %3239 = vperm.xlu0 %3238, %v3159
  %v3240 = vpop.permute.xlu0 %3239
  %3243 = vset.pattern.permute.xlu0 0
  %3244 = vperm.xlu0 %3243, %v3160
  %v3245 = vpop.permute.xlu0 %3244
  %3248 = vset.pattern.permute.xlu0 0
  %3249 = vperm.xlu0 %3248, %v3161
  %v3250 = vpop.permute.xlu0 %3249
  %3253 = vset.pattern.permute.xlu0 0
  %3254 = vperm.xlu0 %3253, %v3162
  %v3255 = vpop.permute.xlu0 %3254
  %3258 = vset.pattern.permute.xlu0 0
  %3259 = vperm.xlu0 %3258, %v3163
  %v3260 = vpop.permute.xlu0 %3259
  %3263 = vset.pattern.permute.xlu0 0
  %3264 = vperm.xlu0 %3263, %v3164
  %v3265 = vpop.permute.xlu0 %3264
  %3268 = vset.pattern.permute.xlu0 0
  %3269 = vperm.xlu0 %3268, %v3165
  %v3270 = vpop.permute.xlu0 %3269
  %3273 = vset.pattern.permute.xlu0 0
  %3274 = vperm.xlu0 %3273, %v3166
  %v3275 = vpop.permute.xlu0 %3274
  %v3277 = vadd.f32 %v3123, %v3170
  %v3278 = vadd.f32 %v3124, %v3175
  %v3279 = vadd.f32 %v3125, %v3180
  %v3280 = vadd.f32 %v3126, %v3185
  %v3281 = vadd.f32 %v3127, %v3190
  %v3282 = vadd.f32 %v3128, %v3195
  %v3283 = vadd.f32 %v3129, %v3200
  %v3284 = vadd.f32 %v3130, %v3205
  %v3285 = vadd.f32 %v3131, %v3210
  %v3286 = vadd.f32 %v3132, %v3215
  %v3287 = vadd.f32 %v3133, %v3220
  %v3288 = vadd.f32 %v3134, %v3225
  %v3289 = vadd.f32 %v3135, %v3230
  %v3290 = vadd.f32 %v3136, %v3235
  %v3291 = vadd.f32 %v3137, %v3240
  %v3292 = vadd.f32 %v3138, %v3245
  %v3293 = vadd.f32 %v3139, %v3250
  %v3294 = vadd.f32 %v3140, %v3255
  %v3295 = vadd.f32 %v3141, %v3260
  %v3296 = vadd.f32 %v3142, %v3265
  %v3297 = vadd.f32 %v3143, %v3270
  %v3298 = vadd.f32 %v3144, %v3275
  %v3299 = vld [vmem:[%s11] sm:$0xff]
  %v3300 = vld [vmem:[%s11 + $0x8] sm:$0xff]
  %v3301 = vld [vmem:[%s11 + $0x10] sm:$0xff]
  %v3302 = vld [vmem:[%s11 + $0x18] sm:$0xff]
  %v3303 = vld [vmem:[%s11 + $0x20] sm:$0xff]
  %v3304 = vld [vmem:[%s11 + $0x28] sm:$0xff]
  %v3305 = vld [vmem:[%s11 + $0x30] sm:$0xff]
  %v3306 = vld [vmem:[%s11 + $0x38] sm:$0xff]
  %v3307 = vld [vmem:[%s11 + $0x40] sm:$0xff]
  %v3308 = vld [vmem:[%s11 + $0x48] sm:$0xff]
  %v3309 = vld [vmem:[%s11 + $0x50] sm:$0xff]
  %v3310 = vld [vmem:[%s11 + $0x58] sm:$0xff]
  %v3311 = vld [vmem:[%s11 + $0x60] sm:$0xff]
  %v3312 = vld [vmem:[%s11 + $0x68] sm:$0xff]
  %v3313 = vld [vmem:[%s11 + $0x70] sm:$0x3]
  %vm3314 = vcmask 932864
  %v3316 = vsel %vm3314, %v3277, 0
  %v3319 = vsel %vm3314, %v3278, 0
  %v3322 = vsel %vm3314, %v3279, 0
  %v3325 = vsel %vm3314, %v3280, 0
  %v3328 = vsel %vm3314, %v3281, 0
  %v3331 = vsel %vm3314, %v3282, 0
  %v3334 = vsel %vm3314, %v3283, 0
  %v3337 = vsel %vm3314, %v3284, 0
  %v3340 = vsel %vm3314, %v3285, 0
  %v3343 = vsel %vm3314, %v3286, 0
  %v3346 = vsel %vm3314, %v3287, 0
  %v3349 = vsel %vm3314, %v3288, 0
  %v3352 = vsel %vm3314, %v3289, 0
  %v3355 = vsel %vm3314, %v3290, 0
  %v3358 = vsel %vm3314, %v3291, 0
  %v3361 = vsel %vm3314, %v3292, 0
  %v3364 = vsel %vm3314, %v3293, 0
  %v3367 = vsel %vm3314, %v3294, 0
  %v3370 = vsel %vm3314, %v3295, 0
  %v3373 = vsel %vm3314, %v3296, 0
  %v3376 = vsel %vm3314, %v3297, 0
  %v3379 = vsel %vm3314, %v3298, 0
  %v3382 = vsel %vm1933, %v3313, 0
  %3384 = vmatprep.subr.mxu0 0.0
  %3385 = vmatpush1.msra.mxu0 %v3299
  %3386 = vmatprep.subr.mxu0 0.0
  %3387 = vmatpush1.msra.mxu0 %v3300
  %3388 = vmatprep.subr.mxu0 0.0
  %3389 = vmatpush1.msra.mxu0 %v3301
  %3390 = vmatprep.subr.mxu0 0.0
  %3391 = vmatpush1.msra.mxu0 %v3302
  %3392 = vmatprep.subr.mxu0 0.0
  %3393 = vmatpush1.msra.mxu0 %v3303
  %3394 = vmatprep.subr.mxu0 0.0
  %3395 = vmatpush1.msra.mxu0 %v3304
  %3396 = vmatprep.subr.mxu0 0.0
  %3397 = vmatpush1.msra.mxu0 %v3305
  %3398 = vmatprep.subr.mxu0 0.0
  %3399 = vmatpush1.msra.mxu0 %v3306
  %3400 = vmatprep.subr.mxu0 0.0
  %3401 = vmatpush1.msra.mxu0 %v3307
  %3402 = vmatprep.subr.mxu0 0.0
  %3403 = vmatpush1.msra.mxu0 %v3308
  %3404 = vmatprep.subr.mxu0 0.0
  %3405 = vmatpush1.msra.mxu0 %v3309
  %3406 = vmatprep.subr.mxu0 0.0
  %3407 = vmatpush1.msra.mxu0 %v3310
  %3408 = vmatprep.subr.mxu0 0.0
  %3409 = vmatpush1.msra.mxu0 %v3311
  %3410 = vmatprep.subr.mxu0 0.0
  %3411 = vmatpush1.msra.mxu0 %v3312
  %3412 = vmatprep.subr.mxu0 0.0
  %3413 = vmatpush1.msra.mxu0 %v3382
  %3414 = vmatprep.subr.mxu0 0.0
  %3415 = vmatpush1.msra.mxu0 0.0
  %3416 = vmatprep.subr.mxu0 0.0
  %3417 = vmatpush1.msra.mxu0 0.0
  %3418 = vmatprep.subr.mxu0 0.0
  %3419 = vmatpush1.msra.mxu0 0.0
  %3420 = vmatprep.subr.mxu0 0.0
  %3421 = vmatpush1.msra.mxu0 0.0
  %3422 = vmatprep.subr.mxu0 0.0
  %3423 = vmatpush1.msra.mxu0 0.0
  %3424 = vmatprep.subr.mxu0 0.0
  %3425 = vmatpush1.msra.mxu0 0.0
  %3426 = vmatprep.subr.mxu0 0.0
  %3427 = vmatpush1.msra.mxu0 0.0
  %3428 = vmatprep.subr.mxu0 0.0
  %3429 = vmatpush1.msra.mxu0 0.0
  %3430 = vmatprep.subr.mxu0 0.0
  %3431 = vmatpush1.msra.mxu0 0.0
  %3432 = vmatprep.subr.mxu0 0.0
  %3433 = vmatpush1.msra.mxu0 0.0
  %3434 = vmatprep.subr.mxu0 0.0
  %3435 = vmatpush1.msra.mxu0 0.0
  %3436 = vmatprep.subr.mxu0 0.0
  %3437 = vmatpush1.msra.mxu0 0.0
  %3438 = vmatprep.subr.mxu0 0.0
  %3439 = vmatpush1.msra.mxu0 0.0
  %3440 = vmatprep.subr.mxu0 0.0
  %3441 = vmatpush1.msra.mxu0 0.0
  %3442 = vmatprep.subr.mxu0 0.0
  %3443 = vmatpush1.msra.mxu0 0.0
  %3444 = vmatprep.subr.mxu0 0.0
  %3445 = vmatpush1.msra.mxu0 0.0
  %3446 = vmatprep.subr.mxu0 0.0
  %3447 = vmatpush1.msra.mxu0 0.0
  %3448 = vmatprep.mubr.f32.mxu0 0.0
  %3449 = vmatmul.mubr.f32.gmra.mrb[0].mxu0 %v3316
  %v3450 = vpop.f32.mrb[0].mxu0
  %v3451 = vadd.f32 0.0, %v3450
  %v3452 = vpop.f32.mrb[0].mxu0
  %3453 = vmatprep.mubr.f32.mxu0 0.0
  %3454 = vmatmul.mubr.f32.gmra.mrb[0].mxu0 %v3319
  %v3455 = vpop.f32.mrb[0].mxu0
  %v3456 = vadd.f32 0.0, %v3455
  %v3457 = vpop.f32.mrb[0].mxu0
  %3458 = vmatprep.mubr.f32.mxu0 0.0
  %3459 = vmatmul.mubr.f32.gmra.mrb[0].mxu0 %v3322
  %v3460 = vpop.f32.mrb[0].mxu0
  %v3461 = vadd.f32 0.0, %v3460
  %v3462 = vpop.f32.mrb[0].mxu0
  %3463 = vmatprep.mubr.f32.mxu0 0.0
  %3464 = vmatmul.mubr.f32.gmra.mrb[0].mxu0 %v3325
  %v3465 = vpop.f32.mrb[0].mxu0
  %v3466 = vadd.f32 0.0, %v3465
  %v3467 = vpop.f32.mrb[0].mxu0
  %3468 = vmatprep.mubr.f32.mxu0 0.0
  %3469 = vmatmul.mubr.f32.gmra.mrb[0].mxu0 %v3328
  %v3470 = vpop.f32.mrb[0].mxu0
  %v3471 = vadd.f32 0.0, %v3470
  %v3472 = vpop.f32.mrb[0].mxu0
  %3473 = vmatprep.mubr.f32.mxu0 0.0
  %3474 = vmatmul.mubr.f32.gmra.mrb[0].mxu0 %v3331
  %v3475 = vpop.f32.mrb[0].mxu0
  %v3476 = vadd.f32 0.0, %v3475
  %v3477 = vpop.f32.mrb[0].mxu0
  %3478 = vmatprep.mubr.f32.mxu0 0.0
  %3479 = vmatmul.mubr.f32.gmra.mrb[0].mxu0 %v3334
  %v3480 = vpop.f32.mrb[0].mxu0
  %v3481 = vadd.f32 0.0, %v3480
  %v3482 = vpop.f32.mrb[0].mxu0
  %3483 = vmatprep.mubr.f32.mxu0 0.0
  %3484 = vmatmul.mubr.f32.gmra.mrb[0].mxu0 %v3337
  %v3485 = vpop.f32.mrb[0].mxu0
  %v3486 = vadd.f32 0.0, %v3485
  %v3487 = vpop.f32.mrb[0].mxu0
  %3488 = vmatprep.mubr.f32.mxu0 0.0
  %3489 = vmatmul.mubr.f32.gmra.mrb[0].mxu0 %v3340
  %v3490 = vpop.f32.mrb[0].mxu0
  %v3491 = vadd.f32 0.0, %v3490
  %v3492 = vpop.f32.mrb[0].mxu0
  %3493 = vmatprep.mubr.f32.mxu0 0.0
  %3494 = vmatmul.mubr.f32.gmra.mrb[0].mxu0 %v3343
  %v3495 = vpop.f32.mrb[0].mxu0
  %v3496 = vadd.f32 0.0, %v3495
  %v3497 = vpop.f32.mrb[0].mxu0
  %3498 = vmatprep.mubr.f32.mxu0 0.0
  %3499 = vmatmul.mubr.f32.gmra.mrb[0].mxu0 %v3346
  %v3500 = vpop.f32.mrb[0].mxu0
  %v3501 = vadd.f32 0.0, %v3500
  %v3502 = vpop.f32.mrb[0].mxu0
  %3503 = vmatprep.mubr.f32.mxu0 0.0
  %3504 = vmatmul.mubr.f32.gmra.mrb[0].mxu0 %v3349
  %v3505 = vpop.f32.mrb[0].mxu0
  %v3506 = vadd.f32 0.0, %v3505
  %v3507 = vpop.f32.mrb[0].mxu0
  %3508 = vmatprep.mubr.f32.mxu0 0.0
  %3509 = vmatmul.mubr.f32.gmra.mrb[0].mxu0 %v3352
  %v3510 = vpop.f32.mrb[0].mxu0
  %v3511 = vadd.f32 0.0, %v3510
  %v3512 = vpop.f32.mrb[0].mxu0
  %3513 = vmatprep.mubr.f32.mxu0 0.0
  %3514 = vmatmul.mubr.f32.gmra.mrb[0].mxu0 %v3355
  %v3515 = vpop.f32.mrb[0].mxu0
  %v3516 = vadd.f32 0.0, %v3515
  %v3517 = vpop.f32.mrb[0].mxu0
  %3518 = vmatprep.mubr.f32.mxu0 0.0
  %3519 = vmatmul.mubr.f32.gmra.mrb[0].mxu0 %v3358
  %v3520 = vpop.f32.mrb[0].mxu0
  %v3521 = vadd.f32 0.0, %v3520
  %v3522 = vpop.f32.mrb[0].mxu0
  %3523 = vmatprep.mubr.f32.mxu0 0.0
  %3524 = vmatmul.mubr.f32.gmra.mrb[0].mxu0 %v3361
  %v3525 = vpop.f32.mrb[0].mxu0
  %v3526 = vadd.f32 0.0, %v3525
  %v3527 = vpop.f32.mrb[0].mxu0
  %3528 = vmatprep.mubr.f32.mxu0 0.0
  %3529 = vmatmul.mubr.f32.gmra.mrb[0].mxu0 %v3364
  %v3530 = vpop.f32.mrb[0].mxu0
  %v3531 = vadd.f32 0.0, %v3530
  %v3532 = vpop.f32.mrb[0].mxu0
  %3533 = vmatprep.mubr.f32.mxu0 0.0
  %3534 = vmatmul.mubr.f32.gmra.mrb[0].mxu0 %v3367
  %v3535 = vpop.f32.mrb[0].mxu0
  %v3536 = vadd.f32 0.0, %v3535
  %v3537 = vpop.f32.mrb[0].mxu0
  %3538 = vmatprep.mubr.f32.mxu0 0.0
  %3539 = vmatmul.mubr.f32.gmra.mrb[0].mxu0 %v3370
  %v3540 = vpop.f32.mrb[0].mxu0
  %v3541 = vadd.f32 0.0, %v3540
  %v3542 = vpop.f32.mrb[0].mxu0
  %3543 = vmatprep.mubr.f32.mxu0 0.0
  %3544 = vmatmul.mubr.f32.gmra.mrb[0].mxu0 %v3373
  %v3545 = vpop.f32.mrb[0].mxu0
  %v3546 = vadd.f32 0.0, %v3545
  %v3547 = vpop.f32.mrb[0].mxu0
  %3548 = vmatprep.mubr.f32.mxu0 0.0
  %3549 = vmatmul.mubr.f32.gmra.mrb[0].mxu0 %v3376
  %v3550 = vpop.f32.mrb[0].mxu0
  %v3551 = vadd.f32 0.0, %v3550
  %v3552 = vpop.f32.mrb[0].mxu0
  %3553 = vmatprep.mubr.f32.mxu0 0.0
  %3554 = vmatmul.mubr.f32.gmra.mrb[0].mxu0 %v3379
  %v3555 = vpop.f32.mrb[0].mxu0
  %v3556 = vadd.f32 0.0, %v3555
  %v3557 = vpop.f32.mrb[0].mxu0
  %3558 = vdwg.mxu0
  %v3559 = vld [vmem:[%s10] sm:$0xff]
  %v3560 = vld [vmem:[%s10 + $0x8] sm:$0xff]
  %v3561 = vld [vmem:[%s10 + $0x10] sm:$0xff]
  %v3562 = vld [vmem:[%s10 + $0x18] sm:$0xff]
  %v3563 = vld [vmem:[%s10 + $0x20] sm:$0xff]
  %v3564 = vld [vmem:[%s10 + $0x28] sm:$0xff]
  %v3565 = vld [vmem:[%s10 + $0x30] sm:$0xff]
  %v3566 = vld [vmem:[%s10 + $0x38] sm:$0xff]
  %v3567 = vld [vmem:[%s10 + $0x40] sm:$0xff]
  %v3568 = vld [vmem:[%s10 + $0x48] sm:$0xff]
  %v3569 = vld [vmem:[%s10 + $0x50] sm:$0xff]
  %v3570 = vld [vmem:[%s10 + $0x58] sm:$0xff]
  %v3571 = vld [vmem:[%s10 + $0x60] sm:$0xff]
  %v3572 = vld [vmem:[%s10 + $0x68] sm:$0xff]
  %v3573 = vld [vmem:[%s10 + $0x70] sm:$0xf]
  %v3574 = vld [vmem:[%s10 + $0x78] sm:$0xf]
  %vm3575 = vcmask 351232
  %v3577 = vsel %vm3575, %v3560, 0
  %v3580 = vsel %vm3575, %v3562, 0
  %v3583 = vsel %vm3575, %v3564, 0
  %v3586 = vsel %vm3575, %v3566, 0
  %v3589 = vsel %vm3575, %v3568, 0
  %v3592 = vsel %vm3575, %v3570, 0
  %v3595 = vsel %vm3575, %v3572, 0
  %v3598 = vsel %vm3575, %v3574, 0
  %vm3600 = vcmask 1042432
  %v3602 = vsel %vm3600, %v3556, 0
  %3604 = vmatprep.subr.mxu0 0.0
  %3605 = vmatpush1.msra.mxu0 %v3451
  %3606 = vmatprep.subr.mxu0 0.0
  %3607 = vmatpush1.msra.mxu0 %v3456
  %3608 = vmatprep.subr.mxu0 0.0
  %3609 = vmatpush1.msra.mxu0 %v3461
  %3610 = vmatprep.subr.mxu0 0.0
  %3611 = vmatpush1.msra.mxu0 %v3466
  %3612 = vmatprep.subr.mxu0 0.0
  %3613 = vmatpush1.msra.mxu0 %v3471
  %3614 = vmatprep.subr.mxu0 0.0
  %3615 = vmatpush1.msra.mxu0 %v3476
  %3616 = vmatprep.subr.mxu0 0.0
  %3617 = vmatpush1.msra.mxu0 %v3481
  %3618 = vmatprep.subr.mxu0 0.0
  %3619 = vmatpush1.msra.mxu0 %v3486
  %3620 = vmatprep.subr.mxu0 0.0
  %3621 = vmatpush1.msra.mxu0 %v3491
  %3622 = vmatprep.subr.mxu0 0.0
  %3623 = vmatpush1.msra.mxu0 %v3496
  %3624 = vmatprep.subr.mxu0 0.0
  %3625 = vmatpush1.msra.mxu0 %v3501
  %3626 = vmatprep.subr.mxu0 0.0
  %3627 = vmatpush1.msra.mxu0 %v3506
  %3628 = vmatprep.subr.mxu0 0.0
  %3629 = vmatpush1.msra.mxu0 %v3511
  %3630 = vmatprep.subr.mxu0 0.0
  %3631 = vmatpush1.msra.mxu0 %v3516
  %3632 = vmatprep.subr.mxu0 0.0
  %3633 = vmatpush1.msra.mxu0 %v3521
  %3634 = vmatprep.subr.mxu0 0.0
  %3635 = vmatpush1.msra.mxu0 %v3526
  %3636 = vmatprep.subr.mxu0 0.0
  %3637 = vmatpush1.msra.mxu0 %v3531
  %3638 = vmatprep.subr.mxu0 0.0
  %3639 = vmatpush1.msra.mxu0 %v3536
  %3640 = vmatprep.subr.mxu0 0.0
  %3641 = vmatpush1.msra.mxu0 %v3541
  %3642 = vmatprep.subr.mxu0 0.0
  %3643 = vmatpush1.msra.mxu0 %v3546
  %3644 = vmatprep.subr.mxu0 0.0
  %3645 = vmatpush1.msra.mxu0 %v3551
  %3646 = vmatprep.subr.mxu0 0.0
  %3647 = vmatpush1.msra.mxu0 %v3602
  %3648 = vmatprep.subr.mxu0 0.0
  %3649 = vmatpush1.msra.mxu0 0.0
  %3650 = vmatprep.subr.mxu0 0.0
  %3651 = vmatpush1.msra.mxu0 0.0
  %3652 = vmatprep.subr.mxu0 0.0
  %3653 = vmatpush1.msra.mxu0 0.0
  %3654 = vmatprep.subr.mxu0 0.0
  %3655 = vmatpush1.msra.mxu0 0.0
  %3656 = vmatprep.subr.mxu0 0.0
  %3657 = vmatpush1.msra.mxu0 0.0
  %3658 = vmatprep.subr.mxu0 0.0
  %3659 = vmatpush1.msra.mxu0 0.0
  %3660 = vmatprep.subr.mxu0 0.0
  %3661 = vmatpush1.msra.mxu0 0.0
  %3662 = vmatprep.subr.mxu0 0.0
  %3663 = vmatpush1.msra.mxu0 0.0
  %3664 = vmatprep.subr.mxu0 0.0
  %3665 = vmatpush1.msra.mxu0 0.0
  %3666 = vmatprep.subr.mxu0 0.0
  %3667 = vmatpush1.msra.mxu0 0.0
  %3668 = vmatprep.mubr.f32.mxu0 %v3577
  %3669 = vmatmul.mubr.f32.gmra.mrb[0].mxu0 %v3559
  %v3670 = vpop.f32.mrb[0].mxu0
  %v3671 = vadd.f32 0.0, %v3670
  %v3672 = vpop.f32.mrb[0].mxu0
  %3673 = vmatprep.mubr.f32.mxu0 %v3580
  %3674 = vmatmul.mubr.f32.gmra.mrb[0].mxu0 %v3561
  %v3675 = vpop.f32.mrb[0].mxu0
  %v3676 = vadd.f32 0.0, %v3675
  %v3677 = vpop.f32.mrb[0].mxu0
  %3678 = vmatprep.mubr.f32.mxu0 %v3583
  %3679 = vmatmul.mubr.f32.gmra.mrb[0].mxu0 %v3563
  %v3680 = vpop.f32.mrb[0].mxu0
  %v3681 = vadd.f32 0.0, %v3680
  %v3682 = vpop.f32.mrb[0].mxu0
  %3683 = vmatprep.mubr.f32.mxu0 %v3586
  %3684 = vmatmul.mubr.f32.gmra.mrb[0].mxu0 %v3565
  %v3685 = vpop.f32.mrb[0].mxu0
  %v3686 = vadd.f32 0.0, %v3685
  %v3687 = vpop.f32.mrb[0].mxu0
  %3688 = vmatprep.mubr.f32.mxu0 %v3589
  %3689 = vmatmul.mubr.f32.gmra.mrb[0].mxu0 %v3567
  %v3690 = vpop.f32.mrb[0].mxu0
  %v3691 = vadd.f32 0.0, %v3690
  %v3692 = vpop.f32.mrb[0].mxu0
  %3693 = vmatprep.mubr.f32.mxu0 %v3592
  %3694 = vmatmul.mubr.f32.gmra.mrb[0].mxu0 %v3569
  %v3695 = vpop.f32.mrb[0].mxu0
  %v3696 = vadd.f32 0.0, %v3695
  %v3697 = vpop.f32.mrb[0].mxu0
  %3698 = vmatprep.mubr.f32.mxu0 %v3595
  %3699 = vmatmul.mubr.f32.gmra.mrb[0].mxu0 %v3571
  %v3700 = vpop.f32.mrb[0].mxu0
  %v3701 = vadd.f32 0.0, %v3700
  %v3702 = vpop.f32.mrb[0].mxu0
  %3703 = vmatprep.mubr.f32.mxu0 %v3598
  %3704 = vmatmul.mubr.f32.gmra.mrb[0].mxu0 %v3573
  %v3705 = vpop.f32.mrb[0].mxu0
  %v3706 = vadd.f32 0.0, %v3705
  %v3707 = vpop.f32.mrb[0].mxu0
  %3708 = vdwg.mxu0
  %vm3709 = vcmask 326656
  %3710 = vst.msk [vmem:[%s12] sm:$0xff] %vm3709, %v3671
  %3711 = vst.msk [vmem:[%s12 + $0x8] sm:$0xff] %vm3709, %v3676
  %3712 = vst.msk [vmem:[%s12 + $0x10] sm:$0xff] %vm3709, %v3681
  %3713 = vst.msk [vmem:[%s12 + $0x18] sm:$0xff] %vm3709, %v3686
  %3714 = vst.msk [vmem:[%s12 + $0x20] sm:$0xff] %vm3709, %v3691
  %3715 = vst.msk [vmem:[%s12 + $0x28] sm:$0xff] %vm3709, %v3696
  %3716 = vst.msk [vmem:[%s12 + $0x30] sm:$0xff] %vm3709, %v3701
  %vm3717 = vcmask 322560
  %3718 = vst.msk [vmem:[%s12 + $0x38] sm:$0xf] %vm3717, %v3706
  // Predicated region
  $region50: #{image_decoder_forward.1} parent=0 // pred_check
    _
  $region51: #{image_decoder_forward.1} parent=0 // pred_check_branch
    %3720 = sbr.rel (0) target = $region53
  $region52: #{image_decoder_forward.1} parent=0 // pred_region
    _
  $region53: #{image_decoder_forward.1} parent=0 // pred_fallthru
    _
  // Predicated region
  $region54: #{image_decoder_forward.1} parent=0 // pred_check
    _
  $region55: #{image_decoder_forward.1} parent=0 // pred_check_branch
    %3722 = sbr.rel (0) target = $region57
  $region56: #{image_decoder_forward.1} parent=0 // pred_region
    _
  $region57: #{image_decoder_forward.1} parent=0 // pred_fallthru
    _

</llo_original>
